<compile_context>
chip_gen: v7x
topology: tpu7x:2x2x1
jax: 0.10.0
libtpu: 0.0.40
codegen_flags: <defaults>
</compile_context>

<pallas_src>
import math
import functools

import jax
import jax.numpy as jnp
from jax.experimental import pallas as pl
from jax.experimental.pallas import tpu as pltpu


def vxtam_kernel(x_ref, y_ref, wb_ref, wcd_ref, aff_ref, o_ref,
                 *, inv_coeff, chunk):
    bn, F = x_ref.shape

    # Packed per-feature affines: rows are
    #   0: [sb | 0], 1: [bb | 0], 2: [sc | sd], 3: [bc | bd], 4: [alpha | 0]
    sb = aff_ref[0:1, :F]
    bb = aff_ref[1:2, :F]
    scd = aff_ref[2:3, :]
    bcd = aff_ref[3:4, :]
    alpha = aff_ref[4:5, :F]

    x = x_ref[...]
    y = y_ref[...]

    # fc_b: Linear(no bias) -> folded (inference) BN affine -> ReLU.
    B = jnp.maximum(
        jnp.dot(x, wb_ref[...], preferred_element_type=jnp.float32) * sb + bb,
        0.0)
    # fc_c and fc_d fused into a single (F, 2F) MXU matmul, then lane-sliced.
    CD = jnp.maximum(
        jnp.dot(y, wcd_ref[...], preferred_element_type=jnp.float32) * scd + bcd,
        0.0)
    C = CD[:, :F]
    D = CD[:, F:]

    # Analytic softmax row max (B, C >= 0 post-ReLU):
    #   max_j B[n,i]*C[n,j]/sqrt(F) = (B[n,i]/sqrt(F)) * max_j C[n,j]
    # so the shifted logits are Bs[n,i] * (C[n,j] - Cmax[n]).
    Bs = B * inv_coeff                                    # (bn, F), >= 0
    Cshift = C - jnp.max(C, axis=-1, keepdims=True)       # (bn, F), <= 0

    # Attention over sub-chunks to bound the (chunk, F, F) live intermediate.
    for c0 in range(0, bn, chunk):
        Bc = Bs[c0:c0 + chunk]                            # (chunk, F)
        Cc = Cshift[c0:c0 + chunk]                        # (chunk, F)
        Dc = D[c0:c0 + chunk]                             # (chunk, F)

        # e[n,i,j] = exp(s - rowmax): one outer product + one exp pass (EUP),
        # nothing else — `e` is read twice but exp'd only once.
        e = jnp.exp(Bc[:, :, None] * Cc[:, None, :])      # (chunk, F, F)
        z = jnp.sum(e, axis=-1)                           # (chunk, F), lane reduce
        # Fold D and the softmax normalizer into one left vector; `corr` is
        # never materialized.  After the fusion 1/z only touches (chunk, F)
        # elements, so the exact reciprocal is effectively free.
        w = Dc * pl.reciprocal(z, approx=False)           # (chunk, F)

        # out[n,j] = sum_i w[n,i] * e[n,i,j]: broadcast-multiply + reduce over
        # the sublane axis (vreg adds), then one wide lane-dense store per
        # chunk instead of per-row masked stores.
        out_c = jnp.sum(w[:, :, None] * e, axis=1)        # (chunk, F)
        o_ref[c0:c0 + chunk, :] = (out_c * alpha).astype(o_ref.dtype)


def vxtam(x, y, Wb, Wc, Wd, sb, bb, sc, bc, sd, bd, alpha,
          *, block_n=16, chunk=8):
    """VxTAM forward.  W* are (F_in, F_out); BN pre-folded to (scale, shift)."""
    N, F = x.shape
    block_n = min(block_n, N)
    chunk = min(chunk, block_n)
    assert N % block_n == 0
    assert block_n % chunk == 0
    assert F % 128 == 0, "feature dim must be lane-tile aligned"

    # Fuse the two y-side projections into one (F, 2F) weight.
    Wcd = jnp.concatenate([Wc, Wd], axis=1)

    # Pack the seven (1, F) per-feature vectors into a single (8, 2F) operand.
    zeros = jnp.zeros((1, F), jnp.float32)
    aff = jnp.concatenate([
        jnp.concatenate([sb, zeros], axis=1),
        jnp.concatenate([bb, zeros], axis=1),
        jnp.concatenate([sc, sd], axis=1),
        jnp.concatenate([bc, bd], axis=1),
        jnp.concatenate([alpha, zeros], axis=1),
        jnp.zeros((3, 2 * F), jnp.float32),
    ], axis=0)                                            # (8, 2F)

    grid = (N // block_n,)
    row_spec = pl.BlockSpec((block_n, F), lambda i: (i, 0))

    kernel = functools.partial(vxtam_kernel,
                               inv_coeff=1.0 / math.sqrt(F), chunk=chunk)

    return pl.pallas_call(
        kernel,
        out_shape=jax.ShapeDtypeStruct((N, F), x.dtype),
        grid_spec=pltpu.PrefetchScalarGridSpec(
            num_scalar_prefetch=0,
            grid=grid,
            in_specs=[row_spec,                                    # x
                      row_spec,                                    # y
                      pl.BlockSpec((F, F), lambda i: (0, 0)),      # Wb
                      pl.BlockSpec((F, 2 * F), lambda i: (0, 0)),  # Wc|Wd
                      pl.BlockSpec((8, 2 * F), lambda i: (0, 0))], # affines
            out_specs=row_spec),
        compiler_params=pltpu.CompilerParams(
            # batch grid shards across TensorCores (keep N/block_n >= 2)
            dimension_semantics=("parallel",),
            vmem_limit_bytes=32 * 1024 * 1024),
    )(x, y, Wb, Wcd, aff)


def vxtam_reference(x, y, Wb, Wc, Wd, sb, bb, sc, bc, sd, bd, alpha):
    """Pure-JAX reference mirroring the PyTorch forward (inference-mode BN)."""
    F = x.shape[1]
    B = jnp.maximum(x @ Wb * sb + bb, 0.0)
    C = jnp.maximum(y @ Wc * sc + bc, 0.0)
    D = jnp.maximum(y @ Wd * sd + bd, 0.0)
    s = (B[:, :, None] * C[:, None, :]) / math.sqrt(F)
    corr = jax.nn.softmax(s, axis=-1)
    out = jnp.einsum("ni,nij->nj", D, corr)
    return out * alpha


if __name__ == "__main__":
    N, F = 32, 128            # batch, in_dim (lane-friendly feature size)
    eps = 1e-5

    key = jax.random.PRNGKey(0)
    ks = jax.random.split(key, 18)

    x = jax.random.normal(ks[0], (N, F), jnp.float32)
    y = jax.random.normal(ks[1], (N, F), jnp.float32)

    # Linear weights, stored already transposed to (F_in, F_out).
    Wb = jax.random.normal(ks[2], (F, F), jnp.float32) / math.sqrt(F)
    Wc = jax.random.normal(ks[3], (F, F), jnp.float32) / math.sqrt(F)
    Wd = jax.random.normal(ks[4], (F, F), jnp.float32) / math.sqrt(F)

    def bn_affine(kg, kb, km, kv):
        gamma = 1.0 + 0.1 * jax.random.normal(kg, (1, F), jnp.float32)
        beta = 0.1 * jax.random.normal(kb, (1, F), jnp.float32)
        mean = 0.1 * jax.random.normal(km, (1, F), jnp.float32)
        var = jnp.abs(jax.random.normal(kv, (1, F), jnp.float32)) + 0.5
        scale = gamma / jnp.sqrt(var + eps)
        shift = beta - mean * scale
        return scale, shift

    sb, bb = bn_affine(ks[5], ks[6], ks[7], ks[8])
    sc, bc = bn_affine(ks[9], ks[10], ks[11], ks[12])
    sd, bd = bn_affine(ks[13], ks[14], ks[15], ks[16])

    # use_alpha=True; PyTorch inits alpha to zeros (=> zero output), so we use
    # a deterministic nonzero alpha here to keep the test non-trivial.
    alpha = jnp.linspace(0.5, 1.5, F, dtype=jnp.float32).reshape(1, F)

    out = vxtam(x, y, Wb, Wc, Wd, sb, bb, sc, bc, sd, bd, alpha,
                block_n=16, chunk=8)
    out = jax.block_until_ready(out)

    ref = vxtam_reference(x, y, Wb, Wc, Wd, sb, bb, sc, bc, sd, bd, alpha)
    assert out.shape == (N, F)
    assert jnp.allclose(out, ref, atol=1e-3, rtol=1e-3), "mismatch vs reference"

    print("KERNEL_OK")
</pallas_src>

<mosaic_0001>
module attributes {stable_mosaic.version = 11 : i64} {
  func.func @vxtam_kernel(%arg0: i32, %arg1: memref<16x128xf32, #tpu.memory_space<vmem>>, %arg2: memref<16x128xf32, #tpu.memory_space<vmem>>, %arg3: memref<128x128xf32, #tpu.memory_space<vmem>>, %arg4: memref<128x256xf32, #tpu.memory_space<vmem>>, %arg5: memref<8x256xf32, #tpu.memory_space<vmem>>, %arg6: memref<16x128xf32, #tpu.memory_space<vmem>>) attributes {dimension_semantics = [#tpu.dimension_semantics<parallel>], iteration_bounds = array<i64: 2>, scalar_prefetch = 0 : i64, scratch_operands = 0 : i64, tpu.core_type = #tpu.core_type<tc>, window_params = [{transform_indices = @transform_0, window_bounds = array<i64: 16, 128>}, {transform_indices = @transform_1, window_bounds = array<i64: 16, 128>}, {pipeline_mode = #tpu.pipeline_mode<synchronous>, transform_indices = @transform_2, window_bounds = array<i64: 128, 128>}, {pipeline_mode = #tpu.pipeline_mode<synchronous>, transform_indices = @transform_3, window_bounds = array<i64: 128, 256>}, {pipeline_mode = #tpu.pipeline_mode<synchronous>, transform_indices = @transform_4, window_bounds = array<i64: 8, 256>}, {transform_indices = @transform_5, window_bounds = array<i64: 16, 128>}]} {
    %c0 = arith.constant 0 : index
    %c0_0 = arith.constant 0 : index
    %0 = vector.load %arg5[%c0, %c0_0] : memref<8x256xf32, #tpu.memory_space<vmem>>, vector<1x128xf32>
    %c1 = arith.constant 1 : index
    %c0_1 = arith.constant 0 : index
    %1 = vector.load %arg5[%c1, %c0_1] : memref<8x256xf32, #tpu.memory_space<vmem>>, vector<1x128xf32>
    %c2 = arith.constant 2 : index
    %c0_2 = arith.constant 0 : index
    %2 = vector.load %arg5[%c2, %c0_2] : memref<8x256xf32, #tpu.memory_space<vmem>>, vector<1x256xf32>
    %c3 = arith.constant 3 : index
    %c0_3 = arith.constant 0 : index
    %3 = vector.load %arg5[%c3, %c0_3] : memref<8x256xf32, #tpu.memory_space<vmem>>, vector<1x256xf32>
    %c4 = arith.constant 4 : index
    %c0_4 = arith.constant 0 : index
    %4 = vector.load %arg5[%c4, %c0_4] : memref<8x256xf32, #tpu.memory_space<vmem>>, vector<1x128xf32>
    %c0_5 = arith.constant 0 : index
    %c0_6 = arith.constant 0 : index
    %5 = vector.load %arg1[%c0_5, %c0_6] : memref<16x128xf32, #tpu.memory_space<vmem>>, vector<16x128xf32>
    %c0_7 = arith.constant 0 : index
    %c0_8 = arith.constant 0 : index
    %6 = vector.load %arg2[%c0_7, %c0_8] : memref<16x128xf32, #tpu.memory_space<vmem>>, vector<16x128xf32>
    %c0_9 = arith.constant 0 : index
    %c0_10 = arith.constant 0 : index
    %7 = vector.load %arg3[%c0_9, %c0_10] : memref<128x128xf32, #tpu.memory_space<vmem>>, vector<128x128xf32>
    %cst = arith.constant dense<0.000000e+00> : vector<16x128xf32>
    %8 = tpu.matmul %5, %7, %cst {dimension_numbers = #tpu.dot_dimension_numbers<[1], [0], [0], [1], [0, 0, 1, 1], [], []>} : vector<16x128xf32>, vector<128x128xf32>, vector<16x128xf32> -> vector<16x128xf32>
    %9 = vector.broadcast %0 : vector<1x128xf32> to vector<16x128xf32>
    %10 = arith.mulf %8, %9 : vector<16x128xf32>
    %11 = vector.broadcast %1 : vector<1x128xf32> to vector<16x128xf32>
    %12 = arith.addf %10, %11 : vector<16x128xf32>
    %cst_11 = arith.constant 0.000000e+00 : f32
    %13 = vector.broadcast %cst_11 : f32 to vector<16x128xf32>
    %14 = arith.maximumf %12, %13 : vector<16x128xf32>
    %c0_12 = arith.constant 0 : index
    %c0_13 = arith.constant 0 : index
    %15 = vector.load %arg4[%c0_12, %c0_13] : memref<128x256xf32, #tpu.memory_space<vmem>>, vector<128x256xf32>
    %cst_14 = arith.constant dense<0.000000e+00> : vector<16x256xf32>
    %16 = tpu.matmul %6, %15, %cst_14 {dimension_numbers = #tpu.dot_dimension_numbers<[1], [0], [0], [1], [0, 0, 1, 1], [], []>} : vector<16x128xf32>, vector<128x256xf32>, vector<16x256xf32> -> vector<16x256xf32>
    %17 = vector.broadcast %2 : vector<1x256xf32> to vector<16x256xf32>
    %18 = arith.mulf %16, %17 : vector<16x256xf32>
    %19 = vector.broadcast %3 : vector<1x256xf32> to vector<16x256xf32>
    %20 = arith.addf %18, %19 : vector<16x256xf32>
    %cst_15 = arith.constant 0.000000e+00 : f32
    %21 = vector.broadcast %cst_15 : f32 to vector<16x256xf32>
    %22 = arith.maximumf %20, %21 : vector<16x256xf32>
    %23 = vector.extract_strided_slice %22 {offsets = [0, 0], sizes = [16, 128], strides = [1, 1]} : vector<16x256xf32> to vector<16x128xf32>
    %24 = vector.extract_strided_slice %22 {offsets = [0, 128], sizes = [16, 128], strides = [1, 1]} : vector<16x256xf32> to vector<16x128xf32>
    %cst_16 = arith.constant 0.0883883461 : f32
    %25 = vector.broadcast %cst_16 : f32 to vector<16x128xf32>
    %26 = arith.mulf %14, %25 : vector<16x128xf32>
    %cst_17 = arith.constant dense<0xFF800000> : vector<16xf32>
    %27 = vector.multi_reduction <maximumf>, %23, %cst_17 [1] : vector<16x128xf32> to vector<16xf32>
    %28 = vector.shape_cast %27 : vector<16xf32> to vector<16x1xf32>
    %29 = vector.broadcast %28 : vector<16x1xf32> to vector<16x128xf32>
    %30 = arith.subf %23, %29 : vector<16x128xf32>
    %31 = vector.extract_strided_slice %26 {offsets = [0, 0], sizes = [8, 128], strides = [1, 1]} : vector<16x128xf32> to vector<8x128xf32>
    %32 = vector.extract_strided_slice %30 {offsets = [0, 0], sizes = [8, 128], strides = [1, 1]} : vector<16x128xf32> to vector<8x128xf32>
    %33 = vector.extract_strided_slice %24 {offsets = [0, 0], sizes = [8, 128], strides = [1, 1]} : vector<16x128xf32> to vector<8x128xf32>
    %34 = vector.shape_cast %31 : vector<8x128xf32> to vector<8x128x1xf32>
    %35 = vector.shape_cast %32 : vector<8x128xf32> to vector<8x1x128xf32>
    %36 = vector.broadcast %34 : vector<8x128x1xf32> to vector<8x128x128xf32>
    %37 = vector.broadcast %35 : vector<8x1x128xf32> to vector<8x128x128xf32>
    %38 = arith.mulf %36, %37 : vector<8x128x128xf32>
    %39 = math.exp %38 : vector<8x128x128xf32>
    %cst_18 = arith.constant dense<0.000000e+00> : vector<8x128xf32>
    %40 = vector.multi_reduction <add>, %39, %cst_18 [2] : vector<8x128x128xf32> to vector<8x128xf32>
    %41 = tpu.reciprocal %40 : vector<8x128xf32> -> vector<8x128xf32>
    %42 = arith.mulf %33, %41 : vector<8x128xf32>
    %43 = vector.shape_cast %42 : vector<8x128xf32> to vector<8x128x1xf32>
    %44 = vector.broadcast %43 : vector<8x128x1xf32> to vector<8x128x128xf32>
    %45 = arith.mulf %44, %39 : vector<8x128x128xf32>
    %cst_19 = arith.constant dense<0.000000e+00> : vector<8x128xf32>
    %46 = vector.multi_reduction <add>, %45, %cst_19 [1] : vector<8x128x128xf32> to vector<8x128xf32>
    %47 = vector.broadcast %4 : vector<1x128xf32> to vector<8x128xf32>
    %48 = arith.mulf %46, %47 : vector<8x128xf32>
    %c0_20 = arith.constant 0 : index
    %c0_21 = arith.constant 0 : index
    %49 = vector.load %arg6[%c0_20, %c0_21] : memref<16x128xf32, #tpu.memory_space<vmem>>, vector<8x128xf32>
    tpu.vector_store %arg6[%c0_20, %c0_21], %48 {strides = array<i32>} : memref<16x128xf32, #tpu.memory_space<vmem>>, vector<8x128xf32>,
    %50 = vector.extract_strided_slice %26 {offsets = [8, 0], sizes = [8, 128], strides = [1, 1]} : vector<16x128xf32> to vector<8x128xf32>
    %51 = vector.extract_strided_slice %30 {offsets = [8, 0], sizes = [8, 128], strides = [1, 1]} : vector<16x128xf32> to vector<8x128xf32>
    %52 = vector.extract_strided_slice %24 {offsets = [8, 0], sizes = [8, 128], strides = [1, 1]} : vector<16x128xf32> to vector<8x128xf32>
    %53 = vector.shape_cast %50 : vector<8x128xf32> to vector<8x128x1xf32>
    %54 = vector.shape_cast %51 : vector<8x128xf32> to vector<8x1x128xf32>
    %55 = vector.broadcast %53 : vector<8x128x1xf32> to vector<8x128x128xf32>
    %56 = vector.broadcast %54 : vector<8x1x128xf32> to vector<8x128x128xf32>
    %57 = arith.mulf %55, %56 : vector<8x128x128xf32>
    %58 = math.exp %57 : vector<8x128x128xf32>
    %cst_22 = arith.constant dense<0.000000e+00> : vector<8x128xf32>
    %59 = vector.multi_reduction <add>, %58, %cst_22 [2] : vector<8x128x128xf32> to vector<8x128xf32>
    %60 = tpu.reciprocal %59 : vector<8x128xf32> -> vector<8x128xf32>
    %61 = arith.mulf %52, %60 : vector<8x128xf32>
    %62 = vector.shape_cast %61 : vector<8x128xf32> to vector<8x128x1xf32>
    %63 = vector.broadcast %62 : vector<8x128x1xf32> to vector<8x128x128xf32>
    %64 = arith.mulf %63, %58 : vector<8x128x128xf32>
    %cst_23 = arith.constant dense<0.000000e+00> : vector<8x128xf32>
    %65 = vector.multi_reduction <add>, %64, %cst_23 [1] : vector<8x128x128xf32> to vector<8x128xf32>
    %66 = vector.broadcast %4 : vector<1x128xf32> to vector<8x128xf32>
    %67 = arith.mulf %65, %66 : vector<8x128xf32>
    %c8 = arith.constant 8 : index
    %c0_24 = arith.constant 0 : index
    %68 = vector.load %arg6[%c8, %c0_24] : memref<16x128xf32, #tpu.memory_space<vmem>>, vector<8x128xf32>
    tpu.vector_store %arg6[%c8, %c0_24], %67 {strides = array<i32>} : memref<16x128xf32, #tpu.memory_space<vmem>>, vector<8x128xf32>,
    return
  }
  func.func @transform_0(%arg0: i32) -> (i32, i32) {
    %c0_i32 = arith.constant 0 : i32
    %c0_i32_0 = arith.constant 0 : i32
    return %arg0, %c0_i32 : i32, i32
  }
  func.func @transform_1(%arg0: i32) -> (i32, i32) {
    %c0_i32 = arith.constant 0 : i32
    %c0_i32_0 = arith.constant 0 : i32
    return %arg0, %c0_i32 : i32, i32
  }
  func.func @transform_2(%arg0: i32) -> (i32, i32) {
    %c0_i32 = arith.constant 0 : i32
    %c0_i32_0 = arith.constant 0 : i32
    %c0_i32_1 = arith.constant 0 : i32
    return %c0_i32, %c0_i32_0 : i32, i32
  }
  func.func @transform_3(%arg0: i32) -> (i32, i32) {
    %c0_i32 = arith.constant 0 : i32
    %c0_i32_0 = arith.constant 0 : i32
    %c0_i32_1 = arith.constant 0 : i32
    return %c0_i32, %c0_i32_0 : i32, i32
  }
  func.func @transform_4(%arg0: i32) -> (i32, i32) {
    %c0_i32 = arith.constant 0 : i32
    %c0_i32_0 = arith.constant 0 : i32
    %c0_i32_1 = arith.constant 0 : i32
    return %c0_i32, %c0_i32_0 : i32, i32
  }
  func.func @transform_5(%arg0: i32) -> (i32, i32) {
    %c0_i32 = arith.constant 0 : i32
    %c0_i32_0 = arith.constant 0 : i32
    return %arg0, %c0_i32 : i32, i32
  }
}

</mosaic_0001>

<llo_original>
// kernel: tpu_custom_call.1
$region0: #{tpu_custom_call.1}
  #allocation0 [shape = 'u32[]', space=smem, size = 0x4, offset = 0x4, fixed_abs, tag = 'smem constant byte address 0x4 - core index']
  #allocation1 [shape = 'u32[144,128]{1,0:T(1,128)}', space=vmem, size = 0x12000, scoped, tag = 'internal scratch']
  %s0 = inlined_call_operand.hbm [shape: f32[32,128], index: 0, kind: input, shape index: {}]
  %s1 = inlined_call_operand.hbm [shape: f32[32,128], index: 1, kind: input, shape index: {}]
  %s2 = inlined_call_operand.hbm [shape: f32[128,128], index: 2, kind: input, shape index: {}]
  %s3 = inlined_call_operand.hbm [shape: f32[128,256], index: 3, kind: input, shape index: {}]
  %s4 = inlined_call_operand.hbm [shape: f32[8,256], index: 4, kind: input, shape index: {}]
  %s5 = inlined_call_operand.hbm [shape: f32[32,128], index: 5, kind: output, shape index: {}]
  %s6 = sld [smem:[#allocation0]]
  $region73: #{tpu_custom_call.1} parent=0
    _
  %s8 = ssub.s32 1, %s6
  %s9 = scalar_select 0, %s8, %s6
  $region1: #{tpu_custom_call.1} parent=0
    #allocation2 [shape = 'u8[16384]{0}', space=vmem, size = 0x4000, scoped, tag = 'input window, operand 0']
    #allocation3 [shape = 's32[2]{0}', space=sflag, size = 0x8, scoped, tag = 'scoped memory for tpu_custom_call.1']
    #allocation4 [shape = 's32[2]{0}', space=sflag, size = 0x8, scoped, tag = 'scoped memory for tpu_custom_call.1']
    #allocation5 [shape = 'u8[16384]{0}', space=vmem, size = 0x4000, scoped, tag = 'input window, operand 1']
    #allocation6 [shape = 's32[2]{0}', space=sflag, size = 0x8, scoped, tag = 'scoped memory for tpu_custom_call.1']
    #allocation7 [shape = 'u8[65536]{0}', space=vmem, size = 0x10000, scoped, tag = 'input window, operand 2, single buffered']
    #allocation8 [shape = 'u8[131072]{0}', space=vmem, size = 0x20000, scoped, tag = 'input window, operand 3, single buffered']
    #allocation9 [shape = 's32[1]{0}', space=sflag, size = 0x4, scoped, tag = 'scoped memory for tpu_custom_call.1']
    #allocation10 [shape = 'u8[8192]{0}', space=vmem, size = 0x2000, scoped, tag = 'input window, operand 4, single buffered']
    #allocation11 [shape = 'u8[16384]{0}', space=vmem, size = 0x4000, scoped, tag = 'output window, operand 0']
    %10 = vsyncpa [#allocation3], 0
    %s11 = scalar_lea.sflag [#allocation3], 1
    %12 = vsyncpa %s11, 0
    %13 = vsyncpa [#allocation6], 0
    %s14 = scalar_lea.sflag [#allocation6], 1
    %15 = vsyncpa %s14, 0
    %16 = vsyncpa [#allocation9], 0
    %17 = vsyncpa [#allocation4], 0
    %s18 = scalar_lea.sflag [#allocation4], 1
    %19 = vsyncpa %s18, 0
    loop: start=0, step=1, limit=4
    $region2: #{tpu_custom_call.1} parent=1 // loop_pre_header
      _
    $region3: #{tpu_custom_call.1} parent=1 // loop_header
      %s21 = sphi 0, %s25
      %p22 = scmp.ge.s32.totalorder %s21, 4
      %s31 = sphi 0, %s33
      %s34 = sphi 0, %s31
      %s35 = sphi 0, %s34
      %s51 = sphi 0, %s35
      %s57 = sphi 0, %s59
      %s60 = sphi 0, %s57
      %s61 = sphi 0, %s60
      %s77 = sphi 0, %s61
      %s81 = sphi 0, %s81
      %s83 = sphi 0, %s81
      %s84 = sphi 0, %s83
      %s98 = sphi 0, %s84
      %s102 = sphi 0, %s102
      %s104 = sphi 0, %s102
      %s105 = sphi 0, %s104
      %s119 = sphi 0, %s105
      %s123 = sphi 0, %s123
      %s125 = sphi 0, %s123
      %s126 = sphi 0, %s125
      %s140 = sphi 0, %s126
      %s146 = sphi 0, %s148
      %s149 = sphi 0, %s146
      %s150 = sphi 0, %s149
      %s166 = sphi 0, %s150
    $region4: #{tpu_custom_call.1} parent=1 // loop_header_branch
      %24 = sbr.rel (%p22) target = $region8
    $region5: #{tpu_custom_call.1} parent=1 // loop_body
      %s26 = ssub.s32 %s21, 1
      %s27 = ssub.s32 %s21, 2
      %s28 = sadd.s32 %s21, 1
      %s29 = ssub.s32 %s21, %s28
      %p30 = scmp.eq.s32.totalorder %s29, 0
      %s32 = sadd.s32 %s31, 1
      %s33 = scalar_select %p30, %s31, %s32
      %p36 = pneg %p30
      %p37 = scmp.eq.s32.totalorder %s21, 1
      %p38 = por %p36, %p37
      %p39 = scmp.ne.s32.totalorder %s31, %s34
      %p40 = scmp.eq.s32.totalorder %s21, 0
      %p41 = por %p39, %p40
      %p42 = scmp.ne.s32.totalorder %s31, %s34
      %p43 = scmp.eq.s32.totalorder %s26, 1
      %p44 = por %p42, %p43
      %p45 = scmp.ne.s32.totalorder %s34, %s35
      %p46 = scmp.eq.s32.totalorder %s26, 0
      %p47 = por %p45, %p46
      %p48 = scmp.ne.s32.totalorder %s34, %s35
      %p49 = scmp.eq.s32.totalorder %s27, 1
      %p50 = por %p48, %p49
      %p52 = scmp.ne.s32.totalorder %s35, %s51
      %p53 = scmp.eq.s32.totalorder %s27, 0
      %p54 = por %p52, %p53
      %s55 = ssub.s32 %s21, %s28
      %p56 = scmp.eq.s32.totalorder %s55, 0
      %s58 = sadd.s32 %s57, 1
      %s59 = scalar_select %p56, %s57, %s58
      %p62 = pneg %p56
      %p63 = scmp.eq.s32.totalorder %s21, 1
      %p64 = por %p62, %p63
      %p65 = scmp.ne.s32.totalorder %s57, %s60
      %p66 = scmp.eq.s32.totalorder %s21, 0
      %p67 = por %p65, %p66
      %p68 = scmp.ne.s32.totalorder %s57, %s60
      %p69 = scmp.eq.s32.totalorder %s26, 1
      %p70 = por %p68, %p69
      %p71 = scmp.ne.s32.totalorder %s60, %s61
      %p72 = scmp.eq.s32.totalorder %s26, 0
      %p73 = por %p71, %p72
      %p74 = scmp.ne.s32.totalorder %s60, %s61
      %p75 = scmp.eq.s32.totalorder %s27, 1
      %p76 = por %p74, %p75
      %p78 = scmp.ne.s32.totalorder %s61, %s77
      %p79 = scmp.eq.s32.totalorder %s27, 0
      %p80 = por %p78, %p79
      %s82 = sadd.s32 %s81, 1
      %p85 = scmp.eq.s32.totalorder %s21, 1
      %p86 = scmp.ne.s32.totalorder %s81, %s83
      %p87 = scmp.eq.s32.totalorder %s21, 0
      %p88 = por %p86, %p87
      %p89 = scmp.ne.s32.totalorder %s81, %s83
      %p90 = scmp.eq.s32.totalorder %s26, 1
      %p91 = por %p89, %p90
      %p92 = scmp.ne.s32.totalorder %s83, %s84
      %p93 = scmp.eq.s32.totalorder %s26, 0
      %p94 = por %p92, %p93
      %p95 = scmp.ne.s32.totalorder %s83, %s84
      %p96 = scmp.eq.s32.totalorder %s27, 1
      %p97 = por %p95, %p96
      %p99 = scmp.ne.s32.totalorder %s84, %s98
      %p100 = scmp.eq.s32.totalorder %s27, 0
      %p101 = por %p99, %p100
      %s103 = sadd.s32 %s102, 1
      %p106 = scmp.eq.s32.totalorder %s21, 1
      %p107 = scmp.ne.s32.totalorder %s102, %s104
      %p108 = scmp.eq.s32.totalorder %s21, 0
      %p109 = por %p107, %p108
      %p110 = scmp.ne.s32.totalorder %s102, %s104
      %p111 = scmp.eq.s32.totalorder %s26, 1
      %p112 = por %p110, %p111
      %p113 = scmp.ne.s32.totalorder %s104, %s105
      %p114 = scmp.eq.s32.totalorder %s26, 0
      %p115 = por %p113, %p114
      %p116 = scmp.ne.s32.totalorder %s104, %s105
      %p117 = scmp.eq.s32.totalorder %s27, 1
      %p118 = por %p116, %p117
      %p120 = scmp.ne.s32.totalorder %s105, %s119
      %p121 = scmp.eq.s32.totalorder %s27, 0
      %p122 = por %p120, %p121
      %s124 = sadd.s32 %s123, 1
      %p127 = scmp.eq.s32.totalorder %s21, 1
      %p128 = scmp.ne.s32.totalorder %s123, %s125
      %p129 = scmp.eq.s32.totalorder %s21, 0
      %p130 = por %p128, %p129
      %p131 = scmp.ne.s32.totalorder %s123, %s125
      %p132 = scmp.eq.s32.totalorder %s26, 1
      %p133 = por %p131, %p132
      %p134 = scmp.ne.s32.totalorder %s125, %s126
      %p135 = scmp.eq.s32.totalorder %s26, 0
      %p136 = por %p134, %p135
      %p137 = scmp.ne.s32.totalorder %s125, %s126
      %p138 = scmp.eq.s32.totalorder %s27, 1
      %p139 = por %p137, %p138
      %p141 = scmp.ne.s32.totalorder %s126, %s140
      %p142 = scmp.eq.s32.totalorder %s27, 0
      %p143 = por %p141, %p142
      %s144 = ssub.s32 %s21, %s28
      %p145 = scmp.eq.s32.totalorder %s144, 0
      %s147 = sadd.s32 %s146, 1
      %s148 = scalar_select %p145, %s146, %s147
      %p151 = pneg %p145
      %p152 = scmp.eq.s32.totalorder %s21, 1
      %p153 = por %p151, %p152
      %p154 = scmp.ne.s32.totalorder %s146, %s149
      %p155 = scmp.eq.s32.totalorder %s21, 0
      %p156 = por %p154, %p155
      %p157 = scmp.ne.s32.totalorder %s146, %s149
      %p158 = scmp.eq.s32.totalorder %s26, 1
      %p159 = por %p157, %p158
      %p160 = scmp.ne.s32.totalorder %s149, %s150
      %p161 = scmp.eq.s32.totalorder %s26, 0
      %p162 = por %p160, %p161
      %p163 = scmp.ne.s32.totalorder %s149, %s150
      %p164 = scmp.eq.s32.totalorder %s27, 1
      %p165 = por %p163, %p164
      %p167 = scmp.ne.s32.totalorder %s150, %s166
      %p168 = scmp.eq.s32.totalorder %s27, 0
      %p169 = por %p167, %p168
      %p170 = scmp.le.s32.totalorder 1, %s21
      %p171 = scmp.lt.s32.totalorder %s21, 3
      %p172 = pnand %p170, %p171
      %p173 = pneg %p172
      // Predicated region
      $region9: #{tpu_custom_call.1} parent=5 // pred_check
        _
      $region10: #{tpu_custom_call.1} parent=5 // pred_check_branch
        %175 = sbr.rel (%p172) target = $region12
      $region11: #{tpu_custom_call.1} parent=5 // pred_region
        %s176 = ssub.s32 %s21, 1
        // Predicated region
        $region13: #{tpu_custom_call.1} parent=11 // pred_check
          %p177 = pneg %p94
        $region14: #{tpu_custom_call.1} parent=11 // pred_check_branch
          %179 = sbr.rel (%p177) target = $region16
        $region15: #{tpu_custom_call.1} parent=11 // pred_region
          %s181 = ssub.s32 2048, 2048
          %182 = vsyncadd [#allocation6], %s181
          %s183 = sshll.u32 [#allocation7], 4
          %s184 = int_to_ptr.vmem [resolvable:$true] %s183
          %189 = dma.hbm_to_vmem [thread:$0]  %s2, 2048, %s184, [#allocation6], 128, 128, 8
        $region16: #{tpu_custom_call.1} parent=11 // pred_fallthru
          _
        // Predicated region
        $region17: #{tpu_custom_call.1} parent=11 // pred_check
          %p190 = pneg %p115
        $region18: #{tpu_custom_call.1} parent=11 // pred_check_branch
          %192 = sbr.rel (%p190) target = $region20
        $region19: #{tpu_custom_call.1} parent=11 // pred_region
          %s194 = ssub.s32 4096, 4096
          %195 = vsyncadd [#allocation9], %s194
          %s196 = sshll.u32 [#allocation8], 4
          %s197 = int_to_ptr.vmem [resolvable:$true] %s196
          %202 = dma.hbm_to_vmem [thread:$0]  %s3, 4096, %s197, [#allocation9], 256, 256, 16
        $region20: #{tpu_custom_call.1} parent=11 // pred_fallthru
          _
        // Predicated region
        $region21: #{tpu_custom_call.1} parent=11 // pred_check
          %p203 = pneg %p136
        $region22: #{tpu_custom_call.1} parent=11 // pred_check_branch
          %205 = sbr.rel (%p203) target = $region24
        $region23: #{tpu_custom_call.1} parent=11 // pred_region
          %s207 = ssub.s32 256, 256
          %208 = vsyncadd [#allocation9], %s207
          %s210 = sshll.u32 [#allocation10], 4
          %s211 = int_to_ptr.vmem [resolvable:$true] %s210
          %213 = dma.hbm_to_vmem [thread:$0]  %s4, 256, %s211, [#allocation9]
        $region24: #{tpu_custom_call.1} parent=11 // pred_fallthru
          _
      $region12: #{tpu_custom_call.1} parent=5 // pred_fallthru
        _
      %p214 = scmp.lt.s32.totalorder %s21, 2
      // Predicated region
      $region25: #{tpu_custom_call.1} parent=5 // pred_check
        %p215 = pneg %p214
      $region26: #{tpu_custom_call.1} parent=5 // pred_check_branch
        %217 = sbr.rel (%p215) target = $region28
      $region27: #{tpu_custom_call.1} parent=5 // pred_region
        // Predicated region
        $region29: #{tpu_custom_call.1} parent=27 // pred_check
          %p218 = pneg %p41
        $region30: #{tpu_custom_call.1} parent=27 // pred_check_branch
          %220 = sbr.rel (%p218) target = $region32
        $region31: #{tpu_custom_call.1} parent=27 // pred_region
          %s221 = sand.u32 %s31, 1
          %s222 = scalar_lea.sflag [#allocation3], %s221
          %s223 = sand.u32 %s31, 1
          %s224 = smul.addr %s223, 16
          %s225 = scalar_lea.vmem [#allocation2], %s224
          %s226 = smul.u32 2, %s21
          %s228 = ssub.s32 256, 256
          %229 = vsyncadd %s222, %s228
          %s230 = smul.addr %s226, 128
          %s231 = scalar_lea.hbm %s0, %s230
          %s232 = sshll.u32 %s225, 4
          %s233 = int_to_ptr.vmem [resolvable:$true] %s232
          %238 = dma.hbm_to_vmem [thread:$0]  %s231, 256, %s233, %s222, 128, 128, 8
        $region32: #{tpu_custom_call.1} parent=27 // pred_fallthru
          _
        // Predicated region
        $region33: #{tpu_custom_call.1} parent=27 // pred_check
          %p239 = pneg %p67
        $region34: #{tpu_custom_call.1} parent=27 // pred_check_branch
          %241 = sbr.rel (%p239) target = $region36
        $region35: #{tpu_custom_call.1} parent=27 // pred_region
          %s242 = sand.u32 %s21, 1
          %s243 = scalar_lea.sflag [#allocation6], %s242
          %s244 = sand.u32 %s57, 1
          %s245 = smul.addr %s244, 16
          %s246 = scalar_lea.vmem [#allocation5], %s245
          %s247 = smul.u32 2, %s21
          %s249 = ssub.s32 256, 256
          %250 = vsyncadd %s243, %s249
          %s251 = smul.addr %s247, 128
          %s252 = scalar_lea.hbm %s1, %s251
          %s253 = sshll.u32 %s246, 4
          %s254 = int_to_ptr.vmem [resolvable:$true] %s253
          %259 = dma.hbm_to_vmem [thread:$0]  %s252, 256, %s254, %s243, 128, 128, 8
        $region36: #{tpu_custom_call.1} parent=27 // pred_fallthru
          _
      $region28: #{tpu_custom_call.1} parent=5 // pred_fallthru
        _
      %p260 = scmp.le.s32.totalorder 1, %s21
      %p261 = scmp.lt.s32.totalorder %s21, 3
      %p262 = pnand %p260, %p261
      %p263 = pneg %p262
      // Predicated region
      $region37: #{tpu_custom_call.1} parent=5 // pred_check
        _
      $region38: #{tpu_custom_call.1} parent=5 // pred_check_branch
        %265 = sbr.rel (%p262) target = $region40
      $region39: #{tpu_custom_call.1} parent=5 // pred_region
        %s266 = ssub.s32 %s21, 1
        %s267 = sand.u32 %s34, 1
        %s268 = scalar_lea.sflag [#allocation3], %s267
        %s269 = sand.u32 %s34, 1
        %s270 = smul.addr %s269, 16
        %s271 = scalar_lea.vmem [#allocation2], %s270
        // Predicated region
        $region41: #{tpu_custom_call.1} parent=39 // pred_check
          %p272 = pneg %p47
        $region42: #{tpu_custom_call.1} parent=39 // pred_check_branch
          %274 = sbr.rel (%p272) target = $region44
        $region43: #{tpu_custom_call.1} parent=39 // pred_region
          %275 = dma.done %s268, 256
        $region44: #{tpu_custom_call.1} parent=39 // pred_fallthru
          _
        %s276 = sand.u32 %s26, 1
        %s277 = scalar_lea.sflag [#allocation6], %s276
        %s278 = sand.u32 %s60, 1
        %s279 = smul.addr %s278, 16
        %s280 = scalar_lea.vmem [#allocation5], %s279
        // Predicated region
        $region45: #{tpu_custom_call.1} parent=39 // pred_check
          %p281 = pneg %p73
        $region46: #{tpu_custom_call.1} parent=39 // pred_check_branch
          %283 = sbr.rel (%p281) target = $region48
        $region47: #{tpu_custom_call.1} parent=39 // pred_region
          %284 = dma.done %s277, 256
        $region48: #{tpu_custom_call.1} parent=39 // pred_fallthru
          _
        // Predicated region
        $region49: #{tpu_custom_call.1} parent=39 // pred_check
          %p285 = pneg %p94
        $region50: #{tpu_custom_call.1} parent=39 // pred_check_branch
          %287 = sbr.rel (%p285) target = $region52
        $region51: #{tpu_custom_call.1} parent=39 // pred_region
          %288 = dma.done [#allocation6], 2048
        $region52: #{tpu_custom_call.1} parent=39 // pred_fallthru
          _
        // Predicated region
        $region53: #{tpu_custom_call.1} parent=39 // pred_check
          %p289 = pneg %p115
        $region54: #{tpu_custom_call.1} parent=39 // pred_check_branch
          %291 = sbr.rel (%p289) target = $region56
        $region55: #{tpu_custom_call.1} parent=39 // pred_region
          %292 = dma.done [#allocation9], 4096
        $region56: #{tpu_custom_call.1} parent=39 // pred_fallthru
          _
        // Predicated region
        $region57: #{tpu_custom_call.1} parent=39 // pred_check
          %p293 = pneg %p136
        $region58: #{tpu_custom_call.1} parent=39 // pred_check_branch
          %295 = sbr.rel (%p293) target = $region60
        $region59: #{tpu_custom_call.1} parent=39 // pred_region
          %296 = dma.done [#allocation9], 256
        $region60: #{tpu_custom_call.1} parent=39 // pred_fallthru
          _
        %s297 = sand.u32 %s34, 1
        %s298 = scalar_lea.sflag [#allocation3], %s297
        %s299 = sand.u32 %s34, 1
        %s300 = smul.addr %s299, 16
        %s301 = scalar_lea.vmem [#allocation2], %s300
        %p302 = pneg %p47
        %p303 = pneg %p44
        %s304 = sand.u32 %s26, 1
        %s305 = scalar_lea.sflag [#allocation6], %s304
        %s306 = sand.u32 %s60, 1
        %s307 = smul.addr %s306, 16
        %s308 = scalar_lea.vmem [#allocation5], %s307
        %p309 = pneg %p73
        %p310 = pneg %p70
        %p311 = pneg %p94
        %p312 = pneg %p91
        %p313 = pneg %p115
        %p314 = pneg %p112
        %p315 = pneg %p136
        %p316 = pneg %p133
        %p317 = pneg %p162
        %p318 = pneg %p159
        %s319 = sand.u32 %s149, 1
        %s320 = scalar_lea.sflag [#allocation4], %s319
        %s321 = sand.u32 %s149, 1
        %s322 = smul.addr %s321, 16
        %s323 = scalar_lea.vmem [#allocation11], %s322
        %s324 = smul.u32 2, %s26
        %s325 = smul.u32 2, %s26
        %s326 = smul.u32 2, %s26
        %v327 = vld [vmem:[#allocation10] ss:$0 sm:$0xff]
        %v328 = vld [vmem:[#allocation10 + $0x1] ss:$0 sm:$0xff]
        %s329 = scalar_lea.vmem [#allocation10], 2
        %v330 = vld [vmem:[%s329] ss:$8 sm:$0x3]
        %s331 = scalar_lea.vmem [#allocation10], 3
        %v332 = vld [vmem:[%s331] ss:$8 sm:$0x3]
        %v333 = vld [vmem:[#allocation10 + $0x4] ss:$0 sm:$0xff]
        %v334 = vld [vmem:[%s271] sm:$0xff]
        %v335 = vld [vmem:[%s271 + $0x8] sm:$0xff]
        %v336 = vld [vmem:[%s280] sm:$0xff]
        %v337 = vld [vmem:[%s280 + $0x8] sm:$0xff]
        %v338 = vld [vmem:[#allocation7] sm:$0xff]
        %v339 = vld [vmem:[#allocation7 + $0x8] sm:$0xff]
        %v340 = vld [vmem:[#allocation7 + $0x10] sm:$0xff]
        %v341 = vld [vmem:[#allocation7 + $0x18] sm:$0xff]
        %v342 = vld [vmem:[#allocation7 + $0x20] sm:$0xff]
        %v343 = vld [vmem:[#allocation7 + $0x28] sm:$0xff]
        %v344 = vld [vmem:[#allocation7 + $0x30] sm:$0xff]
        %v345 = vld [vmem:[#allocation7 + $0x38] sm:$0xff]
        %v346 = vld [vmem:[#allocation7 + $0x40] sm:$0xff]
        %v347 = vld [vmem:[#allocation7 + $0x48] sm:$0xff]
        %v348 = vld [vmem:[#allocation7 + $0x50] sm:$0xff]
        %v349 = vld [vmem:[#allocation7 + $0x58] sm:$0xff]
        %v350 = vld [vmem:[#allocation7 + $0x60] sm:$0xff]
        %v351 = vld [vmem:[#allocation7 + $0x68] sm:$0xff]
        %v352 = vld [vmem:[#allocation7 + $0x70] sm:$0xff]
        %v353 = vld [vmem:[#allocation7 + $0x78] sm:$0xff]
        %354 = vmatprep.subr.mxu0 0.0
        %355 = vmatpush1.msra.mxu0 %v338
        %356 = vmatprep.subr.mxu0 0.0
        %357 = vmatpush1.msra.mxu0 %v339
        %358 = vmatprep.subr.mxu0 0.0
        %359 = vmatpush1.msra.mxu0 %v340
        %360 = vmatprep.subr.mxu0 0.0
        %361 = vmatpush1.msra.mxu0 %v341
        %362 = vmatprep.subr.mxu0 0.0
        %363 = vmatpush1.msra.mxu0 %v342
        %364 = vmatprep.subr.mxu0 0.0
        %365 = vmatpush1.msra.mxu0 %v343
        %366 = vmatprep.subr.mxu0 0.0
        %367 = vmatpush1.msra.mxu0 %v344
        %368 = vmatprep.subr.mxu0 0.0
        %369 = vmatpush1.msra.mxu0 %v345
        %370 = vmatprep.subr.mxu0 0.0
        %371 = vmatpush1.msra.mxu0 %v346
        %372 = vmatprep.subr.mxu0 0.0
        %373 = vmatpush1.msra.mxu0 %v347
        %374 = vmatprep.subr.mxu0 0.0
        %375 = vmatpush1.msra.mxu0 %v348
        %376 = vmatprep.subr.mxu0 0.0
        %377 = vmatpush1.msra.mxu0 %v349
        %378 = vmatprep.subr.mxu0 0.0
        %379 = vmatpush1.msra.mxu0 %v350
        %380 = vmatprep.subr.mxu0 0.0
        %381 = vmatpush1.msra.mxu0 %v351
        %382 = vmatprep.subr.mxu0 0.0
        %383 = vmatpush1.msra.mxu0 %v352
        %384 = vmatprep.subr.mxu0 0.0
        %385 = vmatpush1.msra.mxu0 %v353
        %386 = vmatprep.subr.mxu0 0.0
        %387 = vmatpush1.msra.mxu0 0.0
        %388 = vmatprep.subr.mxu0 0.0
        %389 = vmatpush1.msra.mxu0 0.0
        %390 = vmatprep.subr.mxu0 0.0
        %391 = vmatpush1.msra.mxu0 0.0
        %392 = vmatprep.subr.mxu0 0.0
        %393 = vmatpush1.msra.mxu0 0.0
        %394 = vmatprep.subr.mxu0 0.0
        %395 = vmatpush1.msra.mxu0 0.0
        %396 = vmatprep.subr.mxu0 0.0
        %397 = vmatpush1.msra.mxu0 0.0
        %398 = vmatprep.subr.mxu0 0.0
        %399 = vmatpush1.msra.mxu0 0.0
        %400 = vmatprep.subr.mxu0 0.0
        %401 = vmatpush1.msra.mxu0 0.0
        %402 = vmatprep.subr.mxu0 0.0
        %403 = vmatpush1.msra.mxu0 0.0
        %404 = vmatprep.subr.mxu0 0.0
        %405 = vmatpush1.msra.mxu0 0.0
        %406 = vmatprep.subr.mxu0 0.0
        %407 = vmatpush1.msra.mxu0 0.0
        %408 = vmatprep.subr.mxu0 0.0
        %409 = vmatpush1.msra.mxu0 0.0
        %410 = vmatprep.subr.mxu0 0.0
        %411 = vmatpush1.msra.mxu0 0.0
        %412 = vmatprep.subr.mxu0 0.0
        %413 = vmatpush1.msra.mxu0 0.0
        %414 = vmatprep.subr.mxu0 0.0
        %415 = vmatpush1.msra.mxu0 0.0
        %416 = vmatprep.subr.mxu0 0.0
        %417 = vmatpush1.msra.mxu0 0.0
        %418 = vmatprep.mubr.f32.mxu0 0.0
        %419 = vmatmul.mubr.f32.gmra.mrb[0].mxu0 %v334
        %v420 = vpop.f32.mrb[0].mxu0
        %v421 = vadd.f32 0.0, %v420
        %v422 = vpop.f32.mrb[0].mxu0
        %423 = vmatprep.mubr.f32.mxu0 0.0
        %424 = vmatmul.mubr.f32.gmra.mrb[0].mxu0 %v335
        %v425 = vpop.f32.mrb[0].mxu0
        %v426 = vadd.f32 0.0, %v425
        %v427 = vpop.f32.mrb[0].mxu0
        %428 = vdwg.mxu0
        %v429 = vmul.f32 %v421, %v327
        %v430 = vmul.f32 %v426, %v327
        %v431 = vadd.f32 %v429, %v328
        %v432 = vadd.f32 %v430, %v328
        %v433 = vmax.f32 %v431, 0.0
        %v434 = vmax.f32 %v432, 0.0
        %v435 = vld [vmem:[#allocation8] sm:$0xff]
        %v436 = vld [vmem:[#allocation8 + $0x8] sm:$0xff]
        %v437 = vld [vmem:[#allocation8 + $0x10] sm:$0xff]
        %v438 = vld [vmem:[#allocation8 + $0x18] sm:$0xff]
        %v439 = vld [vmem:[#allocation8 + $0x20] sm:$0xff]
        %v440 = vld [vmem:[#allocation8 + $0x28] sm:$0xff]
        %v441 = vld [vmem:[#allocation8 + $0x30] sm:$0xff]
        %v442 = vld [vmem:[#allocation8 + $0x38] sm:$0xff]
        %v443 = vld [vmem:[#allocation8 + $0x40] sm:$0xff]
        %v444 = vld [vmem:[#allocation8 + $0x48] sm:$0xff]
        %v445 = vld [vmem:[#allocation8 + $0x50] sm:$0xff]
        %v446 = vld [vmem:[#allocation8 + $0x58] sm:$0xff]
        %v447 = vld [vmem:[#allocation8 + $0x60] sm:$0xff]
        %v448 = vld [vmem:[#allocation8 + $0x68] sm:$0xff]
        %v449 = vld [vmem:[#allocation8 + $0x70] sm:$0xff]
        %v450 = vld [vmem:[#allocation8 + $0x78] sm:$0xff]
        %v451 = vld [vmem:[#allocation8 + $0x80] sm:$0xff]
        %v452 = vld [vmem:[#allocation8 + $0x88] sm:$0xff]
        %v453 = vld [vmem:[#allocation8 + $0x90] sm:$0xff]
        %v454 = vld [vmem:[#allocation8 + $0x98] sm:$0xff]
        %v455 = vld [vmem:[#allocation8 + $0xa0] sm:$0xff]
        %v456 = vld [vmem:[#allocation8 + $0xa8] sm:$0xff]
        %v457 = vld [vmem:[#allocation8 + $0xb0] sm:$0xff]
        %v458 = vld [vmem:[#allocation8 + $0xb8] sm:$0xff]
        %v459 = vld [vmem:[#allocation8 + $0xc0] sm:$0xff]
        %v460 = vld [vmem:[#allocation8 + $0xc8] sm:$0xff]
        %v461 = vld [vmem:[#allocation8 + $0xd0] sm:$0xff]
        %v462 = vld [vmem:[#allocation8 + $0xd8] sm:$0xff]
        %v463 = vld [vmem:[#allocation8 + $0xe0] sm:$0xff]
        %v464 = vld [vmem:[#allocation8 + $0xe8] sm:$0xff]
        %v465 = vld [vmem:[#allocation8 + $0xf0] sm:$0xff]
        %v466 = vld [vmem:[#allocation8 + $0xf8] sm:$0xff]
        %467 = vmatprep.subr.mxu0 %v436
        %468 = vmatpush1.msra.mxu0 %v435
        %469 = vmatprep.subr.mxu0 %v438
        %470 = vmatpush1.msra.mxu0 %v437
        %471 = vmatprep.subr.mxu0 %v440
        %472 = vmatpush1.msra.mxu0 %v439
        %473 = vmatprep.subr.mxu0 %v442
        %474 = vmatpush1.msra.mxu0 %v441
        %475 = vmatprep.subr.mxu0 %v444
        %476 = vmatpush1.msra.mxu0 %v443
        %477 = vmatprep.subr.mxu0 %v446
        %478 = vmatpush1.msra.mxu0 %v445
        %479 = vmatprep.subr.mxu0 %v448
        %480 = vmatpush1.msra.mxu0 %v447
        %481 = vmatprep.subr.mxu0 %v450
        %482 = vmatpush1.msra.mxu0 %v449
        %483 = vmatprep.subr.mxu0 %v452
        %484 = vmatpush1.msra.mxu0 %v451
        %485 = vmatprep.subr.mxu0 %v454
        %486 = vmatpush1.msra.mxu0 %v453
        %487 = vmatprep.subr.mxu0 %v456
        %488 = vmatpush1.msra.mxu0 %v455
        %489 = vmatprep.subr.mxu0 %v458
        %490 = vmatpush1.msra.mxu0 %v457
        %491 = vmatprep.subr.mxu0 %v460
        %492 = vmatpush1.msra.mxu0 %v459
        %493 = vmatprep.subr.mxu0 %v462
        %494 = vmatpush1.msra.mxu0 %v461
        %495 = vmatprep.subr.mxu0 %v464
        %496 = vmatpush1.msra.mxu0 %v463
        %497 = vmatprep.subr.mxu0 %v466
        %498 = vmatpush1.msra.mxu0 %v465
        %499 = vmatprep.subr.mxu0 0.0
        %500 = vmatpush1.msra.mxu0 0.0
        %501 = vmatprep.subr.mxu0 0.0
        %502 = vmatpush1.msra.mxu0 0.0
        %503 = vmatprep.subr.mxu0 0.0
        %504 = vmatpush1.msra.mxu0 0.0
        %505 = vmatprep.subr.mxu0 0.0
        %506 = vmatpush1.msra.mxu0 0.0
        %507 = vmatprep.subr.mxu0 0.0
        %508 = vmatpush1.msra.mxu0 0.0
        %509 = vmatprep.subr.mxu0 0.0
        %510 = vmatpush1.msra.mxu0 0.0
        %511 = vmatprep.subr.mxu0 0.0
        %512 = vmatpush1.msra.mxu0 0.0
        %513 = vmatprep.subr.mxu0 0.0
        %514 = vmatpush1.msra.mxu0 0.0
        %515 = vmatprep.subr.mxu0 0.0
        %516 = vmatpush1.msra.mxu0 0.0
        %517 = vmatprep.subr.mxu0 0.0
        %518 = vmatpush1.msra.mxu0 0.0
        %519 = vmatprep.subr.mxu0 0.0
        %520 = vmatpush1.msra.mxu0 0.0
        %521 = vmatprep.subr.mxu0 0.0
        %522 = vmatpush1.msra.mxu0 0.0
        %523 = vmatprep.subr.mxu0 0.0
        %524 = vmatpush1.msra.mxu0 0.0
        %525 = vmatprep.subr.mxu0 0.0
        %526 = vmatpush1.msra.mxu0 0.0
        %527 = vmatprep.subr.mxu0 0.0
        %528 = vmatpush1.msra.mxu0 0.0
        %529 = vmatprep.subr.mxu0 0.0
        %530 = vmatpush1.msra.mxu0 0.0
        %531 = vmatprep.mubr.f32.mxu0 0.0
        %532 = vmatmul.mubr.f32.gmra.mrb[0].mxu0 %v336
        %v533 = vpop.f32.mrb[0].mxu0
        %v534 = vadd.f32 0.0, %v533
        %v535 = vpop.f32.mrb[0].mxu0
        %v536 = vadd.f32 0.0, %v535
        %537 = vmatprep.mubr.f32.mxu0 0.0
        %538 = vmatmul.mubr.f32.gmra.mrb[0].mxu0 %v337
        %v539 = vpop.f32.mrb[0].mxu0
        %v540 = vadd.f32 0.0, %v539
        %v541 = vpop.f32.mrb[0].mxu0
        %v542 = vadd.f32 0.0, %v541
        %543 = vdwg.mxu0
        %v545 = vlaneseq
        %v546 = vshrl.u32 %v545, 7
        %v547 = vsub.s32 0, %v546
        %v548 = vrot.slane %v330, %v547
        %v549 = vlaneseq
        %v550 = vshrl.u32 %v549, 7
        %v551 = vsub.s32 1, %v550
        %v552 = vrot.slane %v330, %v551
        %v555 = vmul.f32 %v534, %v548
        %v556 = vmul.f32 %v536, %v552
        %v557 = vmul.f32 %v540, %v548
        %v558 = vmul.f32 %v542, %v552
        %v560 = vlaneseq
        %v561 = vshrl.u32 %v560, 7
        %v562 = vsub.s32 0, %v561
        %v563 = vrot.slane %v332, %v562
        %v564 = vlaneseq
        %v565 = vshrl.u32 %v564, 7
        %v566 = vsub.s32 1, %v565
        %v567 = vrot.slane %v332, %v566
        %v570 = vadd.f32 %v555, %v563
        %v571 = vadd.f32 %v556, %v567
        %v572 = vadd.f32 %v557, %v563
        %v573 = vadd.f32 %v558, %v567
        %v574 = vmax.f32 %v570, 0.0
        %v575 = vmax.f32 %v571, 0.0
        %v576 = vmax.f32 %v572, 0.0
        %v577 = vmax.f32 %v573, 0.0
        %v578 = vmul.f32 %v433, 0.088388346
        %v579 = vmul.f32 %v434, 0.088388346
        %580 = vmax.xlane.f32.xlu0 %v574
        %v581 = vpop.xlane.xlu0 %580
        %582 = vmax.xlane.f32.xlu0 %v576
        %v583 = vpop.xlane.xlu0 %582
        %v584 = vsub.f32 %v574, %v581
        %v585 = vsub.f32 %v576, %v583
        %v586 = vlaneseq
        %v587 = vshrl.u32 %v586, 7
        %v588 = vsub.s32 0, %v587
        %v589 = vrot.slane %v578, %v588
        %591 = vbcast.lane.b32.xlu0 %v589, 256
        %v592 = vpop.permute.xlu0 %591
        %s594 = sor.u32 256, 8
        %595 = vbcast.lane.b32.xlu0 %v589, %s594
        %v596 = vpop.permute.xlu0 %595
        %s598 = sor.u32 256, 16
        %599 = vbcast.lane.b32.xlu0 %v589, %s598
        %v600 = vpop.permute.xlu0 %599
        %s602 = sor.u32 256, 24
        %603 = vbcast.lane.b32.xlu0 %v589, %s602
        %v604 = vpop.permute.xlu0 %603
        %s606 = sor.u32 256, 32
        %607 = vbcast.lane.b32.xlu0 %v589, %s606
        %v608 = vpop.permute.xlu0 %607
        %s610 = sor.u32 256, 40
        %611 = vbcast.lane.b32.xlu0 %v589, %s610
        %v612 = vpop.permute.xlu0 %611
        %s614 = sor.u32 256, 48
        %615 = vbcast.lane.b32.xlu0 %v589, %s614
        %v616 = vpop.permute.xlu0 %615
        %s618 = sor.u32 256, 56
        %619 = vbcast.lane.b32.xlu0 %v589, %s618
        %v620 = vpop.permute.xlu0 %619
        %s622 = sor.u32 256, 64
        %623 = vbcast.lane.b32.xlu0 %v589, %s622
        %v624 = vpop.permute.xlu0 %623
        %s626 = sor.u32 256, 72
        %627 = vbcast.lane.b32.xlu0 %v589, %s626
        %v628 = vpop.permute.xlu0 %627
        %s630 = sor.u32 256, 80
        %631 = vbcast.lane.b32.xlu0 %v589, %s630
        %v632 = vpop.permute.xlu0 %631
        %s634 = sor.u32 256, 88
        %635 = vbcast.lane.b32.xlu0 %v589, %s634
        %v636 = vpop.permute.xlu0 %635
        %s638 = sor.u32 256, 96
        %639 = vbcast.lane.b32.xlu0 %v589, %s638
        %v640 = vpop.permute.xlu0 %639
        %s642 = sor.u32 256, 104
        %643 = vbcast.lane.b32.xlu0 %v589, %s642
        %v644 = vpop.permute.xlu0 %643
        %s646 = sor.u32 256, 112
        %647 = vbcast.lane.b32.xlu0 %v589, %s646
        %v648 = vpop.permute.xlu0 %647
        %s650 = sor.u32 256, 120
        %651 = vbcast.lane.b32.xlu0 %v589, %s650
        %v652 = vpop.permute.xlu0 %651
        %v653 = vlaneseq
        %v654 = vshrl.u32 %v653, 7
        %v655 = vsub.s32 1, %v654
        %v656 = vrot.slane %v578, %v655
        %658 = vbcast.lane.b32.xlu0 %v656, 256
        %v659 = vpop.permute.xlu0 %658
        %s661 = sor.u32 256, 8
        %662 = vbcast.lane.b32.xlu0 %v656, %s661
        %v663 = vpop.permute.xlu0 %662
        %s665 = sor.u32 256, 16
        %666 = vbcast.lane.b32.xlu0 %v656, %s665
        %v667 = vpop.permute.xlu0 %666
        %s669 = sor.u32 256, 24
        %670 = vbcast.lane.b32.xlu0 %v656, %s669
        %v671 = vpop.permute.xlu0 %670
        %s673 = sor.u32 256, 32
        %674 = vbcast.lane.b32.xlu0 %v656, %s673
        %v675 = vpop.permute.xlu0 %674
        %s677 = sor.u32 256, 40
        %678 = vbcast.lane.b32.xlu0 %v656, %s677
        %v679 = vpop.permute.xlu0 %678
        %s681 = sor.u32 256, 48
        %682 = vbcast.lane.b32.xlu0 %v656, %s681
        %v683 = vpop.permute.xlu0 %682
        %s685 = sor.u32 256, 56
        %686 = vbcast.lane.b32.xlu0 %v656, %s685
        %v687 = vpop.permute.xlu0 %686
        %s689 = sor.u32 256, 64
        %690 = vbcast.lane.b32.xlu0 %v656, %s689
        %v691 = vpop.permute.xlu0 %690
        %s693 = sor.u32 256, 72
        %694 = vbcast.lane.b32.xlu0 %v656, %s693
        %v695 = vpop.permute.xlu0 %694
        %s697 = sor.u32 256, 80
        %698 = vbcast.lane.b32.xlu0 %v656, %s697
        %v699 = vpop.permute.xlu0 %698
        %s701 = sor.u32 256, 88
        %702 = vbcast.lane.b32.xlu0 %v656, %s701
        %v703 = vpop.permute.xlu0 %702
        %s705 = sor.u32 256, 96
        %706 = vbcast.lane.b32.xlu0 %v656, %s705
        %v707 = vpop.permute.xlu0 %706
        %s709 = sor.u32 256, 104
        %710 = vbcast.lane.b32.xlu0 %v656, %s709
        %v711 = vpop.permute.xlu0 %710
        %s713 = sor.u32 256, 112
        %714 = vbcast.lane.b32.xlu0 %v656, %s713
        %v715 = vpop.permute.xlu0 %714
        %s717 = sor.u32 256, 120
        %718 = vbcast.lane.b32.xlu0 %v656, %s717
        %v719 = vpop.permute.xlu0 %718
        %v720 = vlaneseq
        %v721 = vshrl.u32 %v720, 7
        %v722 = vsub.s32 2, %v721
        %v723 = vrot.slane %v578, %v722
        %725 = vbcast.lane.b32.xlu0 %v723, 256
        %v726 = vpop.permute.xlu0 %725
        %s728 = sor.u32 256, 8
        %729 = vbcast.lane.b32.xlu0 %v723, %s728
        %v730 = vpop.permute.xlu0 %729
        %s732 = sor.u32 256, 16
        %733 = vbcast.lane.b32.xlu0 %v723, %s732
        %v734 = vpop.permute.xlu0 %733
        %s736 = sor.u32 256, 24
        %737 = vbcast.lane.b32.xlu0 %v723, %s736
        %v738 = vpop.permute.xlu0 %737
        %s740 = sor.u32 256, 32
        %741 = vbcast.lane.b32.xlu0 %v723, %s740
        %v742 = vpop.permute.xlu0 %741
        %s744 = sor.u32 256, 40
        %745 = vbcast.lane.b32.xlu0 %v723, %s744
        %v746 = vpop.permute.xlu0 %745
        %s748 = sor.u32 256, 48
        %749 = vbcast.lane.b32.xlu0 %v723, %s748
        %v750 = vpop.permute.xlu0 %749
        %s752 = sor.u32 256, 56
        %753 = vbcast.lane.b32.xlu0 %v723, %s752
        %v754 = vpop.permute.xlu0 %753
        %s756 = sor.u32 256, 64
        %757 = vbcast.lane.b32.xlu0 %v723, %s756
        %v758 = vpop.permute.xlu0 %757
        %s760 = sor.u32 256, 72
        %761 = vbcast.lane.b32.xlu0 %v723, %s760
        %v762 = vpop.permute.xlu0 %761
        %s764 = sor.u32 256, 80
        %765 = vbcast.lane.b32.xlu0 %v723, %s764
        %v766 = vpop.permute.xlu0 %765
        %s768 = sor.u32 256, 88
        %769 = vbcast.lane.b32.xlu0 %v723, %s768
        %v770 = vpop.permute.xlu0 %769
        %s772 = sor.u32 256, 96
        %773 = vbcast.lane.b32.xlu0 %v723, %s772
        %v774 = vpop.permute.xlu0 %773
        %s776 = sor.u32 256, 104
        %777 = vbcast.lane.b32.xlu0 %v723, %s776
        %v778 = vpop.permute.xlu0 %777
        %s780 = sor.u32 256, 112
        %781 = vbcast.lane.b32.xlu0 %v723, %s780
        %v782 = vpop.permute.xlu0 %781
        %s784 = sor.u32 256, 120
        %785 = vbcast.lane.b32.xlu0 %v723, %s784
        %v786 = vpop.permute.xlu0 %785
        %v787 = vlaneseq
        %v788 = vshrl.u32 %v787, 7
        %v789 = vsub.s32 3, %v788
        %v790 = vrot.slane %v578, %v789
        %792 = vbcast.lane.b32.xlu0 %v790, 256
        %v793 = vpop.permute.xlu0 %792
        %s795 = sor.u32 256, 8
        %796 = vbcast.lane.b32.xlu0 %v790, %s795
        %v797 = vpop.permute.xlu0 %796
        %s799 = sor.u32 256, 16
        %800 = vbcast.lane.b32.xlu0 %v790, %s799
        %v801 = vpop.permute.xlu0 %800
        %s803 = sor.u32 256, 24
        %804 = vbcast.lane.b32.xlu0 %v790, %s803
        %v805 = vpop.permute.xlu0 %804
        %s807 = sor.u32 256, 32
        %808 = vbcast.lane.b32.xlu0 %v790, %s807
        %v809 = vpop.permute.xlu0 %808
        %s811 = sor.u32 256, 40
        %812 = vbcast.lane.b32.xlu0 %v790, %s811
        %v813 = vpop.permute.xlu0 %812
        %s815 = sor.u32 256, 48
        %816 = vbcast.lane.b32.xlu0 %v790, %s815
        %v817 = vpop.permute.xlu0 %816
        %s819 = sor.u32 256, 56
        %820 = vbcast.lane.b32.xlu0 %v790, %s819
        %v821 = vpop.permute.xlu0 %820
        %s823 = sor.u32 256, 64
        %824 = vbcast.lane.b32.xlu0 %v790, %s823
        %v825 = vpop.permute.xlu0 %824
        %s827 = sor.u32 256, 72
        %828 = vbcast.lane.b32.xlu0 %v790, %s827
        %v829 = vpop.permute.xlu0 %828
        %s831 = sor.u32 256, 80
        %832 = vbcast.lane.b32.xlu0 %v790, %s831
        %v833 = vpop.permute.xlu0 %832
        %s835 = sor.u32 256, 88
        %836 = vbcast.lane.b32.xlu0 %v790, %s835
        %v837 = vpop.permute.xlu0 %836
        %s839 = sor.u32 256, 96
        %840 = vbcast.lane.b32.xlu0 %v790, %s839
        %v841 = vpop.permute.xlu0 %840
        %s843 = sor.u32 256, 104
        %844 = vbcast.lane.b32.xlu0 %v790, %s843
        %v845 = vpop.permute.xlu0 %844
        %s847 = sor.u32 256, 112
        %848 = vbcast.lane.b32.xlu0 %v790, %s847
        %v849 = vpop.permute.xlu0 %848
        %s851 = sor.u32 256, 120
        %852 = vbcast.lane.b32.xlu0 %v790, %s851
        %v853 = vpop.permute.xlu0 %852
        %v854 = vlaneseq
        %v855 = vshrl.u32 %v854, 7
        %v856 = vsub.s32 4, %v855
        %v857 = vrot.slane %v578, %v856
        %859 = vbcast.lane.b32.xlu0 %v857, 256
        %v860 = vpop.permute.xlu0 %859
        %s862 = sor.u32 256, 8
        %863 = vbcast.lane.b32.xlu0 %v857, %s862
        %v864 = vpop.permute.xlu0 %863
        %s866 = sor.u32 256, 16
        %867 = vbcast.lane.b32.xlu0 %v857, %s866
        %v868 = vpop.permute.xlu0 %867
        %s870 = sor.u32 256, 24
        %871 = vbcast.lane.b32.xlu0 %v857, %s870
        %v872 = vpop.permute.xlu0 %871
        %s874 = sor.u32 256, 32
        %875 = vbcast.lane.b32.xlu0 %v857, %s874
        %v876 = vpop.permute.xlu0 %875
        %s878 = sor.u32 256, 40
        %879 = vbcast.lane.b32.xlu0 %v857, %s878
        %v880 = vpop.permute.xlu0 %879
        %s882 = sor.u32 256, 48
        %883 = vbcast.lane.b32.xlu0 %v857, %s882
        %v884 = vpop.permute.xlu0 %883
        %s886 = sor.u32 256, 56
        %887 = vbcast.lane.b32.xlu0 %v857, %s886
        %v888 = vpop.permute.xlu0 %887
        %s890 = sor.u32 256, 64
        %891 = vbcast.lane.b32.xlu0 %v857, %s890
        %v892 = vpop.permute.xlu0 %891
        %s894 = sor.u32 256, 72
        %895 = vbcast.lane.b32.xlu0 %v857, %s894
        %v896 = vpop.permute.xlu0 %895
        %s898 = sor.u32 256, 80
        %899 = vbcast.lane.b32.xlu0 %v857, %s898
        %v900 = vpop.permute.xlu0 %899
        %s902 = sor.u32 256, 88
        %903 = vbcast.lane.b32.xlu0 %v857, %s902
        %v904 = vpop.permute.xlu0 %903
        %s906 = sor.u32 256, 96
        %907 = vbcast.lane.b32.xlu0 %v857, %s906
        %v908 = vpop.permute.xlu0 %907
        %s910 = sor.u32 256, 104
        %911 = vbcast.lane.b32.xlu0 %v857, %s910
        %v912 = vpop.permute.xlu0 %911
        %s914 = sor.u32 256, 112
        %915 = vbcast.lane.b32.xlu0 %v857, %s914
        %v916 = vpop.permute.xlu0 %915
        %s918 = sor.u32 256, 120
        %919 = vbcast.lane.b32.xlu0 %v857, %s918
        %v920 = vpop.permute.xlu0 %919
        %v921 = vlaneseq
        %v922 = vshrl.u32 %v921, 7
        %v923 = vsub.s32 5, %v922
        %v924 = vrot.slane %v578, %v923
        %926 = vbcast.lane.b32.xlu0 %v924, 256
        %v927 = vpop.permute.xlu0 %926
        %s929 = sor.u32 256, 8
        %930 = vbcast.lane.b32.xlu0 %v924, %s929
        %v931 = vpop.permute.xlu0 %930
        %s933 = sor.u32 256, 16
        %934 = vbcast.lane.b32.xlu0 %v924, %s933
        %v935 = vpop.permute.xlu0 %934
        %s937 = sor.u32 256, 24
        %938 = vbcast.lane.b32.xlu0 %v924, %s937
        %v939 = vpop.permute.xlu0 %938
        %s941 = sor.u32 256, 32
        %942 = vbcast.lane.b32.xlu0 %v924, %s941
        %v943 = vpop.permute.xlu0 %942
        %s945 = sor.u32 256, 40
        %946 = vbcast.lane.b32.xlu0 %v924, %s945
        %v947 = vpop.permute.xlu0 %946
        %s949 = sor.u32 256, 48
        %950 = vbcast.lane.b32.xlu0 %v924, %s949
        %v951 = vpop.permute.xlu0 %950
        %s953 = sor.u32 256, 56
        %954 = vbcast.lane.b32.xlu0 %v924, %s953
        %v955 = vpop.permute.xlu0 %954
        %s957 = sor.u32 256, 64
        %958 = vbcast.lane.b32.xlu0 %v924, %s957
        %v959 = vpop.permute.xlu0 %958
        %s961 = sor.u32 256, 72
        %962 = vbcast.lane.b32.xlu0 %v924, %s961
        %v963 = vpop.permute.xlu0 %962
        %s965 = sor.u32 256, 80
        %966 = vbcast.lane.b32.xlu0 %v924, %s965
        %v967 = vpop.permute.xlu0 %966
        %s969 = sor.u32 256, 88
        %970 = vbcast.lane.b32.xlu0 %v924, %s969
        %v971 = vpop.permute.xlu0 %970
        %s973 = sor.u32 256, 96
        %974 = vbcast.lane.b32.xlu0 %v924, %s973
        %v975 = vpop.permute.xlu0 %974
        %s977 = sor.u32 256, 104
        %978 = vbcast.lane.b32.xlu0 %v924, %s977
        %v979 = vpop.permute.xlu0 %978
        %s981 = sor.u32 256, 112
        %982 = vbcast.lane.b32.xlu0 %v924, %s981
        %v983 = vpop.permute.xlu0 %982
        %s985 = sor.u32 256, 120
        %986 = vbcast.lane.b32.xlu0 %v924, %s985
        %v987 = vpop.permute.xlu0 %986
        %v988 = vlaneseq
        %v989 = vshrl.u32 %v988, 7
        %v990 = vsub.s32 6, %v989
        %v991 = vrot.slane %v578, %v990
        %993 = vbcast.lane.b32.xlu0 %v991, 256
        %v994 = vpop.permute.xlu0 %993
        %s996 = sor.u32 256, 8
        %997 = vbcast.lane.b32.xlu0 %v991, %s996
        %v998 = vpop.permute.xlu0 %997
        %s1000 = sor.u32 256, 16
        %1001 = vbcast.lane.b32.xlu0 %v991, %s1000
        %v1002 = vpop.permute.xlu0 %1001
        %s1004 = sor.u32 256, 24
        %1005 = vbcast.lane.b32.xlu0 %v991, %s1004
        %v1006 = vpop.permute.xlu0 %1005
        %s1008 = sor.u32 256, 32
        %1009 = vbcast.lane.b32.xlu0 %v991, %s1008
        %v1010 = vpop.permute.xlu0 %1009
        %s1012 = sor.u32 256, 40
        %1013 = vbcast.lane.b32.xlu0 %v991, %s1012
        %v1014 = vpop.permute.xlu0 %1013
        %s1016 = sor.u32 256, 48
        %1017 = vbcast.lane.b32.xlu0 %v991, %s1016
        %v1018 = vpop.permute.xlu0 %1017
        %s1020 = sor.u32 256, 56
        %1021 = vbcast.lane.b32.xlu0 %v991, %s1020
        %v1022 = vpop.permute.xlu0 %1021
        %s1024 = sor.u32 256, 64
        %1025 = vbcast.lane.b32.xlu0 %v991, %s1024
        %v1026 = vpop.permute.xlu0 %1025
        %s1028 = sor.u32 256, 72
        %1029 = vbcast.lane.b32.xlu0 %v991, %s1028
        %v1030 = vpop.permute.xlu0 %1029
        %s1032 = sor.u32 256, 80
        %1033 = vbcast.lane.b32.xlu0 %v991, %s1032
        %v1034 = vpop.permute.xlu0 %1033
        %s1036 = sor.u32 256, 88
        %1037 = vbcast.lane.b32.xlu0 %v991, %s1036
        %v1038 = vpop.permute.xlu0 %1037
        %s1040 = sor.u32 256, 96
        %1041 = vbcast.lane.b32.xlu0 %v991, %s1040
        %v1042 = vpop.permute.xlu0 %1041
        %s1044 = sor.u32 256, 104
        %1045 = vbcast.lane.b32.xlu0 %v991, %s1044
        %v1046 = vpop.permute.xlu0 %1045
        %s1048 = sor.u32 256, 112
        %1049 = vbcast.lane.b32.xlu0 %v991, %s1048
        %v1050 = vpop.permute.xlu0 %1049
        %s1052 = sor.u32 256, 120
        %1053 = vbcast.lane.b32.xlu0 %v991, %s1052
        %v1054 = vpop.permute.xlu0 %1053
        %v1055 = vlaneseq
        %v1056 = vshrl.u32 %v1055, 7
        %v1057 = vsub.s32 7, %v1056
        %v1058 = vrot.slane %v578, %v1057
        %1060 = vbcast.lane.b32.xlu0 %v1058, 256
        %v1061 = vpop.permute.xlu0 %1060
        %s1063 = sor.u32 256, 8
        %1064 = vbcast.lane.b32.xlu0 %v1058, %s1063
        %v1065 = vpop.permute.xlu0 %1064
        %s1067 = sor.u32 256, 16
        %1068 = vbcast.lane.b32.xlu0 %v1058, %s1067
        %v1069 = vpop.permute.xlu0 %1068
        %s1071 = sor.u32 256, 24
        %1072 = vbcast.lane.b32.xlu0 %v1058, %s1071
        %v1073 = vpop.permute.xlu0 %1072
        %s1075 = sor.u32 256, 32
        %1076 = vbcast.lane.b32.xlu0 %v1058, %s1075
        %v1077 = vpop.permute.xlu0 %1076
        %s1079 = sor.u32 256, 40
        %1080 = vbcast.lane.b32.xlu0 %v1058, %s1079
        %v1081 = vpop.permute.xlu0 %1080
        %s1083 = sor.u32 256, 48
        %1084 = vbcast.lane.b32.xlu0 %v1058, %s1083
        %v1085 = vpop.permute.xlu0 %1084
        %s1087 = sor.u32 256, 56
        %1088 = vbcast.lane.b32.xlu0 %v1058, %s1087
        %v1089 = vpop.permute.xlu0 %1088
        %s1091 = sor.u32 256, 64
        %1092 = vbcast.lane.b32.xlu0 %v1058, %s1091
        %v1093 = vpop.permute.xlu0 %1092
        %s1095 = sor.u32 256, 72
        %1096 = vbcast.lane.b32.xlu0 %v1058, %s1095
        %v1097 = vpop.permute.xlu0 %1096
        %s1099 = sor.u32 256, 80
        %1100 = vbcast.lane.b32.xlu0 %v1058, %s1099
        %v1101 = vpop.permute.xlu0 %1100
        %s1103 = sor.u32 256, 88
        %1104 = vbcast.lane.b32.xlu0 %v1058, %s1103
        %v1105 = vpop.permute.xlu0 %1104
        %s1107 = sor.u32 256, 96
        %1108 = vbcast.lane.b32.xlu0 %v1058, %s1107
        %v1109 = vpop.permute.xlu0 %1108
        %s1111 = sor.u32 256, 104
        %1112 = vbcast.lane.b32.xlu0 %v1058, %s1111
        %v1113 = vpop.permute.xlu0 %1112
        %s1115 = sor.u32 256, 112
        %1116 = vbcast.lane.b32.xlu0 %v1058, %s1115
        %v1117 = vpop.permute.xlu0 %1116
        %s1119 = sor.u32 256, 120
        %1120 = vbcast.lane.b32.xlu0 %v1058, %s1119
        %v1121 = vpop.permute.xlu0 %1120
        %v1123 = vcombine.high %v584, %v584
        %v1125 = vunpack.c.l.s4 1966171168
        %v1126 = vunpack.c.0.s8 %v1125
        %v1127 = vlaneseq
        %v1128 = vshrl.u32 %v1127, 7
        %v1129 = vsub.s32 %v1126, %v1128
        %v1130 = vrot.slane %v584, %v1129
        %v1132 = vunpack.c.l.s4 1966171168
        %v1133 = vunpack.c.0.s8 %v1132
        %v1134 = vlaneseq
        %v1135 = vshrl.u32 %v1134, 7
        %v1136 = vsub.s32 %v1133, %v1135
        %v1137 = vrot.slane %v1123, %v1136
        %v1138 = vcombine.high %v1130, %v1130
        %v1139 = vcombine.high %v1137, %v1137
        %v1141 = vunpack.c.l.s4 1966171168
        %v1142 = vunpack.c.0.s8 %v1141
        %v1143 = vlaneseq
        %v1144 = vshrl.u32 %v1143, 7
        %v1145 = vsub.s32 %v1142, %v1144
        %v1146 = vrot.slane %v1130, %v1145
        %v1148 = vunpack.c.l.s4 1966171168
        %v1149 = vunpack.c.0.s8 %v1148
        %v1150 = vlaneseq
        %v1151 = vshrl.u32 %v1150, 7
        %v1152 = vsub.s32 %v1149, %v1151
        %v1153 = vrot.slane %v1137, %v1152
        %v1155 = vunpack.c.l.s4 1966171168
        %v1156 = vunpack.c.0.s8 %v1155
        %v1157 = vlaneseq
        %v1158 = vshrl.u32 %v1157, 7
        %v1159 = vsub.s32 %v1156, %v1158
        %v1160 = vrot.slane %v1138, %v1159
        %v1162 = vunpack.c.l.s4 1966171168
        %v1163 = vunpack.c.0.s8 %v1162
        %v1164 = vlaneseq
        %v1165 = vshrl.u32 %v1164, 7
        %v1166 = vsub.s32 %v1163, %v1165
        %v1167 = vrot.slane %v1139, %v1166
        %v1168 = vcombine.high %v1146, %v1146
        %v1169 = vcombine.high %v1153, %v1153
        %v1170 = vcombine.high %v1160, %v1160
        %v1171 = vcombine.high %v1167, %v1167
        %v1172 = vlaneseq
        %v1173 = vshrl.u32 %v1172, 7
        %v1174 = vsub.s32 0, %v1173
        %v1175 = vrot.slane %v1146, %v1174
        %v1176 = vlaneseq
        %v1177 = vshrl.u32 %v1176, 7
        %v1178 = vsub.s32 0, %v1177
        %v1179 = vrot.slane %v1160, %v1178
        %v1180 = vlaneseq
        %v1181 = vshrl.u32 %v1180, 7
        %v1182 = vsub.s32 0, %v1181
        %v1183 = vrot.slane %v1168, %v1182
        %v1184 = vlaneseq
        %v1185 = vshrl.u32 %v1184, 7
        %v1186 = vsub.s32 0, %v1185
        %v1187 = vrot.slane %v1170, %v1186
        %v1188 = vlaneseq
        %v1189 = vshrl.u32 %v1188, 7
        %v1190 = vsub.s32 0, %v1189
        %v1191 = vrot.slane %v1153, %v1190
        %v1192 = vlaneseq
        %v1193 = vshrl.u32 %v1192, 7
        %v1194 = vsub.s32 0, %v1193
        %v1195 = vrot.slane %v1167, %v1194
        %v1196 = vlaneseq
        %v1197 = vshrl.u32 %v1196, 7
        %v1198 = vsub.s32 0, %v1197
        %v1199 = vrot.slane %v1169, %v1198
        %v1200 = vlaneseq
        %v1201 = vshrl.u32 %v1200, 7
        %v1202 = vsub.s32 0, %v1201
        %v1203 = vrot.slane %v1171, %v1202
        %v1212 = vmul.f32 %v592, %v1175
        %v1213 = vmul.f32 %v596, %v1175
        %v1214 = vmul.f32 %v600, %v1175
        %v1215 = vmul.f32 %v604, %v1175
        %v1216 = vmul.f32 %v608, %v1175
        %v1217 = vmul.f32 %v612, %v1175
        %v1218 = vmul.f32 %v616, %v1175
        %v1219 = vmul.f32 %v620, %v1175
        %v1220 = vmul.f32 %v624, %v1175
        %v1221 = vmul.f32 %v628, %v1175
        %v1222 = vmul.f32 %v632, %v1175
        %v1223 = vmul.f32 %v636, %v1175
        %v1224 = vmul.f32 %v640, %v1175
        %v1225 = vmul.f32 %v644, %v1175
        %v1226 = vmul.f32 %v648, %v1175
        %v1227 = vmul.f32 %v652, %v1175
        %v1228 = vmul.f32 %v659, %v1179
        %v1229 = vmul.f32 %v663, %v1179
        %v1230 = vmul.f32 %v667, %v1179
        %v1231 = vmul.f32 %v671, %v1179
        %v1232 = vmul.f32 %v675, %v1179
        %v1233 = vmul.f32 %v679, %v1179
        %v1234 = vmul.f32 %v683, %v1179
        %v1235 = vmul.f32 %v687, %v1179
        %v1236 = vmul.f32 %v691, %v1179
        %v1237 = vmul.f32 %v695, %v1179
        %v1238 = vmul.f32 %v699, %v1179
        %v1239 = vmul.f32 %v703, %v1179
        %v1240 = vmul.f32 %v707, %v1179
        %v1241 = vmul.f32 %v711, %v1179
        %v1242 = vmul.f32 %v715, %v1179
        %v1243 = vmul.f32 %v719, %v1179
        %v1244 = vmul.f32 %v726, %v1183
        %v1245 = vmul.f32 %v730, %v1183
        %v1246 = vmul.f32 %v734, %v1183
        %v1247 = vmul.f32 %v738, %v1183
        %v1248 = vmul.f32 %v742, %v1183
        %v1249 = vmul.f32 %v746, %v1183
        %v1250 = vmul.f32 %v750, %v1183
        %v1251 = vmul.f32 %v754, %v1183
        %v1252 = vmul.f32 %v758, %v1183
        %v1253 = vmul.f32 %v762, %v1183
        %v1254 = vmul.f32 %v766, %v1183
        %v1255 = vmul.f32 %v770, %v1183
        %v1256 = vmul.f32 %v774, %v1183
        %v1257 = vmul.f32 %v778, %v1183
        %v1258 = vmul.f32 %v782, %v1183
        %v1259 = vmul.f32 %v786, %v1183
        %v1260 = vmul.f32 %v793, %v1187
        %v1261 = vmul.f32 %v797, %v1187
        %v1262 = vmul.f32 %v801, %v1187
        %v1263 = vmul.f32 %v805, %v1187
        %v1264 = vmul.f32 %v809, %v1187
        %v1265 = vmul.f32 %v813, %v1187
        %v1266 = vmul.f32 %v817, %v1187
        %v1267 = vmul.f32 %v821, %v1187
        %v1268 = vmul.f32 %v825, %v1187
        %v1269 = vmul.f32 %v829, %v1187
        %v1270 = vmul.f32 %v833, %v1187
        %v1271 = vmul.f32 %v837, %v1187
        %v1272 = vmul.f32 %v841, %v1187
        %v1273 = vmul.f32 %v845, %v1187
        %v1274 = vmul.f32 %v849, %v1187
        %v1275 = vmul.f32 %v853, %v1187
        %v1276 = vmul.f32 %v860, %v1191
        %v1277 = vmul.f32 %v864, %v1191
        %v1278 = vmul.f32 %v868, %v1191
        %v1279 = vmul.f32 %v872, %v1191
        %v1280 = vmul.f32 %v876, %v1191
        %v1281 = vmul.f32 %v880, %v1191
        %v1282 = vmul.f32 %v884, %v1191
        %v1283 = vmul.f32 %v888, %v1191
        %v1284 = vmul.f32 %v892, %v1191
        %v1285 = vmul.f32 %v896, %v1191
        %v1286 = vmul.f32 %v900, %v1191
        %v1287 = vmul.f32 %v904, %v1191
        %v1288 = vmul.f32 %v908, %v1191
        %v1289 = vmul.f32 %v912, %v1191
        %v1290 = vmul.f32 %v916, %v1191
        %v1291 = vmul.f32 %v920, %v1191
        %v1292 = vmul.f32 %v927, %v1195
        %v1293 = vmul.f32 %v931, %v1195
        %v1294 = vmul.f32 %v935, %v1195
        %v1295 = vmul.f32 %v939, %v1195
        %v1296 = vmul.f32 %v943, %v1195
        %v1297 = vmul.f32 %v947, %v1195
        %v1298 = vmul.f32 %v951, %v1195
        %v1299 = vmul.f32 %v955, %v1195
        %v1300 = vmul.f32 %v959, %v1195
        %v1301 = vmul.f32 %v963, %v1195
        %v1302 = vmul.f32 %v967, %v1195
        %v1303 = vmul.f32 %v971, %v1195
        %v1304 = vmul.f32 %v975, %v1195
        %v1305 = vmul.f32 %v979, %v1195
        %v1306 = vmul.f32 %v983, %v1195
        %v1307 = vmul.f32 %v987, %v1195
        %v1308 = vmul.f32 %v994, %v1199
        %v1309 = vmul.f32 %v998, %v1199
        %v1310 = vmul.f32 %v1002, %v1199
        %v1311 = vmul.f32 %v1006, %v1199
        %v1312 = vmul.f32 %v1010, %v1199
        %v1313 = vmul.f32 %v1014, %v1199
        %v1314 = vmul.f32 %v1018, %v1199
        %v1315 = vmul.f32 %v1022, %v1199
        %v1316 = vmul.f32 %v1026, %v1199
        %v1317 = vmul.f32 %v1030, %v1199
        %v1318 = vmul.f32 %v1034, %v1199
        %v1319 = vmul.f32 %v1038, %v1199
        %v1320 = vmul.f32 %v1042, %v1199
        %v1321 = vmul.f32 %v1046, %v1199
        %v1322 = vmul.f32 %v1050, %v1199
        %v1323 = vmul.f32 %v1054, %v1199
        %v1324 = vmul.f32 %v1061, %v1203
        %v1325 = vmul.f32 %v1065, %v1203
        %v1326 = vmul.f32 %v1069, %v1203
        %v1327 = vmul.f32 %v1073, %v1203
        %v1328 = vmul.f32 %v1077, %v1203
        %v1329 = vmul.f32 %v1081, %v1203
        %v1330 = vmul.f32 %v1085, %v1203
        %v1331 = vmul.f32 %v1089, %v1203
        %v1332 = vmul.f32 %v1093, %v1203
        %v1333 = vmul.f32 %v1097, %v1203
        %v1334 = vmul.f32 %v1101, %v1203
        %v1335 = vmul.f32 %v1105, %v1203
        %v1336 = vmul.f32 %v1109, %v1203
        %v1337 = vmul.f32 %v1113, %v1203
        %v1338 = vmul.f32 %v1117, %v1203
        %v1339 = vmul.f32 %v1121, %v1203
        %v1340 = vmul.f32 %v1212, 1.442695
        %v1341 = vpow.pop %v1340
        %v1342 = vmul.f32 %v1213, 1.442695
        %v1343 = vpow.pop %v1342
        %v1344 = vmul.f32 %v1214, 1.442695
        %v1345 = vpow.pop %v1344
        %v1346 = vmul.f32 %v1215, 1.442695
        %v1347 = vpow.pop %v1346
        %v1348 = vmul.f32 %v1216, 1.442695
        %v1349 = vpow.pop %v1348
        %v1350 = vmul.f32 %v1217, 1.442695
        %v1351 = vpow.pop %v1350
        %v1352 = vmul.f32 %v1218, 1.442695
        %v1353 = vpow.pop %v1352
        %v1354 = vmul.f32 %v1219, 1.442695
        %v1355 = vpow.pop %v1354
        %v1356 = vmul.f32 %v1220, 1.442695
        %v1357 = vpow.pop %v1356
        %v1358 = vmul.f32 %v1221, 1.442695
        %v1359 = vpow.pop %v1358
        %v1360 = vmul.f32 %v1222, 1.442695
        %v1361 = vpow.pop %v1360
        %v1362 = vmul.f32 %v1223, 1.442695
        %v1363 = vpow.pop %v1362
        %v1364 = vmul.f32 %v1224, 1.442695
        %v1365 = vpow.pop %v1364
        %v1366 = vmul.f32 %v1225, 1.442695
        %v1367 = vpow.pop %v1366
        %v1368 = vmul.f32 %v1226, 1.442695
        %v1369 = vpow.pop %v1368
        %v1370 = vmul.f32 %v1227, 1.442695
        %v1371 = vpow.pop %v1370
        %v1372 = vmul.f32 %v1228, 1.442695
        %v1373 = vpow.pop %v1372
        %v1374 = vmul.f32 %v1229, 1.442695
        %v1375 = vpow.pop %v1374
        %v1376 = vmul.f32 %v1230, 1.442695
        %v1377 = vpow.pop %v1376
        %v1378 = vmul.f32 %v1231, 1.442695
        %v1379 = vpow.pop %v1378
        %v1380 = vmul.f32 %v1232, 1.442695
        %v1381 = vpow.pop %v1380
        %v1382 = vmul.f32 %v1233, 1.442695
        %v1383 = vpow.pop %v1382
        %v1384 = vmul.f32 %v1234, 1.442695
        %v1385 = vpow.pop %v1384
        %v1386 = vmul.f32 %v1235, 1.442695
        %v1387 = vpow.pop %v1386
        %v1388 = vmul.f32 %v1236, 1.442695
        %v1389 = vpow.pop %v1388
        %v1390 = vmul.f32 %v1237, 1.442695
        %v1391 = vpow.pop %v1390
        %v1392 = vmul.f32 %v1238, 1.442695
        %v1393 = vpow.pop %v1392
        %v1394 = vmul.f32 %v1239, 1.442695
        %v1395 = vpow.pop %v1394
        %v1396 = vmul.f32 %v1240, 1.442695
        %v1397 = vpow.pop %v1396
        %v1398 = vmul.f32 %v1241, 1.442695
        %v1399 = vpow.pop %v1398
        %v1400 = vmul.f32 %v1242, 1.442695
        %v1401 = vpow.pop %v1400
        %v1402 = vmul.f32 %v1243, 1.442695
        %v1403 = vpow.pop %v1402
        %v1404 = vmul.f32 %v1244, 1.442695
        %v1405 = vpow.pop %v1404
        %v1406 = vmul.f32 %v1245, 1.442695
        %v1407 = vpow.pop %v1406
        %v1408 = vmul.f32 %v1246, 1.442695
        %v1409 = vpow.pop %v1408
        %v1410 = vmul.f32 %v1247, 1.442695
        %v1411 = vpow.pop %v1410
        %v1412 = vmul.f32 %v1248, 1.442695
        %v1413 = vpow.pop %v1412
        %v1414 = vmul.f32 %v1249, 1.442695
        %v1415 = vpow.pop %v1414
        %v1416 = vmul.f32 %v1250, 1.442695
        %v1417 = vpow.pop %v1416
        %v1418 = vmul.f32 %v1251, 1.442695
        %v1419 = vpow.pop %v1418
        %v1420 = vmul.f32 %v1252, 1.442695
        %v1421 = vpow.pop %v1420
        %v1422 = vmul.f32 %v1253, 1.442695
        %v1423 = vpow.pop %v1422
        %v1424 = vmul.f32 %v1254, 1.442695
        %v1425 = vpow.pop %v1424
        %v1426 = vmul.f32 %v1255, 1.442695
        %v1427 = vpow.pop %v1426
        %v1428 = vmul.f32 %v1256, 1.442695
        %v1429 = vpow.pop %v1428
        %v1430 = vmul.f32 %v1257, 1.442695
        %v1431 = vpow.pop %v1430
        %v1432 = vmul.f32 %v1258, 1.442695
        %v1433 = vpow.pop %v1432
        %v1434 = vmul.f32 %v1259, 1.442695
        %v1435 = vpow.pop %v1434
        %v1436 = vmul.f32 %v1260, 1.442695
        %v1437 = vpow.pop %v1436
        %v1438 = vmul.f32 %v1261, 1.442695
        %v1439 = vpow.pop %v1438
        %v1440 = vmul.f32 %v1262, 1.442695
        %v1441 = vpow.pop %v1440
        %v1442 = vmul.f32 %v1263, 1.442695
        %v1443 = vpow.pop %v1442
        %v1444 = vmul.f32 %v1264, 1.442695
        %v1445 = vpow.pop %v1444
        %v1446 = vmul.f32 %v1265, 1.442695
        %v1447 = vpow.pop %v1446
        %v1448 = vmul.f32 %v1266, 1.442695
        %v1449 = vpow.pop %v1448
        %v1450 = vmul.f32 %v1267, 1.442695
        %v1451 = vpow.pop %v1450
        %v1452 = vmul.f32 %v1268, 1.442695
        %v1453 = vpow.pop %v1452
        %v1454 = vmul.f32 %v1269, 1.442695
        %v1455 = vpow.pop %v1454
        %v1456 = vmul.f32 %v1270, 1.442695
        %v1457 = vpow.pop %v1456
        %v1458 = vmul.f32 %v1271, 1.442695
        %v1459 = vpow.pop %v1458
        %v1460 = vmul.f32 %v1272, 1.442695
        %v1461 = vpow.pop %v1460
        %v1462 = vmul.f32 %v1273, 1.442695
        %v1463 = vpow.pop %v1462
        %v1464 = vmul.f32 %v1274, 1.442695
        %v1465 = vpow.pop %v1464
        %v1466 = vmul.f32 %v1275, 1.442695
        %v1467 = vpow.pop %v1466
        %v1468 = vmul.f32 %v1276, 1.442695
        %v1469 = vpow.pop %v1468
        %v1470 = vmul.f32 %v1277, 1.442695
        %v1471 = vpow.pop %v1470
        %v1472 = vmul.f32 %v1278, 1.442695
        %v1473 = vpow.pop %v1472
        %v1474 = vmul.f32 %v1279, 1.442695
        %v1475 = vpow.pop %v1474
        %v1476 = vmul.f32 %v1280, 1.442695
        %v1477 = vpow.pop %v1476
        %v1478 = vmul.f32 %v1281, 1.442695
        %v1479 = vpow.pop %v1478
        %v1480 = vmul.f32 %v1282, 1.442695
        %v1481 = vpow.pop %v1480
        %v1482 = vmul.f32 %v1283, 1.442695
        %v1483 = vpow.pop %v1482
        %v1484 = vmul.f32 %v1284, 1.442695
        %v1485 = vpow.pop %v1484
        %v1486 = vmul.f32 %v1285, 1.442695
        %v1487 = vpow.pop %v1486
        %v1488 = vmul.f32 %v1286, 1.442695
        %v1489 = vpow.pop %v1488
        %v1490 = vmul.f32 %v1287, 1.442695
        %v1491 = vpow.pop %v1490
        %v1492 = vmul.f32 %v1288, 1.442695
        %v1493 = vpow.pop %v1492
        %v1494 = vmul.f32 %v1289, 1.442695
        %v1495 = vpow.pop %v1494
        %v1496 = vmul.f32 %v1290, 1.442695
        %v1497 = vpow.pop %v1496
        %v1498 = vmul.f32 %v1291, 1.442695
        %v1499 = vpow.pop %v1498
        %v1500 = vmul.f32 %v1292, 1.442695
        %v1501 = vpow.pop %v1500
        %v1502 = vmul.f32 %v1293, 1.442695
        %v1503 = vpow.pop %v1502
        %v1504 = vmul.f32 %v1294, 1.442695
        %v1505 = vpow.pop %v1504
        %v1506 = vmul.f32 %v1295, 1.442695
        %v1507 = vpow.pop %v1506
        %v1508 = vmul.f32 %v1296, 1.442695
        %v1509 = vpow.pop %v1508
        %v1510 = vmul.f32 %v1297, 1.442695
        %v1511 = vpow.pop %v1510
        %v1512 = vmul.f32 %v1298, 1.442695
        %v1513 = vpow.pop %v1512
        %v1514 = vmul.f32 %v1299, 1.442695
        %v1515 = vpow.pop %v1514
        %v1516 = vmul.f32 %v1300, 1.442695
        %v1517 = vpow.pop %v1516
        %v1518 = vmul.f32 %v1301, 1.442695
        %v1519 = vpow.pop %v1518
        %v1520 = vmul.f32 %v1302, 1.442695
        %v1521 = vpow.pop %v1520
        %v1522 = vmul.f32 %v1303, 1.442695
        %v1523 = vpow.pop %v1522
        %v1524 = vmul.f32 %v1304, 1.442695
        %v1525 = vpow.pop %v1524
        %v1526 = vmul.f32 %v1305, 1.442695
        %v1527 = vpow.pop %v1526
        %v1528 = vmul.f32 %v1306, 1.442695
        %v1529 = vpow.pop %v1528
        %v1530 = vmul.f32 %v1307, 1.442695
        %v1531 = vpow.pop %v1530
        %v1532 = vmul.f32 %v1308, 1.442695
        %v1533 = vpow.pop %v1532
        %v1534 = vmul.f32 %v1309, 1.442695
        %v1535 = vpow.pop %v1534
        %v1536 = vmul.f32 %v1310, 1.442695
        %v1537 = vpow.pop %v1536
        %v1538 = vmul.f32 %v1311, 1.442695
        %v1539 = vpow.pop %v1538
        %v1540 = vmul.f32 %v1312, 1.442695
        %v1541 = vpow.pop %v1540
        %v1542 = vmul.f32 %v1313, 1.442695
        %v1543 = vpow.pop %v1542
        %v1544 = vmul.f32 %v1314, 1.442695
        %v1545 = vpow.pop %v1544
        %v1546 = vmul.f32 %v1315, 1.442695
        %v1547 = vpow.pop %v1546
        %v1548 = vmul.f32 %v1316, 1.442695
        %v1549 = vpow.pop %v1548
        %v1550 = vmul.f32 %v1317, 1.442695
        %v1551 = vpow.pop %v1550
        %v1552 = vmul.f32 %v1318, 1.442695
        %v1553 = vpow.pop %v1552
        %v1554 = vmul.f32 %v1319, 1.442695
        %v1555 = vpow.pop %v1554
        %v1556 = vmul.f32 %v1320, 1.442695
        %v1557 = vpow.pop %v1556
        %v1558 = vmul.f32 %v1321, 1.442695
        %v1559 = vpow.pop %v1558
        %v1560 = vmul.f32 %v1322, 1.442695
        %v1561 = vpow.pop %v1560
        %v1562 = vmul.f32 %v1323, 1.442695
        %v1563 = vpow.pop %v1562
        %v1564 = vmul.f32 %v1324, 1.442695
        %v1565 = vpow.pop %v1564
        %v1566 = vmul.f32 %v1325, 1.442695
        %v1567 = vpow.pop %v1566
        %v1568 = vmul.f32 %v1326, 1.442695
        %v1569 = vpow.pop %v1568
        %v1570 = vmul.f32 %v1327, 1.442695
        %v1571 = vpow.pop %v1570
        %v1572 = vmul.f32 %v1328, 1.442695
        %v1573 = vpow.pop %v1572
        %v1574 = vmul.f32 %v1329, 1.442695
        %v1575 = vpow.pop %v1574
        %v1576 = vmul.f32 %v1330, 1.442695
        %v1577 = vpow.pop %v1576
        %v1578 = vmul.f32 %v1331, 1.442695
        %v1579 = vpow.pop %v1578
        %v1580 = vmul.f32 %v1332, 1.442695
        %v1581 = vpow.pop %v1580
        %v1582 = vmul.f32 %v1333, 1.442695
        %v1583 = vpow.pop %v1582
        %v1584 = vmul.f32 %v1334, 1.442695
        %v1585 = vpow.pop %v1584
        %v1586 = vmul.f32 %v1335, 1.442695
        %v1587 = vpow.pop %v1586
        %v1588 = vmul.f32 %v1336, 1.442695
        %v1589 = vpow.pop %v1588
        %v1590 = vmul.f32 %v1337, 1.442695
        %v1591 = vpow.pop %v1590
        %v1592 = vmul.f32 %v1338, 1.442695
        %v1593 = vpow.pop %v1592
        %v1594 = vmul.f32 %v1339, 1.442695
        %v1595 = vpow.pop %v1594
        %1596 = vadd.xlane.f32.xlu0 %v1341
        %v1597 = vpop.xlane.xlu0 %1596
        %1598 = vadd.xlane.f32.xlu0 %v1343
        %v1599 = vpop.xlane.xlu0 %1598
        %1600 = vadd.xlane.f32.xlu0 %v1345
        %v1601 = vpop.xlane.xlu0 %1600
        %1602 = vadd.xlane.f32.xlu0 %v1347
        %v1603 = vpop.xlane.xlu0 %1602
        %1604 = vadd.xlane.f32.xlu0 %v1349
        %v1605 = vpop.xlane.xlu0 %1604
        %1606 = vadd.xlane.f32.xlu0 %v1351
        %v1607 = vpop.xlane.xlu0 %1606
        %1608 = vadd.xlane.f32.xlu0 %v1353
        %v1609 = vpop.xlane.xlu0 %1608
        %1610 = vadd.xlane.f32.xlu0 %v1355
        %v1611 = vpop.xlane.xlu0 %1610
        %1612 = vadd.xlane.f32.xlu0 %v1357
        %v1613 = vpop.xlane.xlu0 %1612
        %1614 = vadd.xlane.f32.xlu0 %v1359
        %v1615 = vpop.xlane.xlu0 %1614
        %1616 = vadd.xlane.f32.xlu0 %v1361
        %v1617 = vpop.xlane.xlu0 %1616
        %1618 = vadd.xlane.f32.xlu0 %v1363
        %v1619 = vpop.xlane.xlu0 %1618
        %1620 = vadd.xlane.f32.xlu0 %v1365
        %v1621 = vpop.xlane.xlu0 %1620
        %1622 = vadd.xlane.f32.xlu0 %v1367
        %v1623 = vpop.xlane.xlu0 %1622
        %1624 = vadd.xlane.f32.xlu0 %v1369
        %v1625 = vpop.xlane.xlu0 %1624
        %1626 = vadd.xlane.f32.xlu0 %v1371
        %v1627 = vpop.xlane.xlu0 %1626
        %1628 = vadd.xlane.f32.xlu0 %v1373
        %v1629 = vpop.xlane.xlu0 %1628
        %1630 = vadd.xlane.f32.xlu0 %v1375
        %v1631 = vpop.xlane.xlu0 %1630
        %1632 = vadd.xlane.f32.xlu0 %v1377
        %v1633 = vpop.xlane.xlu0 %1632
        %1634 = vadd.xlane.f32.xlu0 %v1379
        %v1635 = vpop.xlane.xlu0 %1634
        %1636 = vadd.xlane.f32.xlu0 %v1381
        %v1637 = vpop.xlane.xlu0 %1636
        %1638 = vadd.xlane.f32.xlu0 %v1383
        %v1639 = vpop.xlane.xlu0 %1638
        %1640 = vadd.xlane.f32.xlu0 %v1385
        %v1641 = vpop.xlane.xlu0 %1640
        %1642 = vadd.xlane.f32.xlu0 %v1387
        %v1643 = vpop.xlane.xlu0 %1642
        %1644 = vadd.xlane.f32.xlu0 %v1389
        %v1645 = vpop.xlane.xlu0 %1644
        %1646 = vadd.xlane.f32.xlu0 %v1391
        %v1647 = vpop.xlane.xlu0 %1646
        %1648 = vadd.xlane.f32.xlu0 %v1393
        %v1649 = vpop.xlane.xlu0 %1648
        %1650 = vadd.xlane.f32.xlu0 %v1395
        %v1651 = vpop.xlane.xlu0 %1650
        %1652 = vadd.xlane.f32.xlu0 %v1397
        %v1653 = vpop.xlane.xlu0 %1652
        %1654 = vadd.xlane.f32.xlu0 %v1399
        %v1655 = vpop.xlane.xlu0 %1654
        %1656 = vadd.xlane.f32.xlu0 %v1401
        %v1657 = vpop.xlane.xlu0 %1656
        %1658 = vadd.xlane.f32.xlu0 %v1403
        %v1659 = vpop.xlane.xlu0 %1658
        %1660 = vadd.xlane.f32.xlu0 %v1405
        %v1661 = vpop.xlane.xlu0 %1660
        %1662 = vadd.xlane.f32.xlu0 %v1407
        %v1663 = vpop.xlane.xlu0 %1662
        %1664 = vadd.xlane.f32.xlu0 %v1409
        %v1665 = vpop.xlane.xlu0 %1664
        %1666 = vadd.xlane.f32.xlu0 %v1411
        %v1667 = vpop.xlane.xlu0 %1666
        %1668 = vadd.xlane.f32.xlu0 %v1413
        %v1669 = vpop.xlane.xlu0 %1668
        %1670 = vadd.xlane.f32.xlu0 %v1415
        %v1671 = vpop.xlane.xlu0 %1670
        %1672 = vadd.xlane.f32.xlu0 %v1417
        %v1673 = vpop.xlane.xlu0 %1672
        %1674 = vadd.xlane.f32.xlu0 %v1419
        %v1675 = vpop.xlane.xlu0 %1674
        %1676 = vadd.xlane.f32.xlu0 %v1421
        %v1677 = vpop.xlane.xlu0 %1676
        %1678 = vadd.xlane.f32.xlu0 %v1423
        %v1679 = vpop.xlane.xlu0 %1678
        %1680 = vadd.xlane.f32.xlu0 %v1425
        %v1681 = vpop.xlane.xlu0 %1680
        %1682 = vadd.xlane.f32.xlu0 %v1427
        %v1683 = vpop.xlane.xlu0 %1682
        %1684 = vadd.xlane.f32.xlu0 %v1429
        %v1685 = vpop.xlane.xlu0 %1684
        %1686 = vadd.xlane.f32.xlu0 %v1431
        %v1687 = vpop.xlane.xlu0 %1686
        %1688 = vadd.xlane.f32.xlu0 %v1433
        %v1689 = vpop.xlane.xlu0 %1688
        %1690 = vadd.xlane.f32.xlu0 %v1435
        %v1691 = vpop.xlane.xlu0 %1690
        %1692 = vadd.xlane.f32.xlu0 %v1437
        %v1693 = vpop.xlane.xlu0 %1692
        %1694 = vadd.xlane.f32.xlu0 %v1439
        %v1695 = vpop.xlane.xlu0 %1694
        %1696 = vadd.xlane.f32.xlu0 %v1441
        %v1697 = vpop.xlane.xlu0 %1696
        %1698 = vadd.xlane.f32.xlu0 %v1443
        %v1699 = vpop.xlane.xlu0 %1698
        %1700 = vadd.xlane.f32.xlu0 %v1445
        %v1701 = vpop.xlane.xlu0 %1700
        %1702 = vadd.xlane.f32.xlu0 %v1447
        %v1703 = vpop.xlane.xlu0 %1702
        %1704 = vadd.xlane.f32.xlu0 %v1449
        %v1705 = vpop.xlane.xlu0 %1704
        %1706 = vadd.xlane.f32.xlu0 %v1451
        %v1707 = vpop.xlane.xlu0 %1706
        %1708 = vadd.xlane.f32.xlu0 %v1453
        %v1709 = vpop.xlane.xlu0 %1708
        %1710 = vadd.xlane.f32.xlu0 %v1455
        %v1711 = vpop.xlane.xlu0 %1710
        %1712 = vadd.xlane.f32.xlu0 %v1457
        %v1713 = vpop.xlane.xlu0 %1712
        %1714 = vadd.xlane.f32.xlu0 %v1459
        %v1715 = vpop.xlane.xlu0 %1714
        %1716 = vadd.xlane.f32.xlu0 %v1461
        %v1717 = vpop.xlane.xlu0 %1716
        %1718 = vadd.xlane.f32.xlu0 %v1463
        %v1719 = vpop.xlane.xlu0 %1718
        %1720 = vadd.xlane.f32.xlu0 %v1465
        %v1721 = vpop.xlane.xlu0 %1720
        %1722 = vadd.xlane.f32.xlu0 %v1467
        %v1723 = vpop.xlane.xlu0 %1722
        %1724 = vadd.xlane.f32.xlu0 %v1469
        %v1725 = vpop.xlane.xlu0 %1724
        %1726 = vadd.xlane.f32.xlu0 %v1471
        %v1727 = vpop.xlane.xlu0 %1726
        %1728 = vadd.xlane.f32.xlu0 %v1473
        %v1729 = vpop.xlane.xlu0 %1728
        %1730 = vadd.xlane.f32.xlu0 %v1475
        %v1731 = vpop.xlane.xlu0 %1730
        %1732 = vadd.xlane.f32.xlu0 %v1477
        %v1733 = vpop.xlane.xlu0 %1732
        %1734 = vadd.xlane.f32.xlu0 %v1479
        %v1735 = vpop.xlane.xlu0 %1734
        %1736 = vadd.xlane.f32.xlu0 %v1481
        %v1737 = vpop.xlane.xlu0 %1736
        %1738 = vadd.xlane.f32.xlu0 %v1483
        %v1739 = vpop.xlane.xlu0 %1738
        %1740 = vadd.xlane.f32.xlu0 %v1485
        %v1741 = vpop.xlane.xlu0 %1740
        %1742 = vadd.xlane.f32.xlu0 %v1487
        %v1743 = vpop.xlane.xlu0 %1742
        %1744 = vadd.xlane.f32.xlu0 %v1489
        %v1745 = vpop.xlane.xlu0 %1744
        %1746 = vadd.xlane.f32.xlu0 %v1491
        %v1747 = vpop.xlane.xlu0 %1746
        %1748 = vadd.xlane.f32.xlu0 %v1493
        %v1749 = vpop.xlane.xlu0 %1748
        %1750 = vadd.xlane.f32.xlu0 %v1495
        %v1751 = vpop.xlane.xlu0 %1750
        %1752 = vadd.xlane.f32.xlu0 %v1497
        %v1753 = vpop.xlane.xlu0 %1752
        %1754 = vadd.xlane.f32.xlu0 %v1499
        %v1755 = vpop.xlane.xlu0 %1754
        %1756 = vadd.xlane.f32.xlu0 %v1501
        %v1757 = vpop.xlane.xlu0 %1756
        %1758 = vadd.xlane.f32.xlu0 %v1503
        %v1759 = vpop.xlane.xlu0 %1758
        %1760 = vadd.xlane.f32.xlu0 %v1505
        %v1761 = vpop.xlane.xlu0 %1760
        %1762 = vadd.xlane.f32.xlu0 %v1507
        %v1763 = vpop.xlane.xlu0 %1762
        %1764 = vadd.xlane.f32.xlu0 %v1509
        %v1765 = vpop.xlane.xlu0 %1764
        %1766 = vadd.xlane.f32.xlu0 %v1511
        %v1767 = vpop.xlane.xlu0 %1766
        %1768 = vadd.xlane.f32.xlu0 %v1513
        %v1769 = vpop.xlane.xlu0 %1768
        %1770 = vadd.xlane.f32.xlu0 %v1515
        %v1771 = vpop.xlane.xlu0 %1770
        %1772 = vadd.xlane.f32.xlu0 %v1517
        %v1773 = vpop.xlane.xlu0 %1772
        %1774 = vadd.xlane.f32.xlu0 %v1519
        %v1775 = vpop.xlane.xlu0 %1774
        %1776 = vadd.xlane.f32.xlu0 %v1521
        %v1777 = vpop.xlane.xlu0 %1776
        %1778 = vadd.xlane.f32.xlu0 %v1523
        %v1779 = vpop.xlane.xlu0 %1778
        %1780 = vadd.xlane.f32.xlu0 %v1525
        %v1781 = vpop.xlane.xlu0 %1780
        %1782 = vadd.xlane.f32.xlu0 %v1527
        %v1783 = vpop.xlane.xlu0 %1782
        %1784 = vadd.xlane.f32.xlu0 %v1529
        %v1785 = vpop.xlane.xlu0 %1784
        %1786 = vadd.xlane.f32.xlu0 %v1531
        %v1787 = vpop.xlane.xlu0 %1786
        %1788 = vadd.xlane.f32.xlu0 %v1533
        %v1789 = vpop.xlane.xlu0 %1788
        %1790 = vadd.xlane.f32.xlu0 %v1535
        %v1791 = vpop.xlane.xlu0 %1790
        %1792 = vadd.xlane.f32.xlu0 %v1537
        %v1793 = vpop.xlane.xlu0 %1792
        %1794 = vadd.xlane.f32.xlu0 %v1539
        %v1795 = vpop.xlane.xlu0 %1794
        %1796 = vadd.xlane.f32.xlu0 %v1541
        %v1797 = vpop.xlane.xlu0 %1796
        %1798 = vadd.xlane.f32.xlu0 %v1543
        %v1799 = vpop.xlane.xlu0 %1798
        %1800 = vadd.xlane.f32.xlu0 %v1545
        %v1801 = vpop.xlane.xlu0 %1800
        %1802 = vadd.xlane.f32.xlu0 %v1547
        %v1803 = vpop.xlane.xlu0 %1802
        %1804 = vadd.xlane.f32.xlu0 %v1549
        %v1805 = vpop.xlane.xlu0 %1804
        %1806 = vadd.xlane.f32.xlu0 %v1551
        %v1807 = vpop.xlane.xlu0 %1806
        %1808 = vadd.xlane.f32.xlu0 %v1553
        %v1809 = vpop.xlane.xlu0 %1808
        %1810 = vadd.xlane.f32.xlu0 %v1555
        %v1811 = vpop.xlane.xlu0 %1810
        %1812 = vadd.xlane.f32.xlu0 %v1557
        %v1813 = vpop.xlane.xlu0 %1812
        %1814 = vadd.xlane.f32.xlu0 %v1559
        %v1815 = vpop.xlane.xlu0 %1814
        %1816 = vadd.xlane.f32.xlu0 %v1561
        %v1817 = vpop.xlane.xlu0 %1816
        %1818 = vadd.xlane.f32.xlu0 %v1563
        %v1819 = vpop.xlane.xlu0 %1818
        %1820 = vadd.xlane.f32.xlu0 %v1565
        %v1821 = vpop.xlane.xlu0 %1820
        %1822 = vadd.xlane.f32.xlu0 %v1567
        %v1823 = vpop.xlane.xlu0 %1822
        %1824 = vadd.xlane.f32.xlu0 %v1569
        %v1825 = vpop.xlane.xlu0 %1824
        %1826 = vadd.xlane.f32.xlu0 %v1571
        %v1827 = vpop.xlane.xlu0 %1826
        %1828 = vadd.xlane.f32.xlu0 %v1573
        %v1829 = vpop.xlane.xlu0 %1828
        %1830 = vadd.xlane.f32.xlu0 %v1575
        %v1831 = vpop.xlane.xlu0 %1830
        %1832 = vadd.xlane.f32.xlu0 %v1577
        %v1833 = vpop.xlane.xlu0 %1832
        %1834 = vadd.xlane.f32.xlu0 %v1579
        %v1835 = vpop.xlane.xlu0 %1834
        %1836 = vadd.xlane.f32.xlu0 %v1581
        %v1837 = vpop.xlane.xlu0 %1836
        %1838 = vadd.xlane.f32.xlu0 %v1583
        %v1839 = vpop.xlane.xlu0 %1838
        %1840 = vadd.xlane.f32.xlu0 %v1585
        %v1841 = vpop.xlane.xlu0 %1840
        %1842 = vadd.xlane.f32.xlu0 %v1587
        %v1843 = vpop.xlane.xlu0 %1842
        %1844 = vadd.xlane.f32.xlu0 %v1589
        %v1845 = vpop.xlane.xlu0 %1844
        %1846 = vadd.xlane.f32.xlu0 %v1591
        %v1847 = vpop.xlane.xlu0 %1846
        %1848 = vadd.xlane.f32.xlu0 %v1593
        %v1849 = vpop.xlane.xlu0 %1848
        %1850 = vadd.xlane.f32.xlu0 %v1595
        %v1851 = vpop.xlane.xlu0 %1850
        %v1852 = vrcp.pop %v1597
        %v1853 = vrcp.pop %v1599
        %v1854 = vrcp.pop %v1601
        %v1855 = vrcp.pop %v1603
        %v1856 = vrcp.pop %v1605
        %v1857 = vrcp.pop %v1607
        %v1858 = vrcp.pop %v1609
        %v1859 = vrcp.pop %v1611
        %v1860 = vrcp.pop %v1613
        %v1861 = vrcp.pop %v1615
        %v1862 = vrcp.pop %v1617
        %v1863 = vrcp.pop %v1619
        %v1864 = vrcp.pop %v1621
        %v1865 = vrcp.pop %v1623
        %v1866 = vrcp.pop %v1625
        %v1867 = vrcp.pop %v1627
        %v1868 = vrcp.pop %v1629
        %v1869 = vrcp.pop %v1631
        %v1870 = vrcp.pop %v1633
        %v1871 = vrcp.pop %v1635
        %v1872 = vrcp.pop %v1637
        %v1873 = vrcp.pop %v1639
        %v1874 = vrcp.pop %v1641
        %v1875 = vrcp.pop %v1643
        %v1876 = vrcp.pop %v1645
        %v1877 = vrcp.pop %v1647
        %v1878 = vrcp.pop %v1649
        %v1879 = vrcp.pop %v1651
        %v1880 = vrcp.pop %v1653
        %v1881 = vrcp.pop %v1655
        %v1882 = vrcp.pop %v1657
        %v1883 = vrcp.pop %v1659
        %v1884 = vrcp.pop %v1661
        %v1885 = vrcp.pop %v1663
        %v1886 = vrcp.pop %v1665
        %v1887 = vrcp.pop %v1667
        %v1888 = vrcp.pop %v1669
        %v1889 = vrcp.pop %v1671
        %v1890 = vrcp.pop %v1673
        %v1891 = vrcp.pop %v1675
        %v1892 = vrcp.pop %v1677
        %v1893 = vrcp.pop %v1679
        %v1894 = vrcp.pop %v1681
        %v1895 = vrcp.pop %v1683
        %v1896 = vrcp.pop %v1685
        %v1897 = vrcp.pop %v1687
        %v1898 = vrcp.pop %v1689
        %v1899 = vrcp.pop %v1691
        %v1900 = vrcp.pop %v1693
        %v1901 = vrcp.pop %v1695
        %v1902 = vrcp.pop %v1697
        %v1903 = vrcp.pop %v1699
        %v1904 = vrcp.pop %v1701
        %v1905 = vrcp.pop %v1703
        %v1906 = vrcp.pop %v1705
        %v1907 = vrcp.pop %v1707
        %v1908 = vrcp.pop %v1709
        %v1909 = vrcp.pop %v1711
        %v1910 = vrcp.pop %v1713
        %v1911 = vrcp.pop %v1715
        %v1912 = vrcp.pop %v1717
        %v1913 = vrcp.pop %v1719
        %v1914 = vrcp.pop %v1721
        %v1915 = vrcp.pop %v1723
        %v1916 = vrcp.pop %v1725
        %v1917 = vrcp.pop %v1727
        %v1918 = vrcp.pop %v1729
        %v1919 = vrcp.pop %v1731
        %v1920 = vrcp.pop %v1733
        %v1921 = vrcp.pop %v1735
        %v1922 = vrcp.pop %v1737
        %v1923 = vrcp.pop %v1739
        %v1924 = vrcp.pop %v1741
        %v1925 = vrcp.pop %v1743
        %v1926 = vrcp.pop %v1745
        %v1927 = vrcp.pop %v1747
        %v1928 = vrcp.pop %v1749
        %v1929 = vrcp.pop %v1751
        %v1930 = vrcp.pop %v1753
        %v1931 = vrcp.pop %v1755
        %v1932 = vrcp.pop %v1757
        %v1933 = vrcp.pop %v1759
        %v1934 = vrcp.pop %v1761
        %v1935 = vrcp.pop %v1763
        %v1936 = vrcp.pop %v1765
        %v1937 = vrcp.pop %v1767
        %v1938 = vrcp.pop %v1769
        %v1939 = vrcp.pop %v1771
        %v1940 = vrcp.pop %v1773
        %v1941 = vrcp.pop %v1775
        %v1942 = vrcp.pop %v1777
        %v1943 = vrcp.pop %v1779
        %v1944 = vrcp.pop %v1781
        %v1945 = vrcp.pop %v1783
        %v1946 = vrcp.pop %v1785
        %v1947 = vrcp.pop %v1787
        %v1948 = vrcp.pop %v1789
        %v1949 = vrcp.pop %v1791
        %v1950 = vrcp.pop %v1793
        %v1951 = vrcp.pop %v1795
        %v1952 = vrcp.pop %v1797
        %v1953 = vrcp.pop %v1799
        %v1954 = vrcp.pop %v1801
        %v1955 = vrcp.pop %v1803
        %v1956 = vrcp.pop %v1805
        %v1957 = vrcp.pop %v1807
        %v1958 = vrcp.pop %v1809
        %v1959 = vrcp.pop %v1811
        %v1960 = vrcp.pop %v1813
        %v1961 = vrcp.pop %v1815
        %v1962 = vrcp.pop %v1817
        %v1963 = vrcp.pop %v1819
        %v1964 = vrcp.pop %v1821
        %v1965 = vrcp.pop %v1823
        %v1966 = vrcp.pop %v1825
        %v1967 = vrcp.pop %v1827
        %v1968 = vrcp.pop %v1829
        %v1969 = vrcp.pop %v1831
        %v1970 = vrcp.pop %v1833
        %v1971 = vrcp.pop %v1835
        %v1972 = vrcp.pop %v1837
        %v1973 = vrcp.pop %v1839
        %v1974 = vrcp.pop %v1841
        %v1975 = vrcp.pop %v1843
        %v1976 = vrcp.pop %v1845
        %v1977 = vrcp.pop %v1847
        %v1978 = vrcp.pop %v1849
        %v1979 = vrcp.pop %v1851
        %v2108 = vlaneseq
        %v2109 = vand.u32 %v2108, 127
        %v2110 = vlaneseq
        %v2111 = vshrl.u32 %v2110, 7
        %v2112 = vsub.s32 %v2109, %v2111
        %v2113 = vrot.slane %v1852, %v2112
        %v2114 = vadd.s32 %v2109, 4294967288
        %v2115 = vlaneseq
        %v2116 = vshrl.u32 %v2115, 7
        %v2117 = vsub.s32 %v2114, %v2116
        %v2118 = vrot.slane %v1853, %v2117
        %vm2119 = vcmask 130112
        %v2120 = vsel %vm2119, %v2118, %v2113
        %v2121 = vadd.s32 %v2109, 4294967280
        %v2122 = vlaneseq
        %v2123 = vshrl.u32 %v2122, 7
        %v2124 = vsub.s32 %v2121, %v2123
        %v2125 = vrot.slane %v1854, %v2124
        %vm2126 = vcmask 195712
        %v2127 = vsel %vm2126, %v2125, %v2120
        %v2128 = vadd.s32 %v2109, 4294967272
        %v2129 = vlaneseq
        %v2130 = vshrl.u32 %v2129, 7
        %v2131 = vsub.s32 %v2128, %v2130
        %v2132 = vrot.slane %v1855, %v2131
        %vm2133 = vcmask 261312
        %v2134 = vsel %vm2133, %v2132, %v2127
        %v2135 = vadd.s32 %v2109, 4294967264
        %v2136 = vlaneseq
        %v2137 = vshrl.u32 %v2136, 7
        %v2138 = vsub.s32 %v2135, %v2137
        %v2139 = vrot.slane %v1856, %v2138
        %vm2140 = vcmask 326912
        %v2141 = vsel %vm2140, %v2139, %v2134
        %v2142 = vadd.s32 %v2109, 4294967256
        %v2143 = vlaneseq
        %v2144 = vshrl.u32 %v2143, 7
        %v2145 = vsub.s32 %v2142, %v2144
        %v2146 = vrot.slane %v1857, %v2145
        %vm2147 = vcmask 392512
        %v2148 = vsel %vm2147, %v2146, %v2141
        %v2149 = vadd.s32 %v2109, 4294967248
        %v2150 = vlaneseq
        %v2151 = vshrl.u32 %v2150, 7
        %v2152 = vsub.s32 %v2149, %v2151
        %v2153 = vrot.slane %v1858, %v2152
        %vm2154 = vcmask 458112
        %v2155 = vsel %vm2154, %v2153, %v2148
        %v2156 = vadd.s32 %v2109, 4294967240
        %v2157 = vlaneseq
        %v2158 = vshrl.u32 %v2157, 7
        %v2159 = vsub.s32 %v2156, %v2158
        %v2160 = vrot.slane %v1859, %v2159
        %vm2161 = vcmask 523712
        %v2162 = vsel %vm2161, %v2160, %v2155
        %v2163 = vadd.s32 %v2109, 4294967232
        %v2164 = vlaneseq
        %v2165 = vshrl.u32 %v2164, 7
        %v2166 = vsub.s32 %v2163, %v2165
        %v2167 = vrot.slane %v1860, %v2166
        %vm2168 = vcmask 589312
        %v2169 = vsel %vm2168, %v2167, %v2162
        %v2170 = vadd.s32 %v2109, 4294967224
        %v2171 = vlaneseq
        %v2172 = vshrl.u32 %v2171, 7
        %v2173 = vsub.s32 %v2170, %v2172
        %v2174 = vrot.slane %v1861, %v2173
        %vm2175 = vcmask 654912
        %v2176 = vsel %vm2175, %v2174, %v2169
        %v2177 = vadd.s32 %v2109, 4294967216
        %v2178 = vlaneseq
        %v2179 = vshrl.u32 %v2178, 7
        %v2180 = vsub.s32 %v2177, %v2179
        %v2181 = vrot.slane %v1862, %v2180
        %vm2182 = vcmask 720512
        %v2183 = vsel %vm2182, %v2181, %v2176
        %v2184 = vadd.s32 %v2109, 4294967208
        %v2185 = vlaneseq
        %v2186 = vshrl.u32 %v2185, 7
        %v2187 = vsub.s32 %v2184, %v2186
        %v2188 = vrot.slane %v1863, %v2187
        %vm2189 = vcmask 786112
        %v2190 = vsel %vm2189, %v2188, %v2183
        %v2191 = vadd.s32 %v2109, 4294967200
        %v2192 = vlaneseq
        %v2193 = vshrl.u32 %v2192, 7
        %v2194 = vsub.s32 %v2191, %v2193
        %v2195 = vrot.slane %v1864, %v2194
        %vm2196 = vcmask 851712
        %v2197 = vsel %vm2196, %v2195, %v2190
        %v2198 = vadd.s32 %v2109, 4294967192
        %v2199 = vlaneseq
        %v2200 = vshrl.u32 %v2199, 7
        %v2201 = vsub.s32 %v2198, %v2200
        %v2202 = vrot.slane %v1865, %v2201
        %vm2203 = vcmask 917312
        %v2204 = vsel %vm2203, %v2202, %v2197
        %v2205 = vadd.s32 %v2109, 4294967184
        %v2206 = vlaneseq
        %v2207 = vshrl.u32 %v2206, 7
        %v2208 = vsub.s32 %v2205, %v2207
        %v2209 = vrot.slane %v1866, %v2208
        %vm2210 = vcmask 982912
        %v2211 = vsel %vm2210, %v2209, %v2204
        %v2212 = vadd.s32 %v2109, 4294967176
        %v2213 = vlaneseq
        %v2214 = vshrl.u32 %v2213, 7
        %v2215 = vsub.s32 %v2212, %v2214
        %v2216 = vrot.slane %v1867, %v2215
        %vm2217 = vcmask 1048512
        %v2218 = vsel %vm2217, %v2216, %v2211
        %v2219 = vlaneseq
        %v2220 = vshrl.u32 %v2219, 7
        %v2221 = vsub.s32 %v2109, %v2220
        %v2222 = vrot.slane %v1868, %v2221
        %v2223 = vlaneseq
        %v2224 = vshrl.u32 %v2223, 7
        %v2225 = vsub.s32 %v2114, %v2224
        %v2226 = vrot.slane %v1869, %v2225
        %v2227 = vsel %vm2119, %v2226, %v2222
        %v2228 = vlaneseq
        %v2229 = vshrl.u32 %v2228, 7
        %v2230 = vsub.s32 %v2121, %v2229
        %v2231 = vrot.slane %v1870, %v2230
        %v2232 = vsel %vm2126, %v2231, %v2227
        %v2233 = vlaneseq
        %v2234 = vshrl.u32 %v2233, 7
        %v2235 = vsub.s32 %v2128, %v2234
        %v2236 = vrot.slane %v1871, %v2235
        %v2237 = vsel %vm2133, %v2236, %v2232
        %v2238 = vlaneseq
        %v2239 = vshrl.u32 %v2238, 7
        %v2240 = vsub.s32 %v2135, %v2239
        %v2241 = vrot.slane %v1872, %v2240
        %v2242 = vsel %vm2140, %v2241, %v2237
        %v2243 = vlaneseq
        %v2244 = vshrl.u32 %v2243, 7
        %v2245 = vsub.s32 %v2142, %v2244
        %v2246 = vrot.slane %v1873, %v2245
        %v2247 = vsel %vm2147, %v2246, %v2242
        %v2248 = vlaneseq
        %v2249 = vshrl.u32 %v2248, 7
        %v2250 = vsub.s32 %v2149, %v2249
        %v2251 = vrot.slane %v1874, %v2250
        %v2252 = vsel %vm2154, %v2251, %v2247
        %v2253 = vlaneseq
        %v2254 = vshrl.u32 %v2253, 7
        %v2255 = vsub.s32 %v2156, %v2254
        %v2256 = vrot.slane %v1875, %v2255
        %v2257 = vsel %vm2161, %v2256, %v2252
        %v2258 = vlaneseq
        %v2259 = vshrl.u32 %v2258, 7
        %v2260 = vsub.s32 %v2163, %v2259
        %v2261 = vrot.slane %v1876, %v2260
        %v2262 = vsel %vm2168, %v2261, %v2257
        %v2263 = vlaneseq
        %v2264 = vshrl.u32 %v2263, 7
        %v2265 = vsub.s32 %v2170, %v2264
        %v2266 = vrot.slane %v1877, %v2265
        %v2267 = vsel %vm2175, %v2266, %v2262
        %v2268 = vlaneseq
        %v2269 = vshrl.u32 %v2268, 7
        %v2270 = vsub.s32 %v2177, %v2269
        %v2271 = vrot.slane %v1878, %v2270
        %v2272 = vsel %vm2182, %v2271, %v2267
        %v2273 = vlaneseq
        %v2274 = vshrl.u32 %v2273, 7
        %v2275 = vsub.s32 %v2184, %v2274
        %v2276 = vrot.slane %v1879, %v2275
        %v2277 = vsel %vm2189, %v2276, %v2272
        %v2278 = vlaneseq
        %v2279 = vshrl.u32 %v2278, 7
        %v2280 = vsub.s32 %v2191, %v2279
        %v2281 = vrot.slane %v1880, %v2280
        %v2282 = vsel %vm2196, %v2281, %v2277
        %v2283 = vlaneseq
        %v2284 = vshrl.u32 %v2283, 7
        %v2285 = vsub.s32 %v2198, %v2284
        %v2286 = vrot.slane %v1881, %v2285
        %v2287 = vsel %vm2203, %v2286, %v2282
        %v2288 = vlaneseq
        %v2289 = vshrl.u32 %v2288, 7
        %v2290 = vsub.s32 %v2205, %v2289
        %v2291 = vrot.slane %v1882, %v2290
        %v2292 = vsel %vm2210, %v2291, %v2287
        %v2293 = vlaneseq
        %v2294 = vshrl.u32 %v2293, 7
        %v2295 = vsub.s32 %v2212, %v2294
        %v2296 = vrot.slane %v1883, %v2295
        %v2297 = vsel %vm2217, %v2296, %v2292
        %v2298 = vlaneseq
        %v2299 = vshrl.u32 %v2298, 7
        %v2300 = vsub.s32 %v2109, %v2299
        %v2301 = vrot.slane %v1884, %v2300
        %v2302 = vlaneseq
        %v2303 = vshrl.u32 %v2302, 7
        %v2304 = vsub.s32 %v2114, %v2303
        %v2305 = vrot.slane %v1885, %v2304
        %v2306 = vsel %vm2119, %v2305, %v2301
        %v2307 = vlaneseq
        %v2308 = vshrl.u32 %v2307, 7
        %v2309 = vsub.s32 %v2121, %v2308
        %v2310 = vrot.slane %v1886, %v2309
        %v2311 = vsel %vm2126, %v2310, %v2306
        %v2312 = vlaneseq
        %v2313 = vshrl.u32 %v2312, 7
        %v2314 = vsub.s32 %v2128, %v2313
        %v2315 = vrot.slane %v1887, %v2314
        %v2316 = vsel %vm2133, %v2315, %v2311
        %v2317 = vlaneseq
        %v2318 = vshrl.u32 %v2317, 7
        %v2319 = vsub.s32 %v2135, %v2318
        %v2320 = vrot.slane %v1888, %v2319
        %v2321 = vsel %vm2140, %v2320, %v2316
        %v2322 = vlaneseq
        %v2323 = vshrl.u32 %v2322, 7
        %v2324 = vsub.s32 %v2142, %v2323
        %v2325 = vrot.slane %v1889, %v2324
        %v2326 = vsel %vm2147, %v2325, %v2321
        %v2327 = vlaneseq
        %v2328 = vshrl.u32 %v2327, 7
        %v2329 = vsub.s32 %v2149, %v2328
        %v2330 = vrot.slane %v1890, %v2329
        %v2331 = vsel %vm2154, %v2330, %v2326
        %v2332 = vlaneseq
        %v2333 = vshrl.u32 %v2332, 7
        %v2334 = vsub.s32 %v2156, %v2333
        %v2335 = vrot.slane %v1891, %v2334
        %v2336 = vsel %vm2161, %v2335, %v2331
        %v2337 = vlaneseq
        %v2338 = vshrl.u32 %v2337, 7
        %v2339 = vsub.s32 %v2163, %v2338
        %v2340 = vrot.slane %v1892, %v2339
        %v2341 = vsel %vm2168, %v2340, %v2336
        %v2342 = vlaneseq
        %v2343 = vshrl.u32 %v2342, 7
        %v2344 = vsub.s32 %v2170, %v2343
        %v2345 = vrot.slane %v1893, %v2344
        %v2346 = vsel %vm2175, %v2345, %v2341
        %v2347 = vlaneseq
        %v2348 = vshrl.u32 %v2347, 7
        %v2349 = vsub.s32 %v2177, %v2348
        %v2350 = vrot.slane %v1894, %v2349
        %v2351 = vsel %vm2182, %v2350, %v2346
        %v2352 = vlaneseq
        %v2353 = vshrl.u32 %v2352, 7
        %v2354 = vsub.s32 %v2184, %v2353
        %v2355 = vrot.slane %v1895, %v2354
        %v2356 = vsel %vm2189, %v2355, %v2351
        %v2357 = vlaneseq
        %v2358 = vshrl.u32 %v2357, 7
        %v2359 = vsub.s32 %v2191, %v2358
        %v2360 = vrot.slane %v1896, %v2359
        %v2361 = vsel %vm2196, %v2360, %v2356
        %v2362 = vlaneseq
        %v2363 = vshrl.u32 %v2362, 7
        %v2364 = vsub.s32 %v2198, %v2363
        %v2365 = vrot.slane %v1897, %v2364
        %v2366 = vsel %vm2203, %v2365, %v2361
        %v2367 = vlaneseq
        %v2368 = vshrl.u32 %v2367, 7
        %v2369 = vsub.s32 %v2205, %v2368
        %v2370 = vrot.slane %v1898, %v2369
        %v2371 = vsel %vm2210, %v2370, %v2366
        %v2372 = vlaneseq
        %v2373 = vshrl.u32 %v2372, 7
        %v2374 = vsub.s32 %v2212, %v2373
        %v2375 = vrot.slane %v1899, %v2374
        %v2376 = vsel %vm2217, %v2375, %v2371
        %v2377 = vlaneseq
        %v2378 = vshrl.u32 %v2377, 7
        %v2379 = vsub.s32 %v2109, %v2378
        %v2380 = vrot.slane %v1900, %v2379
        %v2381 = vlaneseq
        %v2382 = vshrl.u32 %v2381, 7
        %v2383 = vsub.s32 %v2114, %v2382
        %v2384 = vrot.slane %v1901, %v2383
        %v2385 = vsel %vm2119, %v2384, %v2380
        %v2386 = vlaneseq
        %v2387 = vshrl.u32 %v2386, 7
        %v2388 = vsub.s32 %v2121, %v2387
        %v2389 = vrot.slane %v1902, %v2388
        %v2390 = vsel %vm2126, %v2389, %v2385
        %v2391 = vlaneseq
        %v2392 = vshrl.u32 %v2391, 7
        %v2393 = vsub.s32 %v2128, %v2392
        %v2394 = vrot.slane %v1903, %v2393
        %v2395 = vsel %vm2133, %v2394, %v2390
        %v2396 = vlaneseq
        %v2397 = vshrl.u32 %v2396, 7
        %v2398 = vsub.s32 %v2135, %v2397
        %v2399 = vrot.slane %v1904, %v2398
        %v2400 = vsel %vm2140, %v2399, %v2395
        %v2401 = vlaneseq
        %v2402 = vshrl.u32 %v2401, 7
        %v2403 = vsub.s32 %v2142, %v2402
        %v2404 = vrot.slane %v1905, %v2403
        %v2405 = vsel %vm2147, %v2404, %v2400
        %v2406 = vlaneseq
        %v2407 = vshrl.u32 %v2406, 7
        %v2408 = vsub.s32 %v2149, %v2407
        %v2409 = vrot.slane %v1906, %v2408
        %v2410 = vsel %vm2154, %v2409, %v2405
        %v2411 = vlaneseq
        %v2412 = vshrl.u32 %v2411, 7
        %v2413 = vsub.s32 %v2156, %v2412
        %v2414 = vrot.slane %v1907, %v2413
        %v2415 = vsel %vm2161, %v2414, %v2410
        %v2416 = vlaneseq
        %v2417 = vshrl.u32 %v2416, 7
        %v2418 = vsub.s32 %v2163, %v2417
        %v2419 = vrot.slane %v1908, %v2418
        %v2420 = vsel %vm2168, %v2419, %v2415
        %v2421 = vlaneseq
        %v2422 = vshrl.u32 %v2421, 7
        %v2423 = vsub.s32 %v2170, %v2422
        %v2424 = vrot.slane %v1909, %v2423
        %v2425 = vsel %vm2175, %v2424, %v2420
        %v2426 = vlaneseq
        %v2427 = vshrl.u32 %v2426, 7
        %v2428 = vsub.s32 %v2177, %v2427
        %v2429 = vrot.slane %v1910, %v2428
        %v2430 = vsel %vm2182, %v2429, %v2425
        %v2431 = vlaneseq
        %v2432 = vshrl.u32 %v2431, 7
        %v2433 = vsub.s32 %v2184, %v2432
        %v2434 = vrot.slane %v1911, %v2433
        %v2435 = vsel %vm2189, %v2434, %v2430
        %v2436 = vlaneseq
        %v2437 = vshrl.u32 %v2436, 7
        %v2438 = vsub.s32 %v2191, %v2437
        %v2439 = vrot.slane %v1912, %v2438
        %v2440 = vsel %vm2196, %v2439, %v2435
        %v2441 = vlaneseq
        %v2442 = vshrl.u32 %v2441, 7
        %v2443 = vsub.s32 %v2198, %v2442
        %v2444 = vrot.slane %v1913, %v2443
        %v2445 = vsel %vm2203, %v2444, %v2440
        %v2446 = vlaneseq
        %v2447 = vshrl.u32 %v2446, 7
        %v2448 = vsub.s32 %v2205, %v2447
        %v2449 = vrot.slane %v1914, %v2448
        %v2450 = vsel %vm2210, %v2449, %v2445
        %v2451 = vlaneseq
        %v2452 = vshrl.u32 %v2451, 7
        %v2453 = vsub.s32 %v2212, %v2452
        %v2454 = vrot.slane %v1915, %v2453
        %v2455 = vsel %vm2217, %v2454, %v2450
        %v2456 = vlaneseq
        %v2457 = vshrl.u32 %v2456, 7
        %v2458 = vsub.s32 %v2109, %v2457
        %v2459 = vrot.slane %v1916, %v2458
        %v2460 = vlaneseq
        %v2461 = vshrl.u32 %v2460, 7
        %v2462 = vsub.s32 %v2114, %v2461
        %v2463 = vrot.slane %v1917, %v2462
        %v2464 = vsel %vm2119, %v2463, %v2459
        %v2465 = vlaneseq
        %v2466 = vshrl.u32 %v2465, 7
        %v2467 = vsub.s32 %v2121, %v2466
        %v2468 = vrot.slane %v1918, %v2467
        %v2469 = vsel %vm2126, %v2468, %v2464
        %v2470 = vlaneseq
        %v2471 = vshrl.u32 %v2470, 7
        %v2472 = vsub.s32 %v2128, %v2471
        %v2473 = vrot.slane %v1919, %v2472
        %v2474 = vsel %vm2133, %v2473, %v2469
        %v2475 = vlaneseq
        %v2476 = vshrl.u32 %v2475, 7
        %v2477 = vsub.s32 %v2135, %v2476
        %v2478 = vrot.slane %v1920, %v2477
        %v2479 = vsel %vm2140, %v2478, %v2474
        %v2480 = vlaneseq
        %v2481 = vshrl.u32 %v2480, 7
        %v2482 = vsub.s32 %v2142, %v2481
        %v2483 = vrot.slane %v1921, %v2482
        %v2484 = vsel %vm2147, %v2483, %v2479
        %v2485 = vlaneseq
        %v2486 = vshrl.u32 %v2485, 7
        %v2487 = vsub.s32 %v2149, %v2486
        %v2488 = vrot.slane %v1922, %v2487
        %v2489 = vsel %vm2154, %v2488, %v2484
        %v2490 = vlaneseq
        %v2491 = vshrl.u32 %v2490, 7
        %v2492 = vsub.s32 %v2156, %v2491
        %v2493 = vrot.slane %v1923, %v2492
        %v2494 = vsel %vm2161, %v2493, %v2489
        %v2495 = vlaneseq
        %v2496 = vshrl.u32 %v2495, 7
        %v2497 = vsub.s32 %v2163, %v2496
        %v2498 = vrot.slane %v1924, %v2497
        %v2499 = vsel %vm2168, %v2498, %v2494
        %v2500 = vlaneseq
        %v2501 = vshrl.u32 %v2500, 7
        %v2502 = vsub.s32 %v2170, %v2501
        %v2503 = vrot.slane %v1925, %v2502
        %v2504 = vsel %vm2175, %v2503, %v2499
        %v2505 = vlaneseq
        %v2506 = vshrl.u32 %v2505, 7
        %v2507 = vsub.s32 %v2177, %v2506
        %v2508 = vrot.slane %v1926, %v2507
        %v2509 = vsel %vm2182, %v2508, %v2504
        %v2510 = vlaneseq
        %v2511 = vshrl.u32 %v2510, 7
        %v2512 = vsub.s32 %v2184, %v2511
        %v2513 = vrot.slane %v1927, %v2512
        %v2514 = vsel %vm2189, %v2513, %v2509
        %v2515 = vlaneseq
        %v2516 = vshrl.u32 %v2515, 7
        %v2517 = vsub.s32 %v2191, %v2516
        %v2518 = vrot.slane %v1928, %v2517
        %v2519 = vsel %vm2196, %v2518, %v2514
        %v2520 = vlaneseq
        %v2521 = vshrl.u32 %v2520, 7
        %v2522 = vsub.s32 %v2198, %v2521
        %v2523 = vrot.slane %v1929, %v2522
        %v2524 = vsel %vm2203, %v2523, %v2519
        %v2525 = vlaneseq
        %v2526 = vshrl.u32 %v2525, 7
        %v2527 = vsub.s32 %v2205, %v2526
        %v2528 = vrot.slane %v1930, %v2527
        %v2529 = vsel %vm2210, %v2528, %v2524
        %v2530 = vlaneseq
        %v2531 = vshrl.u32 %v2530, 7
        %v2532 = vsub.s32 %v2212, %v2531
        %v2533 = vrot.slane %v1931, %v2532
        %v2534 = vsel %vm2217, %v2533, %v2529
        %v2535 = vlaneseq
        %v2536 = vshrl.u32 %v2535, 7
        %v2537 = vsub.s32 %v2109, %v2536
        %v2538 = vrot.slane %v1932, %v2537
        %v2539 = vlaneseq
        %v2540 = vshrl.u32 %v2539, 7
        %v2541 = vsub.s32 %v2114, %v2540
        %v2542 = vrot.slane %v1933, %v2541
        %v2543 = vsel %vm2119, %v2542, %v2538
        %v2544 = vlaneseq
        %v2545 = vshrl.u32 %v2544, 7
        %v2546 = vsub.s32 %v2121, %v2545
        %v2547 = vrot.slane %v1934, %v2546
        %v2548 = vsel %vm2126, %v2547, %v2543
        %v2549 = vlaneseq
        %v2550 = vshrl.u32 %v2549, 7
        %v2551 = vsub.s32 %v2128, %v2550
        %v2552 = vrot.slane %v1935, %v2551
        %v2553 = vsel %vm2133, %v2552, %v2548
        %v2554 = vlaneseq
        %v2555 = vshrl.u32 %v2554, 7
        %v2556 = vsub.s32 %v2135, %v2555
        %v2557 = vrot.slane %v1936, %v2556
        %v2558 = vsel %vm2140, %v2557, %v2553
        %v2559 = vlaneseq
        %v2560 = vshrl.u32 %v2559, 7
        %v2561 = vsub.s32 %v2142, %v2560
        %v2562 = vrot.slane %v1937, %v2561
        %v2563 = vsel %vm2147, %v2562, %v2558
        %v2564 = vlaneseq
        %v2565 = vshrl.u32 %v2564, 7
        %v2566 = vsub.s32 %v2149, %v2565
        %v2567 = vrot.slane %v1938, %v2566
        %v2568 = vsel %vm2154, %v2567, %v2563
        %v2569 = vlaneseq
        %v2570 = vshrl.u32 %v2569, 7
        %v2571 = vsub.s32 %v2156, %v2570
        %v2572 = vrot.slane %v1939, %v2571
        %v2573 = vsel %vm2161, %v2572, %v2568
        %v2574 = vlaneseq
        %v2575 = vshrl.u32 %v2574, 7
        %v2576 = vsub.s32 %v2163, %v2575
        %v2577 = vrot.slane %v1940, %v2576
        %v2578 = vsel %vm2168, %v2577, %v2573
        %v2579 = vlaneseq
        %v2580 = vshrl.u32 %v2579, 7
        %v2581 = vsub.s32 %v2170, %v2580
        %v2582 = vrot.slane %v1941, %v2581
        %v2583 = vsel %vm2175, %v2582, %v2578
        %v2584 = vlaneseq
        %v2585 = vshrl.u32 %v2584, 7
        %v2586 = vsub.s32 %v2177, %v2585
        %v2587 = vrot.slane %v1942, %v2586
        %v2588 = vsel %vm2182, %v2587, %v2583
        %v2589 = vlaneseq
        %v2590 = vshrl.u32 %v2589, 7
        %v2591 = vsub.s32 %v2184, %v2590
        %v2592 = vrot.slane %v1943, %v2591
        %v2593 = vsel %vm2189, %v2592, %v2588
        %v2594 = vlaneseq
        %v2595 = vshrl.u32 %v2594, 7
        %v2596 = vsub.s32 %v2191, %v2595
        %v2597 = vrot.slane %v1944, %v2596
        %v2598 = vsel %vm2196, %v2597, %v2593
        %v2599 = vlaneseq
        %v2600 = vshrl.u32 %v2599, 7
        %v2601 = vsub.s32 %v2198, %v2600
        %v2602 = vrot.slane %v1945, %v2601
        %v2603 = vsel %vm2203, %v2602, %v2598
        %v2604 = vlaneseq
        %v2605 = vshrl.u32 %v2604, 7
        %v2606 = vsub.s32 %v2205, %v2605
        %v2607 = vrot.slane %v1946, %v2606
        %v2608 = vsel %vm2210, %v2607, %v2603
        %v2609 = vlaneseq
        %v2610 = vshrl.u32 %v2609, 7
        %v2611 = vsub.s32 %v2212, %v2610
        %v2612 = vrot.slane %v1947, %v2611
        %v2613 = vsel %vm2217, %v2612, %v2608
        %v2614 = vlaneseq
        %v2615 = vshrl.u32 %v2614, 7
        %v2616 = vsub.s32 %v2109, %v2615
        %v2617 = vrot.slane %v1948, %v2616
        %v2618 = vlaneseq
        %v2619 = vshrl.u32 %v2618, 7
        %v2620 = vsub.s32 %v2114, %v2619
        %v2621 = vrot.slane %v1949, %v2620
        %v2622 = vsel %vm2119, %v2621, %v2617
        %v2623 = vlaneseq
        %v2624 = vshrl.u32 %v2623, 7
        %v2625 = vsub.s32 %v2121, %v2624
        %v2626 = vrot.slane %v1950, %v2625
        %v2627 = vsel %vm2126, %v2626, %v2622
        %v2628 = vlaneseq
        %v2629 = vshrl.u32 %v2628, 7
        %v2630 = vsub.s32 %v2128, %v2629
        %v2631 = vrot.slane %v1951, %v2630
        %v2632 = vsel %vm2133, %v2631, %v2627
        %v2633 = vlaneseq
        %v2634 = vshrl.u32 %v2633, 7
        %v2635 = vsub.s32 %v2135, %v2634
        %v2636 = vrot.slane %v1952, %v2635
        %v2637 = vsel %vm2140, %v2636, %v2632
        %v2638 = vlaneseq
        %v2639 = vshrl.u32 %v2638, 7
        %v2640 = vsub.s32 %v2142, %v2639
        %v2641 = vrot.slane %v1953, %v2640
        %v2642 = vsel %vm2147, %v2641, %v2637
        %v2643 = vlaneseq
        %v2644 = vshrl.u32 %v2643, 7
        %v2645 = vsub.s32 %v2149, %v2644
        %v2646 = vrot.slane %v1954, %v2645
        %v2647 = vsel %vm2154, %v2646, %v2642
        %v2648 = vlaneseq
        %v2649 = vshrl.u32 %v2648, 7
        %v2650 = vsub.s32 %v2156, %v2649
        %v2651 = vrot.slane %v1955, %v2650
        %v2652 = vsel %vm2161, %v2651, %v2647
        %v2653 = vlaneseq
        %v2654 = vshrl.u32 %v2653, 7
        %v2655 = vsub.s32 %v2163, %v2654
        %v2656 = vrot.slane %v1956, %v2655
        %v2657 = vsel %vm2168, %v2656, %v2652
        %v2658 = vlaneseq
        %v2659 = vshrl.u32 %v2658, 7
        %v2660 = vsub.s32 %v2170, %v2659
        %v2661 = vrot.slane %v1957, %v2660
        %v2662 = vsel %vm2175, %v2661, %v2657
        %v2663 = vlaneseq
        %v2664 = vshrl.u32 %v2663, 7
        %v2665 = vsub.s32 %v2177, %v2664
        %v2666 = vrot.slane %v1958, %v2665
        %v2667 = vsel %vm2182, %v2666, %v2662
        %v2668 = vlaneseq
        %v2669 = vshrl.u32 %v2668, 7
        %v2670 = vsub.s32 %v2184, %v2669
        %v2671 = vrot.slane %v1959, %v2670
        %v2672 = vsel %vm2189, %v2671, %v2667
        %v2673 = vlaneseq
        %v2674 = vshrl.u32 %v2673, 7
        %v2675 = vsub.s32 %v2191, %v2674
        %v2676 = vrot.slane %v1960, %v2675
        %v2677 = vsel %vm2196, %v2676, %v2672
        %v2678 = vlaneseq
        %v2679 = vshrl.u32 %v2678, 7
        %v2680 = vsub.s32 %v2198, %v2679
        %v2681 = vrot.slane %v1961, %v2680
        %v2682 = vsel %vm2203, %v2681, %v2677
        %v2683 = vlaneseq
        %v2684 = vshrl.u32 %v2683, 7
        %v2685 = vsub.s32 %v2205, %v2684
        %v2686 = vrot.slane %v1962, %v2685
        %v2687 = vsel %vm2210, %v2686, %v2682
        %v2688 = vlaneseq
        %v2689 = vshrl.u32 %v2688, 7
        %v2690 = vsub.s32 %v2212, %v2689
        %v2691 = vrot.slane %v1963, %v2690
        %v2692 = vsel %vm2217, %v2691, %v2687
        %v2693 = vlaneseq
        %v2694 = vshrl.u32 %v2693, 7
        %v2695 = vsub.s32 %v2109, %v2694
        %v2696 = vrot.slane %v1964, %v2695
        %v2697 = vlaneseq
        %v2698 = vshrl.u32 %v2697, 7
        %v2699 = vsub.s32 %v2114, %v2698
        %v2700 = vrot.slane %v1965, %v2699
        %v2701 = vsel %vm2119, %v2700, %v2696
        %v2702 = vlaneseq
        %v2703 = vshrl.u32 %v2702, 7
        %v2704 = vsub.s32 %v2121, %v2703
        %v2705 = vrot.slane %v1966, %v2704
        %v2706 = vsel %vm2126, %v2705, %v2701
        %v2707 = vlaneseq
        %v2708 = vshrl.u32 %v2707, 7
        %v2709 = vsub.s32 %v2128, %v2708
        %v2710 = vrot.slane %v1967, %v2709
        %v2711 = vsel %vm2133, %v2710, %v2706
        %v2712 = vlaneseq
        %v2713 = vshrl.u32 %v2712, 7
        %v2714 = vsub.s32 %v2135, %v2713
        %v2715 = vrot.slane %v1968, %v2714
        %v2716 = vsel %vm2140, %v2715, %v2711
        %v2717 = vlaneseq
        %v2718 = vshrl.u32 %v2717, 7
        %v2719 = vsub.s32 %v2142, %v2718
        %v2720 = vrot.slane %v1969, %v2719
        %v2721 = vsel %vm2147, %v2720, %v2716
        %v2722 = vlaneseq
        %v2723 = vshrl.u32 %v2722, 7
        %v2724 = vsub.s32 %v2149, %v2723
        %v2725 = vrot.slane %v1970, %v2724
        %v2726 = vsel %vm2154, %v2725, %v2721
        %v2727 = vlaneseq
        %v2728 = vshrl.u32 %v2727, 7
        %v2729 = vsub.s32 %v2156, %v2728
        %v2730 = vrot.slane %v1971, %v2729
        %v2731 = vsel %vm2161, %v2730, %v2726
        %v2732 = vlaneseq
        %v2733 = vshrl.u32 %v2732, 7
        %v2734 = vsub.s32 %v2163, %v2733
        %v2735 = vrot.slane %v1972, %v2734
        %v2736 = vsel %vm2168, %v2735, %v2731
        %v2737 = vlaneseq
        %v2738 = vshrl.u32 %v2737, 7
        %v2739 = vsub.s32 %v2170, %v2738
        %v2740 = vrot.slane %v1973, %v2739
        %v2741 = vsel %vm2175, %v2740, %v2736
        %v2742 = vlaneseq
        %v2743 = vshrl.u32 %v2742, 7
        %v2744 = vsub.s32 %v2177, %v2743
        %v2745 = vrot.slane %v1974, %v2744
        %v2746 = vsel %vm2182, %v2745, %v2741
        %v2747 = vlaneseq
        %v2748 = vshrl.u32 %v2747, 7
        %v2749 = vsub.s32 %v2184, %v2748
        %v2750 = vrot.slane %v1975, %v2749
        %v2751 = vsel %vm2189, %v2750, %v2746
        %v2752 = vlaneseq
        %v2753 = vshrl.u32 %v2752, 7
        %v2754 = vsub.s32 %v2191, %v2753
        %v2755 = vrot.slane %v1976, %v2754
        %v2756 = vsel %vm2196, %v2755, %v2751
        %v2757 = vlaneseq
        %v2758 = vshrl.u32 %v2757, 7
        %v2759 = vsub.s32 %v2198, %v2758
        %v2760 = vrot.slane %v1977, %v2759
        %v2761 = vsel %vm2203, %v2760, %v2756
        %v2762 = vlaneseq
        %v2763 = vshrl.u32 %v2762, 7
        %v2764 = vsub.s32 %v2205, %v2763
        %v2765 = vrot.slane %v1978, %v2764
        %v2766 = vsel %vm2210, %v2765, %v2761
        %v2767 = vlaneseq
        %v2768 = vshrl.u32 %v2767, 7
        %v2769 = vsub.s32 %v2212, %v2768
        %v2770 = vrot.slane %v1979, %v2769
        %v2771 = vsel %vm2217, %v2770, %v2766
        %vm2772 = vcmask 1041409
        %v2773 = vsel %vm2772, %v2297, %v2218
        %vm2774 = vcmask 1042434
        %v2775 = vsel %vm2774, %v2376, %v2773
        %vm2776 = vcmask 1043459
        %v2777 = vsel %vm2776, %v2455, %v2775
        %vm2778 = vcmask 1044484
        %v2779 = vsel %vm2778, %v2534, %v2777
        %vm2780 = vcmask 1045509
        %v2781 = vsel %vm2780, %v2613, %v2779
        %vm2782 = vcmask 1046534
        %v2783 = vsel %vm2782, %v2692, %v2781
        %vm2784 = vcmask 1047559
        %v2785 = vsel %vm2784, %v2771, %v2783
        %v2787 = vmul.f32 %v575, %v2785
        %v2788 = vlaneseq
        %v2789 = vshrl.u32 %v2788, 7
        %v2790 = vsub.s32 0, %v2789
        %v2791 = vrot.slane %v2787, %v2790
        %2793 = vbcast.lane.b32.xlu0 %v2791, 256
        %v2794 = vpop.permute.xlu0 %2793
        %s2796 = sor.u32 256, 8
        %2797 = vbcast.lane.b32.xlu0 %v2791, %s2796
        %v2798 = vpop.permute.xlu0 %2797
        %s2800 = sor.u32 256, 16
        %2801 = vbcast.lane.b32.xlu0 %v2791, %s2800
        %v2802 = vpop.permute.xlu0 %2801
        %s2804 = sor.u32 256, 24
        %2805 = vbcast.lane.b32.xlu0 %v2791, %s2804
        %v2806 = vpop.permute.xlu0 %2805
        %s2808 = sor.u32 256, 32
        %2809 = vbcast.lane.b32.xlu0 %v2791, %s2808
        %v2810 = vpop.permute.xlu0 %2809
        %s2812 = sor.u32 256, 40
        %2813 = vbcast.lane.b32.xlu0 %v2791, %s2812
        %v2814 = vpop.permute.xlu0 %2813
        %s2816 = sor.u32 256, 48
        %2817 = vbcast.lane.b32.xlu0 %v2791, %s2816
        %v2818 = vpop.permute.xlu0 %2817
        %s2820 = sor.u32 256, 56
        %2821 = vbcast.lane.b32.xlu0 %v2791, %s2820
        %v2822 = vpop.permute.xlu0 %2821
        %s2824 = sor.u32 256, 64
        %2825 = vbcast.lane.b32.xlu0 %v2791, %s2824
        %v2826 = vpop.permute.xlu0 %2825
        %s2828 = sor.u32 256, 72
        %2829 = vbcast.lane.b32.xlu0 %v2791, %s2828
        %v2830 = vpop.permute.xlu0 %2829
        %s2832 = sor.u32 256, 80
        %2833 = vbcast.lane.b32.xlu0 %v2791, %s2832
        %v2834 = vpop.permute.xlu0 %2833
        %s2836 = sor.u32 256, 88
        %2837 = vbcast.lane.b32.xlu0 %v2791, %s2836
        %v2838 = vpop.permute.xlu0 %2837
        %s2840 = sor.u32 256, 96
        %2841 = vbcast.lane.b32.xlu0 %v2791, %s2840
        %v2842 = vpop.permute.xlu0 %2841
        %s2844 = sor.u32 256, 104
        %2845 = vbcast.lane.b32.xlu0 %v2791, %s2844
        %v2846 = vpop.permute.xlu0 %2845
        %s2848 = sor.u32 256, 112
        %2849 = vbcast.lane.b32.xlu0 %v2791, %s2848
        %v2850 = vpop.permute.xlu0 %2849
        %s2852 = sor.u32 256, 120
        %2853 = vbcast.lane.b32.xlu0 %v2791, %s2852
        %v2854 = vpop.permute.xlu0 %2853
        %v2855 = vlaneseq
        %v2856 = vshrl.u32 %v2855, 7
        %v2857 = vsub.s32 1, %v2856
        %v2858 = vrot.slane %v2787, %v2857
        %2860 = vbcast.lane.b32.xlu0 %v2858, 256
        %v2861 = vpop.permute.xlu0 %2860
        %s2863 = sor.u32 256, 8
        %2864 = vbcast.lane.b32.xlu0 %v2858, %s2863
        %v2865 = vpop.permute.xlu0 %2864
        %s2867 = sor.u32 256, 16
        %2868 = vbcast.lane.b32.xlu0 %v2858, %s2867
        %v2869 = vpop.permute.xlu0 %2868
        %s2871 = sor.u32 256, 24
        %2872 = vbcast.lane.b32.xlu0 %v2858, %s2871
        %v2873 = vpop.permute.xlu0 %2872
        %s2875 = sor.u32 256, 32
        %2876 = vbcast.lane.b32.xlu0 %v2858, %s2875
        %v2877 = vpop.permute.xlu0 %2876
        %s2879 = sor.u32 256, 40
        %2880 = vbcast.lane.b32.xlu0 %v2858, %s2879
        %v2881 = vpop.permute.xlu0 %2880
        %s2883 = sor.u32 256, 48
        %2884 = vbcast.lane.b32.xlu0 %v2858, %s2883
        %v2885 = vpop.permute.xlu0 %2884
        %s2887 = sor.u32 256, 56
        %2888 = vbcast.lane.b32.xlu0 %v2858, %s2887
        %v2889 = vpop.permute.xlu0 %2888
        %s2891 = sor.u32 256, 64
        %2892 = vbcast.lane.b32.xlu0 %v2858, %s2891
        %v2893 = vpop.permute.xlu0 %2892
        %s2895 = sor.u32 256, 72
        %2896 = vbcast.lane.b32.xlu0 %v2858, %s2895
        %v2897 = vpop.permute.xlu0 %2896
        %s2899 = sor.u32 256, 80
        %2900 = vbcast.lane.b32.xlu0 %v2858, %s2899
        %v2901 = vpop.permute.xlu0 %2900
        %s2903 = sor.u32 256, 88
        %2904 = vbcast.lane.b32.xlu0 %v2858, %s2903
        %v2905 = vpop.permute.xlu0 %2904
        %s2907 = sor.u32 256, 96
        %2908 = vbcast.lane.b32.xlu0 %v2858, %s2907
        %v2909 = vpop.permute.xlu0 %2908
        %s2911 = sor.u32 256, 104
        %2912 = vbcast.lane.b32.xlu0 %v2858, %s2911
        %v2913 = vpop.permute.xlu0 %2912
        %s2915 = sor.u32 256, 112
        %2916 = vbcast.lane.b32.xlu0 %v2858, %s2915
        %v2917 = vpop.permute.xlu0 %2916
        %s2919 = sor.u32 256, 120
        %2920 = vbcast.lane.b32.xlu0 %v2858, %s2919
        %v2921 = vpop.permute.xlu0 %2920
        %v2922 = vlaneseq
        %v2923 = vshrl.u32 %v2922, 7
        %v2924 = vsub.s32 2, %v2923
        %v2925 = vrot.slane %v2787, %v2924
        %2927 = vbcast.lane.b32.xlu0 %v2925, 256
        %v2928 = vpop.permute.xlu0 %2927
        %s2930 = sor.u32 256, 8
        %2931 = vbcast.lane.b32.xlu0 %v2925, %s2930
        %v2932 = vpop.permute.xlu0 %2931
        %s2934 = sor.u32 256, 16
        %2935 = vbcast.lane.b32.xlu0 %v2925, %s2934
        %v2936 = vpop.permute.xlu0 %2935
        %s2938 = sor.u32 256, 24
        %2939 = vbcast.lane.b32.xlu0 %v2925, %s2938
        %v2940 = vpop.permute.xlu0 %2939
        %s2942 = sor.u32 256, 32
        %2943 = vbcast.lane.b32.xlu0 %v2925, %s2942
        %v2944 = vpop.permute.xlu0 %2943
        %s2946 = sor.u32 256, 40
        %2947 = vbcast.lane.b32.xlu0 %v2925, %s2946
        %v2948 = vpop.permute.xlu0 %2947
        %s2950 = sor.u32 256, 48
        %2951 = vbcast.lane.b32.xlu0 %v2925, %s2950
        %v2952 = vpop.permute.xlu0 %2951
        %s2954 = sor.u32 256, 56
        %2955 = vbcast.lane.b32.xlu0 %v2925, %s2954
        %v2956 = vpop.permute.xlu0 %2955
        %s2958 = sor.u32 256, 64
        %2959 = vbcast.lane.b32.xlu0 %v2925, %s2958
        %v2960 = vpop.permute.xlu0 %2959
        %s2962 = sor.u32 256, 72
        %2963 = vbcast.lane.b32.xlu0 %v2925, %s2962
        %v2964 = vpop.permute.xlu0 %2963
        %s2966 = sor.u32 256, 80
        %2967 = vbcast.lane.b32.xlu0 %v2925, %s2966
        %v2968 = vpop.permute.xlu0 %2967
        %s2970 = sor.u32 256, 88
        %2971 = vbcast.lane.b32.xlu0 %v2925, %s2970
        %v2972 = vpop.permute.xlu0 %2971
        %s2974 = sor.u32 256, 96
        %2975 = vbcast.lane.b32.xlu0 %v2925, %s2974
        %v2976 = vpop.permute.xlu0 %2975
        %s2978 = sor.u32 256, 104
        %2979 = vbcast.lane.b32.xlu0 %v2925, %s2978
        %v2980 = vpop.permute.xlu0 %2979
        %s2982 = sor.u32 256, 112
        %2983 = vbcast.lane.b32.xlu0 %v2925, %s2982
        %v2984 = vpop.permute.xlu0 %2983
        %s2986 = sor.u32 256, 120
        %2987 = vbcast.lane.b32.xlu0 %v2925, %s2986
        %v2988 = vpop.permute.xlu0 %2987
        %v2989 = vlaneseq
        %v2990 = vshrl.u32 %v2989, 7
        %v2991 = vsub.s32 3, %v2990
        %v2992 = vrot.slane %v2787, %v2991
        %2994 = vbcast.lane.b32.xlu0 %v2992, 256
        %v2995 = vpop.permute.xlu0 %2994
        %s2997 = sor.u32 256, 8
        %2998 = vbcast.lane.b32.xlu0 %v2992, %s2997
        %v2999 = vpop.permute.xlu0 %2998
        %s3001 = sor.u32 256, 16
        %3002 = vbcast.lane.b32.xlu0 %v2992, %s3001
        %v3003 = vpop.permute.xlu0 %3002
        %s3005 = sor.u32 256, 24
        %3006 = vbcast.lane.b32.xlu0 %v2992, %s3005
        %v3007 = vpop.permute.xlu0 %3006
        %s3009 = sor.u32 256, 32
        %3010 = vbcast.lane.b32.xlu0 %v2992, %s3009
        %v3011 = vpop.permute.xlu0 %3010
        %s3013 = sor.u32 256, 40
        %3014 = vbcast.lane.b32.xlu0 %v2992, %s3013
        %v3015 = vpop.permute.xlu0 %3014
        %s3017 = sor.u32 256, 48
        %3018 = vbcast.lane.b32.xlu0 %v2992, %s3017
        %v3019 = vpop.permute.xlu0 %3018
        %s3021 = sor.u32 256, 56
        %3022 = vbcast.lane.b32.xlu0 %v2992, %s3021
        %v3023 = vpop.permute.xlu0 %3022
        %s3025 = sor.u32 256, 64
        %3026 = vbcast.lane.b32.xlu0 %v2992, %s3025
        %v3027 = vpop.permute.xlu0 %3026
        %s3029 = sor.u32 256, 72
        %3030 = vbcast.lane.b32.xlu0 %v2992, %s3029
        %v3031 = vpop.permute.xlu0 %3030
        %s3033 = sor.u32 256, 80
        %3034 = vbcast.lane.b32.xlu0 %v2992, %s3033
        %v3035 = vpop.permute.xlu0 %3034
        %s3037 = sor.u32 256, 88
        %3038 = vbcast.lane.b32.xlu0 %v2992, %s3037
        %v3039 = vpop.permute.xlu0 %3038
        %s3041 = sor.u32 256, 96
        %3042 = vbcast.lane.b32.xlu0 %v2992, %s3041
        %v3043 = vpop.permute.xlu0 %3042
        %s3045 = sor.u32 256, 104
        %3046 = vbcast.lane.b32.xlu0 %v2992, %s3045
        %v3047 = vpop.permute.xlu0 %3046
        %s3049 = sor.u32 256, 112
        %3050 = vbcast.lane.b32.xlu0 %v2992, %s3049
        %v3051 = vpop.permute.xlu0 %3050
        %s3053 = sor.u32 256, 120
        %3054 = vbcast.lane.b32.xlu0 %v2992, %s3053
        %v3055 = vpop.permute.xlu0 %3054
        %v3056 = vlaneseq
        %v3057 = vshrl.u32 %v3056, 7
        %v3058 = vsub.s32 4, %v3057
        %v3059 = vrot.slane %v2787, %v3058
        %3061 = vbcast.lane.b32.xlu0 %v3059, 256
        %v3062 = vpop.permute.xlu0 %3061
        %s3064 = sor.u32 256, 8
        %3065 = vbcast.lane.b32.xlu0 %v3059, %s3064
        %v3066 = vpop.permute.xlu0 %3065
        %s3068 = sor.u32 256, 16
        %3069 = vbcast.lane.b32.xlu0 %v3059, %s3068
        %v3070 = vpop.permute.xlu0 %3069
        %s3072 = sor.u32 256, 24
        %3073 = vbcast.lane.b32.xlu0 %v3059, %s3072
        %v3074 = vpop.permute.xlu0 %3073
        %s3076 = sor.u32 256, 32
        %3077 = vbcast.lane.b32.xlu0 %v3059, %s3076
        %v3078 = vpop.permute.xlu0 %3077
        %s3080 = sor.u32 256, 40
        %3081 = vbcast.lane.b32.xlu0 %v3059, %s3080
        %v3082 = vpop.permute.xlu0 %3081
        %s3084 = sor.u32 256, 48
        %3085 = vbcast.lane.b32.xlu0 %v3059, %s3084
        %v3086 = vpop.permute.xlu0 %3085
        %s3088 = sor.u32 256, 56
        %3089 = vbcast.lane.b32.xlu0 %v3059, %s3088
        %v3090 = vpop.permute.xlu0 %3089
        %s3092 = sor.u32 256, 64
        %3093 = vbcast.lane.b32.xlu0 %v3059, %s3092
        %v3094 = vpop.permute.xlu0 %3093
        %s3096 = sor.u32 256, 72
        %3097 = vbcast.lane.b32.xlu0 %v3059, %s3096
        %v3098 = vpop.permute.xlu0 %3097
        %s3100 = sor.u32 256, 80
        %3101 = vbcast.lane.b32.xlu0 %v3059, %s3100
        %v3102 = vpop.permute.xlu0 %3101
        %s3104 = sor.u32 256, 88
        %3105 = vbcast.lane.b32.xlu0 %v3059, %s3104
        %v3106 = vpop.permute.xlu0 %3105
        %s3108 = sor.u32 256, 96
        %3109 = vbcast.lane.b32.xlu0 %v3059, %s3108
        %v3110 = vpop.permute.xlu0 %3109
        %s3112 = sor.u32 256, 104
        %3113 = vbcast.lane.b32.xlu0 %v3059, %s3112
        %v3114 = vpop.permute.xlu0 %3113
        %s3116 = sor.u32 256, 112
        %3117 = vbcast.lane.b32.xlu0 %v3059, %s3116
        %v3118 = vpop.permute.xlu0 %3117
        %s3120 = sor.u32 256, 120
        %3121 = vbcast.lane.b32.xlu0 %v3059, %s3120
        %v3122 = vpop.permute.xlu0 %3121
        %v3123 = vlaneseq
        %v3124 = vshrl.u32 %v3123, 7
        %v3125 = vsub.s32 5, %v3124
        %v3126 = vrot.slane %v2787, %v3125
        %3128 = vbcast.lane.b32.xlu0 %v3126, 256
        %v3129 = vpop.permute.xlu0 %3128
        %s3131 = sor.u32 256, 8
        %3132 = vbcast.lane.b32.xlu0 %v3126, %s3131
        %v3133 = vpop.permute.xlu0 %3132
        %s3135 = sor.u32 256, 16
        %3136 = vbcast.lane.b32.xlu0 %v3126, %s3135
        %v3137 = vpop.permute.xlu0 %3136
        %s3139 = sor.u32 256, 24
        %3140 = vbcast.lane.b32.xlu0 %v3126, %s3139
        %v3141 = vpop.permute.xlu0 %3140
        %s3143 = sor.u32 256, 32
        %3144 = vbcast.lane.b32.xlu0 %v3126, %s3143
        %v3145 = vpop.permute.xlu0 %3144
        %s3147 = sor.u32 256, 40
        %3148 = vbcast.lane.b32.xlu0 %v3126, %s3147
        %v3149 = vpop.permute.xlu0 %3148
        %s3151 = sor.u32 256, 48
        %3152 = vbcast.lane.b32.xlu0 %v3126, %s3151
        %v3153 = vpop.permute.xlu0 %3152
        %s3155 = sor.u32 256, 56
        %3156 = vbcast.lane.b32.xlu0 %v3126, %s3155
        %v3157 = vpop.permute.xlu0 %3156
        %s3159 = sor.u32 256, 64
        %3160 = vbcast.lane.b32.xlu0 %v3126, %s3159
        %v3161 = vpop.permute.xlu0 %3160
        %s3163 = sor.u32 256, 72
        %3164 = vbcast.lane.b32.xlu0 %v3126, %s3163
        %v3165 = vpop.permute.xlu0 %3164
        %s3167 = sor.u32 256, 80
        %3168 = vbcast.lane.b32.xlu0 %v3126, %s3167
        %v3169 = vpop.permute.xlu0 %3168
        %s3171 = sor.u32 256, 88
        %3172 = vbcast.lane.b32.xlu0 %v3126, %s3171
        %v3173 = vpop.permute.xlu0 %3172
        %s3175 = sor.u32 256, 96
        %3176 = vbcast.lane.b32.xlu0 %v3126, %s3175
        %v3177 = vpop.permute.xlu0 %3176
        %s3179 = sor.u32 256, 104
        %3180 = vbcast.lane.b32.xlu0 %v3126, %s3179
        %v3181 = vpop.permute.xlu0 %3180
        %s3183 = sor.u32 256, 112
        %3184 = vbcast.lane.b32.xlu0 %v3126, %s3183
        %v3185 = vpop.permute.xlu0 %3184
        %s3187 = sor.u32 256, 120
        %3188 = vbcast.lane.b32.xlu0 %v3126, %s3187
        %v3189 = vpop.permute.xlu0 %3188
        %v3190 = vlaneseq
        %v3191 = vshrl.u32 %v3190, 7
        %v3192 = vsub.s32 6, %v3191
        %v3193 = vrot.slane %v2787, %v3192
        %3195 = vbcast.lane.b32.xlu0 %v3193, 256
        %v3196 = vpop.permute.xlu0 %3195
        %s3198 = sor.u32 256, 8
        %3199 = vbcast.lane.b32.xlu0 %v3193, %s3198
        %v3200 = vpop.permute.xlu0 %3199
        %s3202 = sor.u32 256, 16
        %3203 = vbcast.lane.b32.xlu0 %v3193, %s3202
        %v3204 = vpop.permute.xlu0 %3203
        %s3206 = sor.u32 256, 24
        %3207 = vbcast.lane.b32.xlu0 %v3193, %s3206
        %v3208 = vpop.permute.xlu0 %3207
        %s3210 = sor.u32 256, 32
        %3211 = vbcast.lane.b32.xlu0 %v3193, %s3210
        %v3212 = vpop.permute.xlu0 %3211
        %s3214 = sor.u32 256, 40
        %3215 = vbcast.lane.b32.xlu0 %v3193, %s3214
        %v3216 = vpop.permute.xlu0 %3215
        %s3218 = sor.u32 256, 48
        %3219 = vbcast.lane.b32.xlu0 %v3193, %s3218
        %v3220 = vpop.permute.xlu0 %3219
        %s3222 = sor.u32 256, 56
        %3223 = vbcast.lane.b32.xlu0 %v3193, %s3222
        %v3224 = vpop.permute.xlu0 %3223
        %s3226 = sor.u32 256, 64
        %3227 = vbcast.lane.b32.xlu0 %v3193, %s3226
        %v3228 = vpop.permute.xlu0 %3227
        %s3230 = sor.u32 256, 72
        %3231 = vbcast.lane.b32.xlu0 %v3193, %s3230
        %v3232 = vpop.permute.xlu0 %3231
        %s3234 = sor.u32 256, 80
        %3235 = vbcast.lane.b32.xlu0 %v3193, %s3234
        %v3236 = vpop.permute.xlu0 %3235
        %s3238 = sor.u32 256, 88
        %3239 = vbcast.lane.b32.xlu0 %v3193, %s3238
        %v3240 = vpop.permute.xlu0 %3239
        %s3242 = sor.u32 256, 96
        %3243 = vbcast.lane.b32.xlu0 %v3193, %s3242
        %v3244 = vpop.permute.xlu0 %3243
        %s3246 = sor.u32 256, 104
        %3247 = vbcast.lane.b32.xlu0 %v3193, %s3246
        %v3248 = vpop.permute.xlu0 %3247
        %s3250 = sor.u32 256, 112
        %3251 = vbcast.lane.b32.xlu0 %v3193, %s3250
        %v3252 = vpop.permute.xlu0 %3251
        %s3254 = sor.u32 256, 120
        %3255 = vbcast.lane.b32.xlu0 %v3193, %s3254
        %v3256 = vpop.permute.xlu0 %3255
        %v3257 = vlaneseq
        %v3258 = vshrl.u32 %v3257, 7
        %v3259 = vsub.s32 7, %v3258
        %v3260 = vrot.slane %v2787, %v3259
        %3262 = vbcast.lane.b32.xlu0 %v3260, 256
        %v3263 = vpop.permute.xlu0 %3262
        %s3265 = sor.u32 256, 8
        %3266 = vbcast.lane.b32.xlu0 %v3260, %s3265
        %v3267 = vpop.permute.xlu0 %3266
        %s3269 = sor.u32 256, 16
        %3270 = vbcast.lane.b32.xlu0 %v3260, %s3269
        %v3271 = vpop.permute.xlu0 %3270
        %s3273 = sor.u32 256, 24
        %3274 = vbcast.lane.b32.xlu0 %v3260, %s3273
        %v3275 = vpop.permute.xlu0 %3274
        %s3277 = sor.u32 256, 32
        %3278 = vbcast.lane.b32.xlu0 %v3260, %s3277
        %v3279 = vpop.permute.xlu0 %3278
        %s3281 = sor.u32 256, 40
        %3282 = vbcast.lane.b32.xlu0 %v3260, %s3281
        %v3283 = vpop.permute.xlu0 %3282
        %s3285 = sor.u32 256, 48
        %3286 = vbcast.lane.b32.xlu0 %v3260, %s3285
        %v3287 = vpop.permute.xlu0 %3286
        %s3289 = sor.u32 256, 56
        %3290 = vbcast.lane.b32.xlu0 %v3260, %s3289
        %v3291 = vpop.permute.xlu0 %3290
        %s3293 = sor.u32 256, 64
        %3294 = vbcast.lane.b32.xlu0 %v3260, %s3293
        %v3295 = vpop.permute.xlu0 %3294
        %s3297 = sor.u32 256, 72
        %3298 = vbcast.lane.b32.xlu0 %v3260, %s3297
        %v3299 = vpop.permute.xlu0 %3298
        %s3301 = sor.u32 256, 80
        %3302 = vbcast.lane.b32.xlu0 %v3260, %s3301
        %v3303 = vpop.permute.xlu0 %3302
        %s3305 = sor.u32 256, 88
        %3306 = vbcast.lane.b32.xlu0 %v3260, %s3305
        %v3307 = vpop.permute.xlu0 %3306
        %s3309 = sor.u32 256, 96
        %3310 = vbcast.lane.b32.xlu0 %v3260, %s3309
        %v3311 = vpop.permute.xlu0 %3310
        %s3313 = sor.u32 256, 104
        %3314 = vbcast.lane.b32.xlu0 %v3260, %s3313
        %v3315 = vpop.permute.xlu0 %3314
        %s3317 = sor.u32 256, 112
        %3318 = vbcast.lane.b32.xlu0 %v3260, %s3317
        %v3319 = vpop.permute.xlu0 %3318
        %s3321 = sor.u32 256, 120
        %3322 = vbcast.lane.b32.xlu0 %v3260, %s3321
        %v3323 = vpop.permute.xlu0 %3322
        %v3324 = vmul.f32 %v2794, %v1341
        %v3325 = vmul.f32 %v2798, %v1343
        %v3326 = vmul.f32 %v2802, %v1345
        %v3327 = vmul.f32 %v2806, %v1347
        %v3328 = vmul.f32 %v2810, %v1349
        %v3329 = vmul.f32 %v2814, %v1351
        %v3330 = vmul.f32 %v2818, %v1353
        %v3331 = vmul.f32 %v2822, %v1355
        %v3332 = vmul.f32 %v2826, %v1357
        %v3333 = vmul.f32 %v2830, %v1359
        %v3334 = vmul.f32 %v2834, %v1361
        %v3335 = vmul.f32 %v2838, %v1363
        %v3336 = vmul.f32 %v2842, %v1365
        %v3337 = vmul.f32 %v2846, %v1367
        %v3338 = vmul.f32 %v2850, %v1369
        %v3339 = vmul.f32 %v2854, %v1371
        %v3340 = vmul.f32 %v2861, %v1373
        %v3341 = vmul.f32 %v2865, %v1375
        %v3342 = vmul.f32 %v2869, %v1377
        %v3343 = vmul.f32 %v2873, %v1379
        %v3344 = vmul.f32 %v2877, %v1381
        %v3345 = vmul.f32 %v2881, %v1383
        %v3346 = vmul.f32 %v2885, %v1385
        %v3347 = vmul.f32 %v2889, %v1387
        %v3348 = vmul.f32 %v2893, %v1389
        %v3349 = vmul.f32 %v2897, %v1391
        %v3350 = vmul.f32 %v2901, %v1393
        %v3351 = vmul.f32 %v2905, %v1395
        %v3352 = vmul.f32 %v2909, %v1397
        %v3353 = vmul.f32 %v2913, %v1399
        %v3354 = vmul.f32 %v2917, %v1401
        %v3355 = vmul.f32 %v2921, %v1403
        %v3356 = vmul.f32 %v2928, %v1405
        %v3357 = vmul.f32 %v2932, %v1407
        %v3358 = vmul.f32 %v2936, %v1409
        %v3359 = vmul.f32 %v2940, %v1411
        %v3360 = vmul.f32 %v2944, %v1413
        %v3361 = vmul.f32 %v2948, %v1415
        %v3362 = vmul.f32 %v2952, %v1417
        %v3363 = vmul.f32 %v2956, %v1419
        %v3364 = vmul.f32 %v2960, %v1421
        %v3365 = vmul.f32 %v2964, %v1423
        %v3366 = vmul.f32 %v2968, %v1425
        %v3367 = vmul.f32 %v2972, %v1427
        %v3368 = vmul.f32 %v2976, %v1429
        %v3369 = vmul.f32 %v2980, %v1431
        %v3370 = vmul.f32 %v2984, %v1433
        %v3371 = vmul.f32 %v2988, %v1435
        %v3372 = vmul.f32 %v2995, %v1437
        %v3373 = vmul.f32 %v2999, %v1439
        %v3374 = vmul.f32 %v3003, %v1441
        %v3375 = vmul.f32 %v3007, %v1443
        %v3376 = vmul.f32 %v3011, %v1445
        %v3377 = vmul.f32 %v3015, %v1447
        %v3378 = vmul.f32 %v3019, %v1449
        %v3379 = vmul.f32 %v3023, %v1451
        %v3380 = vmul.f32 %v3027, %v1453
        %v3381 = vmul.f32 %v3031, %v1455
        %v3382 = vmul.f32 %v3035, %v1457
        %v3383 = vmul.f32 %v3039, %v1459
        %v3384 = vmul.f32 %v3043, %v1461
        %v3385 = vmul.f32 %v3047, %v1463
        %v3386 = vmul.f32 %v3051, %v1465
        %v3387 = vmul.f32 %v3055, %v1467
        %v3388 = vmul.f32 %v3062, %v1469
        %v3389 = vmul.f32 %v3066, %v1471
        %v3390 = vmul.f32 %v3070, %v1473
        %v3391 = vmul.f32 %v3074, %v1475
        %v3392 = vmul.f32 %v3078, %v1477
        %v3393 = vmul.f32 %v3082, %v1479
        %v3394 = vmul.f32 %v3086, %v1481
        %v3395 = vmul.f32 %v3090, %v1483
        %v3396 = vmul.f32 %v3094, %v1485
        %v3397 = vmul.f32 %v3098, %v1487
        %v3398 = vmul.f32 %v3102, %v1489
        %v3399 = vmul.f32 %v3106, %v1491
        %v3400 = vmul.f32 %v3110, %v1493
        %v3401 = vmul.f32 %v3114, %v1495
        %v3402 = vmul.f32 %v3118, %v1497
        %v3403 = vmul.f32 %v3122, %v1499
        %v3404 = vmul.f32 %v3129, %v1501
        %v3405 = vmul.f32 %v3133, %v1503
        %v3406 = vmul.f32 %v3137, %v1505
        %v3407 = vmul.f32 %v3141, %v1507
        %v3408 = vmul.f32 %v3145, %v1509
        %v3409 = vmul.f32 %v3149, %v1511
        %v3410 = vmul.f32 %v3153, %v1513
        %v3411 = vmul.f32 %v3157, %v1515
        %v3412 = vmul.f32 %v3161, %v1517
        %v3413 = vmul.f32 %v3165, %v1519
        %v3414 = vmul.f32 %v3169, %v1521
        %v3415 = vmul.f32 %v3173, %v1523
        %v3416 = vmul.f32 %v3177, %v1525
        %v3417 = vmul.f32 %v3181, %v1527
        %v3418 = vmul.f32 %v3185, %v1529
        %v3419 = vmul.f32 %v3189, %v1531
        %v3420 = vmul.f32 %v3196, %v1533
        %v3421 = vmul.f32 %v3200, %v1535
        %v3422 = vmul.f32 %v3204, %v1537
        %v3423 = vmul.f32 %v3208, %v1539
        %v3424 = vmul.f32 %v3212, %v1541
        %v3425 = vmul.f32 %v3216, %v1543
        %v3426 = vmul.f32 %v3220, %v1545
        %v3427 = vmul.f32 %v3224, %v1547
        %v3428 = vmul.f32 %v3228, %v1549
        %v3429 = vmul.f32 %v3232, %v1551
        %v3430 = vmul.f32 %v3236, %v1553
        %v3431 = vmul.f32 %v3240, %v1555
        %v3432 = vmul.f32 %v3244, %v1557
        %v3433 = vmul.f32 %v3248, %v1559
        %v3434 = vmul.f32 %v3252, %v1561
        %v3435 = vmul.f32 %v3256, %v1563
        %v3436 = vmul.f32 %v3263, %v1565
        %v3437 = vmul.f32 %v3267, %v1567
        %v3438 = vmul.f32 %v3271, %v1569
        %v3439 = vmul.f32 %v3275, %v1571
        %v3440 = vmul.f32 %v3279, %v1573
        %v3441 = vmul.f32 %v3283, %v1575
        %v3442 = vmul.f32 %v3287, %v1577
        %v3443 = vmul.f32 %v3291, %v1579
        %v3444 = vmul.f32 %v3295, %v1581
        %v3445 = vmul.f32 %v3299, %v1583
        %v3446 = vmul.f32 %v3303, %v1585
        %v3447 = vmul.f32 %v3307, %v1587
        %v3448 = vmul.f32 %v3311, %v1589
        %v3449 = vmul.f32 %v3315, %v1591
        %v3450 = vmul.f32 %v3319, %v1593
        %v3451 = vmul.f32 %v3323, %v1595
        %v3452 = vadd.f32 %v3324, %v3325
        %v3453 = vadd.f32 %v3452, %v3326
        %v3454 = vadd.f32 %v3453, %v3327
        %v3455 = vadd.f32 %v3454, %v3328
        %v3456 = vadd.f32 %v3455, %v3329
        %v3457 = vadd.f32 %v3456, %v3330
        %v3458 = vadd.f32 %v3457, %v3331
        %v3459 = vadd.f32 %v3458, %v3332
        %v3460 = vadd.f32 %v3459, %v3333
        %v3461 = vadd.f32 %v3460, %v3334
        %v3462 = vadd.f32 %v3461, %v3335
        %v3463 = vadd.f32 %v3462, %v3336
        %v3464 = vadd.f32 %v3463, %v3337
        %v3465 = vadd.f32 %v3464, %v3338
        %v3466 = vadd.f32 %v3465, %v3339
        %v3467 = vrot.slane %v3466, 4
        %v3468 = vadd.f32 %v3466, %v3467
        %v3469 = vrot.slane %v3468, 2
        %v3470 = vadd.f32 %v3468, %v3469
        %v3471 = vrot.slane %v3470, 1
        %v3472 = vadd.f32 %v3470, %v3471
        %v3473 = vadd.f32 %v3340, %v3341
        %v3474 = vadd.f32 %v3473, %v3342
        %v3475 = vadd.f32 %v3474, %v3343
        %v3476 = vadd.f32 %v3475, %v3344
        %v3477 = vadd.f32 %v3476, %v3345
        %v3478 = vadd.f32 %v3477, %v3346
        %v3479 = vadd.f32 %v3478, %v3347
        %v3480 = vadd.f32 %v3479, %v3348
        %v3481 = vadd.f32 %v3480, %v3349
        %v3482 = vadd.f32 %v3481, %v3350
        %v3483 = vadd.f32 %v3482, %v3351
        %v3484 = vadd.f32 %v3483, %v3352
        %v3485 = vadd.f32 %v3484, %v3353
        %v3486 = vadd.f32 %v3485, %v3354
        %v3487 = vadd.f32 %v3486, %v3355
        %v3488 = vrot.slane %v3487, 4
        %v3489 = vadd.f32 %v3487, %v3488
        %v3490 = vrot.slane %v3489, 2
        %v3491 = vadd.f32 %v3489, %v3490
        %v3492 = vrot.slane %v3491, 1
        %v3493 = vadd.f32 %v3491, %v3492
        %v3494 = vadd.f32 %v3356, %v3357
        %v3495 = vadd.f32 %v3494, %v3358
        %v3496 = vadd.f32 %v3495, %v3359
        %v3497 = vadd.f32 %v3496, %v3360
        %v3498 = vadd.f32 %v3497, %v3361
        %v3499 = vadd.f32 %v3498, %v3362
        %v3500 = vadd.f32 %v3499, %v3363
        %v3501 = vadd.f32 %v3500, %v3364
        %v3502 = vadd.f32 %v3501, %v3365
        %v3503 = vadd.f32 %v3502, %v3366
        %v3504 = vadd.f32 %v3503, %v3367
        %v3505 = vadd.f32 %v3504, %v3368
        %v3506 = vadd.f32 %v3505, %v3369
        %v3507 = vadd.f32 %v3506, %v3370
        %v3508 = vadd.f32 %v3507, %v3371
        %v3509 = vrot.slane %v3508, 4
        %v3510 = vadd.f32 %v3508, %v3509
        %v3511 = vrot.slane %v3510, 2
        %v3512 = vadd.f32 %v3510, %v3511
        %v3513 = vrot.slane %v3512, 1
        %v3514 = vadd.f32 %v3512, %v3513
        %v3515 = vadd.f32 %v3372, %v3373
        %v3516 = vadd.f32 %v3515, %v3374
        %v3517 = vadd.f32 %v3516, %v3375
        %v3518 = vadd.f32 %v3517, %v3376
        %v3519 = vadd.f32 %v3518, %v3377
        %v3520 = vadd.f32 %v3519, %v3378
        %v3521 = vadd.f32 %v3520, %v3379
        %v3522 = vadd.f32 %v3521, %v3380
        %v3523 = vadd.f32 %v3522, %v3381
        %v3524 = vadd.f32 %v3523, %v3382
        %v3525 = vadd.f32 %v3524, %v3383
        %v3526 = vadd.f32 %v3525, %v3384
        %v3527 = vadd.f32 %v3526, %v3385
        %v3528 = vadd.f32 %v3527, %v3386
        %v3529 = vadd.f32 %v3528, %v3387
        %v3530 = vrot.slane %v3529, 4
        %v3531 = vadd.f32 %v3529, %v3530
        %v3532 = vrot.slane %v3531, 2
        %v3533 = vadd.f32 %v3531, %v3532
        %v3534 = vrot.slane %v3533, 1
        %v3535 = vadd.f32 %v3533, %v3534
        %v3536 = vadd.f32 %v3388, %v3389
        %v3537 = vadd.f32 %v3536, %v3390
        %v3538 = vadd.f32 %v3537, %v3391
        %v3539 = vadd.f32 %v3538, %v3392
        %v3540 = vadd.f32 %v3539, %v3393
        %v3541 = vadd.f32 %v3540, %v3394
        %v3542 = vadd.f32 %v3541, %v3395
        %v3543 = vadd.f32 %v3542, %v3396
        %v3544 = vadd.f32 %v3543, %v3397
        %v3545 = vadd.f32 %v3544, %v3398
        %v3546 = vadd.f32 %v3545, %v3399
        %v3547 = vadd.f32 %v3546, %v3400
        %v3548 = vadd.f32 %v3547, %v3401
        %v3549 = vadd.f32 %v3548, %v3402
        %v3550 = vadd.f32 %v3549, %v3403
        %v3551 = vrot.slane %v3550, 4
        %v3552 = vadd.f32 %v3550, %v3551
        %v3553 = vrot.slane %v3552, 2
        %v3554 = vadd.f32 %v3552, %v3553
        %v3555 = vrot.slane %v3554, 1
        %v3556 = vadd.f32 %v3554, %v3555
        %v3557 = vadd.f32 %v3404, %v3405
        %v3558 = vadd.f32 %v3557, %v3406
        %v3559 = vadd.f32 %v3558, %v3407
        %v3560 = vadd.f32 %v3559, %v3408
        %v3561 = vadd.f32 %v3560, %v3409
        %v3562 = vadd.f32 %v3561, %v3410
        %v3563 = vadd.f32 %v3562, %v3411
        %v3564 = vadd.f32 %v3563, %v3412
        %v3565 = vadd.f32 %v3564, %v3413
        %v3566 = vadd.f32 %v3565, %v3414
        %v3567 = vadd.f32 %v3566, %v3415
        %v3568 = vadd.f32 %v3567, %v3416
        %v3569 = vadd.f32 %v3568, %v3417
        %v3570 = vadd.f32 %v3569, %v3418
        %v3571 = vadd.f32 %v3570, %v3419
        %v3572 = vrot.slane %v3571, 4
        %v3573 = vadd.f32 %v3571, %v3572
        %v3574 = vrot.slane %v3573, 2
        %v3575 = vadd.f32 %v3573, %v3574
        %v3576 = vrot.slane %v3575, 1
        %v3577 = vadd.f32 %v3575, %v3576
        %v3578 = vadd.f32 %v3420, %v3421
        %v3579 = vadd.f32 %v3578, %v3422
        %v3580 = vadd.f32 %v3579, %v3423
        %v3581 = vadd.f32 %v3580, %v3424
        %v3582 = vadd.f32 %v3581, %v3425
        %v3583 = vadd.f32 %v3582, %v3426
        %v3584 = vadd.f32 %v3583, %v3427
        %v3585 = vadd.f32 %v3584, %v3428
        %v3586 = vadd.f32 %v3585, %v3429
        %v3587 = vadd.f32 %v3586, %v3430
        %v3588 = vadd.f32 %v3587, %v3431
        %v3589 = vadd.f32 %v3588, %v3432
        %v3590 = vadd.f32 %v3589, %v3433
        %v3591 = vadd.f32 %v3590, %v3434
        %v3592 = vadd.f32 %v3591, %v3435
        %v3593 = vrot.slane %v3592, 4
        %v3594 = vadd.f32 %v3592, %v3593
        %v3595 = vrot.slane %v3594, 2
        %v3596 = vadd.f32 %v3594, %v3595
        %v3597 = vrot.slane %v3596, 1
        %v3598 = vadd.f32 %v3596, %v3597
        %v3599 = vadd.f32 %v3436, %v3437
        %v3600 = vadd.f32 %v3599, %v3438
        %v3601 = vadd.f32 %v3600, %v3439
        %v3602 = vadd.f32 %v3601, %v3440
        %v3603 = vadd.f32 %v3602, %v3441
        %v3604 = vadd.f32 %v3603, %v3442
        %v3605 = vadd.f32 %v3604, %v3443
        %v3606 = vadd.f32 %v3605, %v3444
        %v3607 = vadd.f32 %v3606, %v3445
        %v3608 = vadd.f32 %v3607, %v3446
        %v3609 = vadd.f32 %v3608, %v3447
        %v3610 = vadd.f32 %v3609, %v3448
        %v3611 = vadd.f32 %v3610, %v3449
        %v3612 = vadd.f32 %v3611, %v3450
        %v3613 = vadd.f32 %v3612, %v3451
        %v3614 = vrot.slane %v3613, 4
        %v3615 = vadd.f32 %v3613, %v3614
        %v3616 = vrot.slane %v3615, 2
        %v3617 = vadd.f32 %v3615, %v3616
        %v3618 = vrot.slane %v3617, 1
        %v3619 = vadd.f32 %v3617, %v3618
        %v3620 = vmul.f32 %v3472, %v333
        %v3621 = vmul.f32 %v3493, %v333
        %v3622 = vmul.f32 %v3514, %v333
        %v3623 = vmul.f32 %v3535, %v333
        %v3624 = vmul.f32 %v3556, %v333
        %v3625 = vmul.f32 %v3577, %v333
        %v3626 = vmul.f32 %v3598, %v333
        %v3627 = vmul.f32 %v3619, %v333
        %v3636 = vrot.slane %v3621, 7
        %v3637 = vsel %vm2772, %v3636, %v3620
        %v3638 = vrot.slane %v3622, 6
        %v3639 = vsel %vm2774, %v3638, %v3637
        %v3640 = vrot.slane %v3623, 5
        %v3641 = vsel %vm2776, %v3640, %v3639
        %v3642 = vrot.slane %v3624, 4
        %v3643 = vsel %vm2778, %v3642, %v3641
        %v3644 = vrot.slane %v3625, 3
        %v3645 = vsel %vm2780, %v3644, %v3643
        %v3646 = vrot.slane %v3626, 2
        %v3647 = vsel %vm2782, %v3646, %v3645
        %v3648 = vrot.slane %v3627, 1
        %v3649 = vsel %vm2784, %v3648, %v3647
        %3651 = vst [vmem:[%s323] sm:$0xff] %v3649
        %v3652 = vlaneseq
        %v3653 = vshrl.u32 %v3652, 7
        %v3654 = vsub.s32 0, %v3653
        %v3655 = vrot.slane %v579, %v3654
        %3657 = vbcast.lane.b32.xlu0 %v3655, 256
        %v3658 = vpop.permute.xlu0 %3657
        %s3660 = sor.u32 256, 8
        %3661 = vbcast.lane.b32.xlu0 %v3655, %s3660
        %v3662 = vpop.permute.xlu0 %3661
        %s3664 = sor.u32 256, 16
        %3665 = vbcast.lane.b32.xlu0 %v3655, %s3664
        %v3666 = vpop.permute.xlu0 %3665
        %s3668 = sor.u32 256, 24
        %3669 = vbcast.lane.b32.xlu0 %v3655, %s3668
        %v3670 = vpop.permute.xlu0 %3669
        %s3672 = sor.u32 256, 32
        %3673 = vbcast.lane.b32.xlu0 %v3655, %s3672
        %v3674 = vpop.permute.xlu0 %3673
        %s3676 = sor.u32 256, 40
        %3677 = vbcast.lane.b32.xlu0 %v3655, %s3676
        %v3678 = vpop.permute.xlu0 %3677
        %s3680 = sor.u32 256, 48
        %3681 = vbcast.lane.b32.xlu0 %v3655, %s3680
        %v3682 = vpop.permute.xlu0 %3681
        %s3684 = sor.u32 256, 56
        %3685 = vbcast.lane.b32.xlu0 %v3655, %s3684
        %v3686 = vpop.permute.xlu0 %3685
        %s3688 = sor.u32 256, 64
        %3689 = vbcast.lane.b32.xlu0 %v3655, %s3688
        %v3690 = vpop.permute.xlu0 %3689
        %s3692 = sor.u32 256, 72
        %3693 = vbcast.lane.b32.xlu0 %v3655, %s3692
        %v3694 = vpop.permute.xlu0 %3693
        %s3696 = sor.u32 256, 80
        %3697 = vbcast.lane.b32.xlu0 %v3655, %s3696
        %v3698 = vpop.permute.xlu0 %3697
        %s3700 = sor.u32 256, 88
        %3701 = vbcast.lane.b32.xlu0 %v3655, %s3700
        %v3702 = vpop.permute.xlu0 %3701
        %s3704 = sor.u32 256, 96
        %3705 = vbcast.lane.b32.xlu0 %v3655, %s3704
        %v3706 = vpop.permute.xlu0 %3705
        %s3708 = sor.u32 256, 104
        %3709 = vbcast.lane.b32.xlu0 %v3655, %s3708
        %v3710 = vpop.permute.xlu0 %3709
        %s3712 = sor.u32 256, 112
        %3713 = vbcast.lane.b32.xlu0 %v3655, %s3712
        %v3714 = vpop.permute.xlu0 %3713
        %s3716 = sor.u32 256, 120
        %3717 = vbcast.lane.b32.xlu0 %v3655, %s3716
        %v3718 = vpop.permute.xlu0 %3717
        %v3719 = vlaneseq
        %v3720 = vshrl.u32 %v3719, 7
        %v3721 = vsub.s32 1, %v3720
        %v3722 = vrot.slane %v579, %v3721
        %3724 = vbcast.lane.b32.xlu0 %v3722, 256
        %v3725 = vpop.permute.xlu0 %3724
        %s3727 = sor.u32 256, 8
        %3728 = vbcast.lane.b32.xlu0 %v3722, %s3727
        %v3729 = vpop.permute.xlu0 %3728
        %s3731 = sor.u32 256, 16
        %3732 = vbcast.lane.b32.xlu0 %v3722, %s3731
        %v3733 = vpop.permute.xlu0 %3732
        %s3735 = sor.u32 256, 24
        %3736 = vbcast.lane.b32.xlu0 %v3722, %s3735
        %v3737 = vpop.permute.xlu0 %3736
        %s3739 = sor.u32 256, 32
        %3740 = vbcast.lane.b32.xlu0 %v3722, %s3739
        %v3741 = vpop.permute.xlu0 %3740
        %s3743 = sor.u32 256, 40
        %3744 = vbcast.lane.b32.xlu0 %v3722, %s3743
        %v3745 = vpop.permute.xlu0 %3744
        %s3747 = sor.u32 256, 48
        %3748 = vbcast.lane.b32.xlu0 %v3722, %s3747
        %v3749 = vpop.permute.xlu0 %3748
        %s3751 = sor.u32 256, 56
        %3752 = vbcast.lane.b32.xlu0 %v3722, %s3751
        %v3753 = vpop.permute.xlu0 %3752
        %s3755 = sor.u32 256, 64
        %3756 = vbcast.lane.b32.xlu0 %v3722, %s3755
        %v3757 = vpop.permute.xlu0 %3756
        %s3759 = sor.u32 256, 72
        %3760 = vbcast.lane.b32.xlu0 %v3722, %s3759
        %v3761 = vpop.permute.xlu0 %3760
        %s3763 = sor.u32 256, 80
        %3764 = vbcast.lane.b32.xlu0 %v3722, %s3763
        %v3765 = vpop.permute.xlu0 %3764
        %s3767 = sor.u32 256, 88
        %3768 = vbcast.lane.b32.xlu0 %v3722, %s3767
        %v3769 = vpop.permute.xlu0 %3768
        %s3771 = sor.u32 256, 96
        %3772 = vbcast.lane.b32.xlu0 %v3722, %s3771
        %v3773 = vpop.permute.xlu0 %3772
        %s3775 = sor.u32 256, 104
        %3776 = vbcast.lane.b32.xlu0 %v3722, %s3775
        %v3777 = vpop.permute.xlu0 %3776
        %s3779 = sor.u32 256, 112
        %3780 = vbcast.lane.b32.xlu0 %v3722, %s3779
        %v3781 = vpop.permute.xlu0 %3780
        %s3783 = sor.u32 256, 120
        %3784 = vbcast.lane.b32.xlu0 %v3722, %s3783
        %v3785 = vpop.permute.xlu0 %3784
        %v3786 = vlaneseq
        %v3787 = vshrl.u32 %v3786, 7
        %v3788 = vsub.s32 2, %v3787
        %v3789 = vrot.slane %v579, %v3788
        %3791 = vbcast.lane.b32.xlu0 %v3789, 256
        %v3792 = vpop.permute.xlu0 %3791
        %s3794 = sor.u32 256, 8
        %3795 = vbcast.lane.b32.xlu0 %v3789, %s3794
        %v3796 = vpop.permute.xlu0 %3795
        %s3798 = sor.u32 256, 16
        %3799 = vbcast.lane.b32.xlu0 %v3789, %s3798
        %v3800 = vpop.permute.xlu0 %3799
        %s3802 = sor.u32 256, 24
        %3803 = vbcast.lane.b32.xlu0 %v3789, %s3802
        %v3804 = vpop.permute.xlu0 %3803
        %s3806 = sor.u32 256, 32
        %3807 = vbcast.lane.b32.xlu0 %v3789, %s3806
        %v3808 = vpop.permute.xlu0 %3807
        %s3810 = sor.u32 256, 40
        %3811 = vbcast.lane.b32.xlu0 %v3789, %s3810
        %v3812 = vpop.permute.xlu0 %3811
        %s3814 = sor.u32 256, 48
        %3815 = vbcast.lane.b32.xlu0 %v3789, %s3814
        %v3816 = vpop.permute.xlu0 %3815
        %s3818 = sor.u32 256, 56
        %3819 = vbcast.lane.b32.xlu0 %v3789, %s3818
        %v3820 = vpop.permute.xlu0 %3819
        %s3822 = sor.u32 256, 64
        %3823 = vbcast.lane.b32.xlu0 %v3789, %s3822
        %v3824 = vpop.permute.xlu0 %3823
        %s3826 = sor.u32 256, 72
        %3827 = vbcast.lane.b32.xlu0 %v3789, %s3826
        %v3828 = vpop.permute.xlu0 %3827
        %s3830 = sor.u32 256, 80
        %3831 = vbcast.lane.b32.xlu0 %v3789, %s3830
        %v3832 = vpop.permute.xlu0 %3831
        %s3834 = sor.u32 256, 88
        %3835 = vbcast.lane.b32.xlu0 %v3789, %s3834
        %v3836 = vpop.permute.xlu0 %3835
        %s3838 = sor.u32 256, 96
        %3839 = vbcast.lane.b32.xlu0 %v3789, %s3838
        %v3840 = vpop.permute.xlu0 %3839
        %s3842 = sor.u32 256, 104
        %3843 = vbcast.lane.b32.xlu0 %v3789, %s3842
        %v3844 = vpop.permute.xlu0 %3843
        %s3846 = sor.u32 256, 112
        %3847 = vbcast.lane.b32.xlu0 %v3789, %s3846
        %v3848 = vpop.permute.xlu0 %3847
        %s3850 = sor.u32 256, 120
        %3851 = vbcast.lane.b32.xlu0 %v3789, %s3850
        %v3852 = vpop.permute.xlu0 %3851
        %v3853 = vlaneseq
        %v3854 = vshrl.u32 %v3853, 7
        %v3855 = vsub.s32 3, %v3854
        %v3856 = vrot.slane %v579, %v3855
        %3858 = vbcast.lane.b32.xlu0 %v3856, 256
        %v3859 = vpop.permute.xlu0 %3858
        %s3861 = sor.u32 256, 8
        %3862 = vbcast.lane.b32.xlu0 %v3856, %s3861
        %v3863 = vpop.permute.xlu0 %3862
        %s3865 = sor.u32 256, 16
        %3866 = vbcast.lane.b32.xlu0 %v3856, %s3865
        %v3867 = vpop.permute.xlu0 %3866
        %s3869 = sor.u32 256, 24
        %3870 = vbcast.lane.b32.xlu0 %v3856, %s3869
        %v3871 = vpop.permute.xlu0 %3870
        %s3873 = sor.u32 256, 32
        %3874 = vbcast.lane.b32.xlu0 %v3856, %s3873
        %v3875 = vpop.permute.xlu0 %3874
        %s3877 = sor.u32 256, 40
        %3878 = vbcast.lane.b32.xlu0 %v3856, %s3877
        %v3879 = vpop.permute.xlu0 %3878
        %s3881 = sor.u32 256, 48
        %3882 = vbcast.lane.b32.xlu0 %v3856, %s3881
        %v3883 = vpop.permute.xlu0 %3882
        %s3885 = sor.u32 256, 56
        %3886 = vbcast.lane.b32.xlu0 %v3856, %s3885
        %v3887 = vpop.permute.xlu0 %3886
        %s3889 = sor.u32 256, 64
        %3890 = vbcast.lane.b32.xlu0 %v3856, %s3889
        %v3891 = vpop.permute.xlu0 %3890
        %s3893 = sor.u32 256, 72
        %3894 = vbcast.lane.b32.xlu0 %v3856, %s3893
        %v3895 = vpop.permute.xlu0 %3894
        %s3897 = sor.u32 256, 80
        %3898 = vbcast.lane.b32.xlu0 %v3856, %s3897
        %v3899 = vpop.permute.xlu0 %3898
        %s3901 = sor.u32 256, 88
        %3902 = vbcast.lane.b32.xlu0 %v3856, %s3901
        %v3903 = vpop.permute.xlu0 %3902
        %s3905 = sor.u32 256, 96
        %3906 = vbcast.lane.b32.xlu0 %v3856, %s3905
        %v3907 = vpop.permute.xlu0 %3906
        %s3909 = sor.u32 256, 104
        %3910 = vbcast.lane.b32.xlu0 %v3856, %s3909
        %v3911 = vpop.permute.xlu0 %3910
        %s3913 = sor.u32 256, 112
        %3914 = vbcast.lane.b32.xlu0 %v3856, %s3913
        %v3915 = vpop.permute.xlu0 %3914
        %s3917 = sor.u32 256, 120
        %3918 = vbcast.lane.b32.xlu0 %v3856, %s3917
        %v3919 = vpop.permute.xlu0 %3918
        %v3920 = vlaneseq
        %v3921 = vshrl.u32 %v3920, 7
        %v3922 = vsub.s32 4, %v3921
        %v3923 = vrot.slane %v579, %v3922
        %3925 = vbcast.lane.b32.xlu0 %v3923, 256
        %v3926 = vpop.permute.xlu0 %3925
        %s3928 = sor.u32 256, 8
        %3929 = vbcast.lane.b32.xlu0 %v3923, %s3928
        %v3930 = vpop.permute.xlu0 %3929
        %s3932 = sor.u32 256, 16
        %3933 = vbcast.lane.b32.xlu0 %v3923, %s3932
        %v3934 = vpop.permute.xlu0 %3933
        %s3936 = sor.u32 256, 24
        %3937 = vbcast.lane.b32.xlu0 %v3923, %s3936
        %v3938 = vpop.permute.xlu0 %3937
        %s3940 = sor.u32 256, 32
        %3941 = vbcast.lane.b32.xlu0 %v3923, %s3940
        %v3942 = vpop.permute.xlu0 %3941
        %s3944 = sor.u32 256, 40
        %3945 = vbcast.lane.b32.xlu0 %v3923, %s3944
        %v3946 = vpop.permute.xlu0 %3945
        %s3948 = sor.u32 256, 48
        %3949 = vbcast.lane.b32.xlu0 %v3923, %s3948
        %v3950 = vpop.permute.xlu0 %3949
        %s3952 = sor.u32 256, 56
        %3953 = vbcast.lane.b32.xlu0 %v3923, %s3952
        %v3954 = vpop.permute.xlu0 %3953
        %s3956 = sor.u32 256, 64
        %3957 = vbcast.lane.b32.xlu0 %v3923, %s3956
        %v3958 = vpop.permute.xlu0 %3957
        %s3960 = sor.u32 256, 72
        %3961 = vbcast.lane.b32.xlu0 %v3923, %s3960
        %v3962 = vpop.permute.xlu0 %3961
        %s3964 = sor.u32 256, 80
        %3965 = vbcast.lane.b32.xlu0 %v3923, %s3964
        %v3966 = vpop.permute.xlu0 %3965
        %s3968 = sor.u32 256, 88
        %3969 = vbcast.lane.b32.xlu0 %v3923, %s3968
        %v3970 = vpop.permute.xlu0 %3969
        %s3972 = sor.u32 256, 96
        %3973 = vbcast.lane.b32.xlu0 %v3923, %s3972
        %v3974 = vpop.permute.xlu0 %3973
        %s3976 = sor.u32 256, 104
        %3977 = vbcast.lane.b32.xlu0 %v3923, %s3976
        %v3978 = vpop.permute.xlu0 %3977
        %s3980 = sor.u32 256, 112
        %3981 = vbcast.lane.b32.xlu0 %v3923, %s3980
        %v3982 = vpop.permute.xlu0 %3981
        %s3984 = sor.u32 256, 120
        %3985 = vbcast.lane.b32.xlu0 %v3923, %s3984
        %v3986 = vpop.permute.xlu0 %3985
        %v3987 = vlaneseq
        %v3988 = vshrl.u32 %v3987, 7
        %v3989 = vsub.s32 5, %v3988
        %v3990 = vrot.slane %v579, %v3989
        %3992 = vbcast.lane.b32.xlu0 %v3990, 256
        %v3993 = vpop.permute.xlu0 %3992
        %s3995 = sor.u32 256, 8
        %3996 = vbcast.lane.b32.xlu0 %v3990, %s3995
        %v3997 = vpop.permute.xlu0 %3996
        %s3999 = sor.u32 256, 16
        %4000 = vbcast.lane.b32.xlu0 %v3990, %s3999
        %v4001 = vpop.permute.xlu0 %4000
        %s4003 = sor.u32 256, 24
        %4004 = vbcast.lane.b32.xlu0 %v3990, %s4003
        %v4005 = vpop.permute.xlu0 %4004
        %s4007 = sor.u32 256, 32
        %4008 = vbcast.lane.b32.xlu0 %v3990, %s4007
        %v4009 = vpop.permute.xlu0 %4008
        %s4011 = sor.u32 256, 40
        %4012 = vbcast.lane.b32.xlu0 %v3990, %s4011
        %v4013 = vpop.permute.xlu0 %4012
        %s4015 = sor.u32 256, 48
        %4016 = vbcast.lane.b32.xlu0 %v3990, %s4015
        %v4017 = vpop.permute.xlu0 %4016
        %s4019 = sor.u32 256, 56
        %4020 = vbcast.lane.b32.xlu0 %v3990, %s4019
        %v4021 = vpop.permute.xlu0 %4020
        %s4023 = sor.u32 256, 64
        %4024 = vbcast.lane.b32.xlu0 %v3990, %s4023
        %v4025 = vpop.permute.xlu0 %4024
        %s4027 = sor.u32 256, 72
        %4028 = vbcast.lane.b32.xlu0 %v3990, %s4027
        %v4029 = vpop.permute.xlu0 %4028
        %s4031 = sor.u32 256, 80
        %4032 = vbcast.lane.b32.xlu0 %v3990, %s4031
        %v4033 = vpop.permute.xlu0 %4032
        %s4035 = sor.u32 256, 88
        %4036 = vbcast.lane.b32.xlu0 %v3990, %s4035
        %v4037 = vpop.permute.xlu0 %4036
        %s4039 = sor.u32 256, 96
        %4040 = vbcast.lane.b32.xlu0 %v3990, %s4039
        %v4041 = vpop.permute.xlu0 %4040
        %s4043 = sor.u32 256, 104
        %4044 = vbcast.lane.b32.xlu0 %v3990, %s4043
        %v4045 = vpop.permute.xlu0 %4044
        %s4047 = sor.u32 256, 112
        %4048 = vbcast.lane.b32.xlu0 %v3990, %s4047
        %v4049 = vpop.permute.xlu0 %4048
        %s4051 = sor.u32 256, 120
        %4052 = vbcast.lane.b32.xlu0 %v3990, %s4051
        %v4053 = vpop.permute.xlu0 %4052
        %v4054 = vlaneseq
        %v4055 = vshrl.u32 %v4054, 7
        %v4056 = vsub.s32 6, %v4055
        %v4057 = vrot.slane %v579, %v4056
        %4059 = vbcast.lane.b32.xlu0 %v4057, 256
        %v4060 = vpop.permute.xlu0 %4059
        %s4062 = sor.u32 256, 8
        %4063 = vbcast.lane.b32.xlu0 %v4057, %s4062
        %v4064 = vpop.permute.xlu0 %4063
        %s4066 = sor.u32 256, 16
        %4067 = vbcast.lane.b32.xlu0 %v4057, %s4066
        %v4068 = vpop.permute.xlu0 %4067
        %s4070 = sor.u32 256, 24
        %4071 = vbcast.lane.b32.xlu0 %v4057, %s4070
        %v4072 = vpop.permute.xlu0 %4071
        %s4074 = sor.u32 256, 32
        %4075 = vbcast.lane.b32.xlu0 %v4057, %s4074
        %v4076 = vpop.permute.xlu0 %4075
        %s4078 = sor.u32 256, 40
        %4079 = vbcast.lane.b32.xlu0 %v4057, %s4078
        %v4080 = vpop.permute.xlu0 %4079
        %s4082 = sor.u32 256, 48
        %4083 = vbcast.lane.b32.xlu0 %v4057, %s4082
        %v4084 = vpop.permute.xlu0 %4083
        %s4086 = sor.u32 256, 56
        %4087 = vbcast.lane.b32.xlu0 %v4057, %s4086
        %v4088 = vpop.permute.xlu0 %4087
        %s4090 = sor.u32 256, 64
        %4091 = vbcast.lane.b32.xlu0 %v4057, %s4090
        %v4092 = vpop.permute.xlu0 %4091
        %s4094 = sor.u32 256, 72
        %4095 = vbcast.lane.b32.xlu0 %v4057, %s4094
        %v4096 = vpop.permute.xlu0 %4095
        %s4098 = sor.u32 256, 80
        %4099 = vbcast.lane.b32.xlu0 %v4057, %s4098
        %v4100 = vpop.permute.xlu0 %4099
        %s4102 = sor.u32 256, 88
        %4103 = vbcast.lane.b32.xlu0 %v4057, %s4102
        %v4104 = vpop.permute.xlu0 %4103
        %s4106 = sor.u32 256, 96
        %4107 = vbcast.lane.b32.xlu0 %v4057, %s4106
        %v4108 = vpop.permute.xlu0 %4107
        %s4110 = sor.u32 256, 104
        %4111 = vbcast.lane.b32.xlu0 %v4057, %s4110
        %v4112 = vpop.permute.xlu0 %4111
        %s4114 = sor.u32 256, 112
        %4115 = vbcast.lane.b32.xlu0 %v4057, %s4114
        %v4116 = vpop.permute.xlu0 %4115
        %s4118 = sor.u32 256, 120
        %4119 = vbcast.lane.b32.xlu0 %v4057, %s4118
        %v4120 = vpop.permute.xlu0 %4119
        %v4121 = vlaneseq
        %v4122 = vshrl.u32 %v4121, 7
        %v4123 = vsub.s32 7, %v4122
        %v4124 = vrot.slane %v579, %v4123
        %4126 = vbcast.lane.b32.xlu0 %v4124, 256
        %v4127 = vpop.permute.xlu0 %4126
        %s4129 = sor.u32 256, 8
        %4130 = vbcast.lane.b32.xlu0 %v4124, %s4129
        %v4131 = vpop.permute.xlu0 %4130
        %s4133 = sor.u32 256, 16
        %4134 = vbcast.lane.b32.xlu0 %v4124, %s4133
        %v4135 = vpop.permute.xlu0 %4134
        %s4137 = sor.u32 256, 24
        %4138 = vbcast.lane.b32.xlu0 %v4124, %s4137
        %v4139 = vpop.permute.xlu0 %4138
        %s4141 = sor.u32 256, 32
        %4142 = vbcast.lane.b32.xlu0 %v4124, %s4141
        %v4143 = vpop.permute.xlu0 %4142
        %s4145 = sor.u32 256, 40
        %4146 = vbcast.lane.b32.xlu0 %v4124, %s4145
        %v4147 = vpop.permute.xlu0 %4146
        %s4149 = sor.u32 256, 48
        %4150 = vbcast.lane.b32.xlu0 %v4124, %s4149
        %v4151 = vpop.permute.xlu0 %4150
        %s4153 = sor.u32 256, 56
        %4154 = vbcast.lane.b32.xlu0 %v4124, %s4153
        %v4155 = vpop.permute.xlu0 %4154
        %s4157 = sor.u32 256, 64
        %4158 = vbcast.lane.b32.xlu0 %v4124, %s4157
        %v4159 = vpop.permute.xlu0 %4158
        %s4161 = sor.u32 256, 72
        %4162 = vbcast.lane.b32.xlu0 %v4124, %s4161
        %v4163 = vpop.permute.xlu0 %4162
        %s4165 = sor.u32 256, 80
        %4166 = vbcast.lane.b32.xlu0 %v4124, %s4165
        %v4167 = vpop.permute.xlu0 %4166
        %s4169 = sor.u32 256, 88
        %4170 = vbcast.lane.b32.xlu0 %v4124, %s4169
        %v4171 = vpop.permute.xlu0 %4170
        %s4173 = sor.u32 256, 96
        %4174 = vbcast.lane.b32.xlu0 %v4124, %s4173
        %v4175 = vpop.permute.xlu0 %4174
        %s4177 = sor.u32 256, 104
        %4178 = vbcast.lane.b32.xlu0 %v4124, %s4177
        %v4179 = vpop.permute.xlu0 %4178
        %s4181 = sor.u32 256, 112
        %4182 = vbcast.lane.b32.xlu0 %v4124, %s4181
        %v4183 = vpop.permute.xlu0 %4182
        %s4185 = sor.u32 256, 120
        %4186 = vbcast.lane.b32.xlu0 %v4124, %s4185
        %v4187 = vpop.permute.xlu0 %4186
        %v4189 = vcombine.high %v585, %v585
        %v4191 = vunpack.c.l.s4 1966171168
        %v4192 = vunpack.c.0.s8 %v4191
        %v4193 = vlaneseq
        %v4194 = vshrl.u32 %v4193, 7
        %v4195 = vsub.s32 %v4192, %v4194
        %v4196 = vrot.slane %v585, %v4195
        %v4198 = vunpack.c.l.s4 1966171168
        %v4199 = vunpack.c.0.s8 %v4198
        %v4200 = vlaneseq
        %v4201 = vshrl.u32 %v4200, 7
        %v4202 = vsub.s32 %v4199, %v4201
        %v4203 = vrot.slane %v4189, %v4202
        %v4204 = vcombine.high %v4196, %v4196
        %v4205 = vcombine.high %v4203, %v4203
        %v4207 = vunpack.c.l.s4 1966171168
        %v4208 = vunpack.c.0.s8 %v4207
        %v4209 = vlaneseq
        %v4210 = vshrl.u32 %v4209, 7
        %v4211 = vsub.s32 %v4208, %v4210
        %v4212 = vrot.slane %v4196, %v4211
        %v4214 = vunpack.c.l.s4 1966171168
        %v4215 = vunpack.c.0.s8 %v4214
        %v4216 = vlaneseq
        %v4217 = vshrl.u32 %v4216, 7
        %v4218 = vsub.s32 %v4215, %v4217
        %v4219 = vrot.slane %v4203, %v4218
        %v4221 = vunpack.c.l.s4 1966171168
        %v4222 = vunpack.c.0.s8 %v4221
        %v4223 = vlaneseq
        %v4224 = vshrl.u32 %v4223, 7
        %v4225 = vsub.s32 %v4222, %v4224
        %v4226 = vrot.slane %v4204, %v4225
        %v4228 = vunpack.c.l.s4 1966171168
        %v4229 = vunpack.c.0.s8 %v4228
        %v4230 = vlaneseq
        %v4231 = vshrl.u32 %v4230, 7
        %v4232 = vsub.s32 %v4229, %v4231
        %v4233 = vrot.slane %v4205, %v4232
        %v4234 = vcombine.high %v4212, %v4212
        %v4235 = vcombine.high %v4219, %v4219
        %v4236 = vcombine.high %v4226, %v4226
        %v4237 = vcombine.high %v4233, %v4233
        %v4238 = vlaneseq
        %v4239 = vshrl.u32 %v4238, 7
        %v4240 = vsub.s32 0, %v4239
        %v4241 = vrot.slane %v4212, %v4240
        %v4242 = vlaneseq
        %v4243 = vshrl.u32 %v4242, 7
        %v4244 = vsub.s32 0, %v4243
        %v4245 = vrot.slane %v4226, %v4244
        %v4246 = vlaneseq
        %v4247 = vshrl.u32 %v4246, 7
        %v4248 = vsub.s32 0, %v4247
        %v4249 = vrot.slane %v4234, %v4248
        %v4250 = vlaneseq
        %v4251 = vshrl.u32 %v4250, 7
        %v4252 = vsub.s32 0, %v4251
        %v4253 = vrot.slane %v4236, %v4252
        %v4254 = vlaneseq
        %v4255 = vshrl.u32 %v4254, 7
        %v4256 = vsub.s32 0, %v4255
        %v4257 = vrot.slane %v4219, %v4256
        %v4258 = vlaneseq
        %v4259 = vshrl.u32 %v4258, 7
        %v4260 = vsub.s32 0, %v4259
        %v4261 = vrot.slane %v4233, %v4260
        %v4262 = vlaneseq
        %v4263 = vshrl.u32 %v4262, 7
        %v4264 = vsub.s32 0, %v4263
        %v4265 = vrot.slane %v4235, %v4264
        %v4266 = vlaneseq
        %v4267 = vshrl.u32 %v4266, 7
        %v4268 = vsub.s32 0, %v4267
        %v4269 = vrot.slane %v4237, %v4268
        %v4278 = vmul.f32 %v3658, %v4241
        %v4279 = vmul.f32 %v3662, %v4241
        %v4280 = vmul.f32 %v3666, %v4241
        %v4281 = vmul.f32 %v3670, %v4241
        %v4282 = vmul.f32 %v3674, %v4241
        %v4283 = vmul.f32 %v3678, %v4241
        %v4284 = vmul.f32 %v3682, %v4241
        %v4285 = vmul.f32 %v3686, %v4241
        %v4286 = vmul.f32 %v3690, %v4241
        %v4287 = vmul.f32 %v3694, %v4241
        %v4288 = vmul.f32 %v3698, %v4241
        %v4289 = vmul.f32 %v3702, %v4241
        %v4290 = vmul.f32 %v3706, %v4241
        %v4291 = vmul.f32 %v3710, %v4241
        %v4292 = vmul.f32 %v3714, %v4241
        %v4293 = vmul.f32 %v3718, %v4241
        %v4294 = vmul.f32 %v3725, %v4245
        %v4295 = vmul.f32 %v3729, %v4245
        %v4296 = vmul.f32 %v3733, %v4245
        %v4297 = vmul.f32 %v3737, %v4245
        %v4298 = vmul.f32 %v3741, %v4245
        %v4299 = vmul.f32 %v3745, %v4245
        %v4300 = vmul.f32 %v3749, %v4245
        %v4301 = vmul.f32 %v3753, %v4245
        %v4302 = vmul.f32 %v3757, %v4245
        %v4303 = vmul.f32 %v3761, %v4245
        %v4304 = vmul.f32 %v3765, %v4245
        %v4305 = vmul.f32 %v3769, %v4245
        %v4306 = vmul.f32 %v3773, %v4245
        %v4307 = vmul.f32 %v3777, %v4245
        %v4308 = vmul.f32 %v3781, %v4245
        %v4309 = vmul.f32 %v3785, %v4245
        %v4310 = vmul.f32 %v3792, %v4249
        %v4311 = vmul.f32 %v3796, %v4249
        %v4312 = vmul.f32 %v3800, %v4249
        %v4313 = vmul.f32 %v3804, %v4249
        %v4314 = vmul.f32 %v3808, %v4249
        %v4315 = vmul.f32 %v3812, %v4249
        %v4316 = vmul.f32 %v3816, %v4249
        %v4317 = vmul.f32 %v3820, %v4249
        %v4318 = vmul.f32 %v3824, %v4249
        %v4319 = vmul.f32 %v3828, %v4249
        %v4320 = vmul.f32 %v3832, %v4249
        %v4321 = vmul.f32 %v3836, %v4249
        %v4322 = vmul.f32 %v3840, %v4249
        %v4323 = vmul.f32 %v3844, %v4249
        %v4324 = vmul.f32 %v3848, %v4249
        %v4325 = vmul.f32 %v3852, %v4249
        %v4326 = vmul.f32 %v3859, %v4253
        %v4327 = vmul.f32 %v3863, %v4253
        %v4328 = vmul.f32 %v3867, %v4253
        %v4329 = vmul.f32 %v3871, %v4253
        %v4330 = vmul.f32 %v3875, %v4253
        %v4331 = vmul.f32 %v3879, %v4253
        %v4332 = vmul.f32 %v3883, %v4253
        %v4333 = vmul.f32 %v3887, %v4253
        %v4334 = vmul.f32 %v3891, %v4253
        %v4335 = vmul.f32 %v3895, %v4253
        %v4336 = vmul.f32 %v3899, %v4253
        %v4337 = vmul.f32 %v3903, %v4253
        %v4338 = vmul.f32 %v3907, %v4253
        %v4339 = vmul.f32 %v3911, %v4253
        %v4340 = vmul.f32 %v3915, %v4253
        %v4341 = vmul.f32 %v3919, %v4253
        %v4342 = vmul.f32 %v3926, %v4257
        %v4343 = vmul.f32 %v3930, %v4257
        %v4344 = vmul.f32 %v3934, %v4257
        %v4345 = vmul.f32 %v3938, %v4257
        %v4346 = vmul.f32 %v3942, %v4257
        %v4347 = vmul.f32 %v3946, %v4257
        %v4348 = vmul.f32 %v3950, %v4257
        %v4349 = vmul.f32 %v3954, %v4257
        %v4350 = vmul.f32 %v3958, %v4257
        %v4351 = vmul.f32 %v3962, %v4257
        %v4352 = vmul.f32 %v3966, %v4257
        %v4353 = vmul.f32 %v3970, %v4257
        %v4354 = vmul.f32 %v3974, %v4257
        %v4355 = vmul.f32 %v3978, %v4257
        %v4356 = vmul.f32 %v3982, %v4257
        %v4357 = vmul.f32 %v3986, %v4257
        %v4358 = vmul.f32 %v3993, %v4261
        %v4359 = vmul.f32 %v3997, %v4261
        %v4360 = vmul.f32 %v4001, %v4261
        %v4361 = vmul.f32 %v4005, %v4261
        %v4362 = vmul.f32 %v4009, %v4261
        %v4363 = vmul.f32 %v4013, %v4261
        %v4364 = vmul.f32 %v4017, %v4261
        %v4365 = vmul.f32 %v4021, %v4261
        %v4366 = vmul.f32 %v4025, %v4261
        %v4367 = vmul.f32 %v4029, %v4261
        %v4368 = vmul.f32 %v4033, %v4261
        %v4369 = vmul.f32 %v4037, %v4261
        %v4370 = vmul.f32 %v4041, %v4261
        %v4371 = vmul.f32 %v4045, %v4261
        %v4372 = vmul.f32 %v4049, %v4261
        %v4373 = vmul.f32 %v4053, %v4261
        %v4374 = vmul.f32 %v4060, %v4265
        %v4375 = vmul.f32 %v4064, %v4265
        %v4376 = vmul.f32 %v4068, %v4265
        %v4377 = vmul.f32 %v4072, %v4265
        %v4378 = vmul.f32 %v4076, %v4265
        %v4379 = vmul.f32 %v4080, %v4265
        %v4380 = vmul.f32 %v4084, %v4265
        %v4381 = vmul.f32 %v4088, %v4265
        %v4382 = vmul.f32 %v4092, %v4265
        %v4383 = vmul.f32 %v4096, %v4265
        %v4384 = vmul.f32 %v4100, %v4265
        %v4385 = vmul.f32 %v4104, %v4265
        %v4386 = vmul.f32 %v4108, %v4265
        %v4387 = vmul.f32 %v4112, %v4265
        %v4388 = vmul.f32 %v4116, %v4265
        %v4389 = vmul.f32 %v4120, %v4265
        %v4390 = vmul.f32 %v4127, %v4269
        %v4391 = vmul.f32 %v4131, %v4269
        %v4392 = vmul.f32 %v4135, %v4269
        %v4393 = vmul.f32 %v4139, %v4269
        %v4394 = vmul.f32 %v4143, %v4269
        %v4395 = vmul.f32 %v4147, %v4269
        %v4396 = vmul.f32 %v4151, %v4269
        %v4397 = vmul.f32 %v4155, %v4269
        %v4398 = vmul.f32 %v4159, %v4269
        %v4399 = vmul.f32 %v4163, %v4269
        %v4400 = vmul.f32 %v4167, %v4269
        %v4401 = vmul.f32 %v4171, %v4269
        %v4402 = vmul.f32 %v4175, %v4269
        %v4403 = vmul.f32 %v4179, %v4269
        %v4404 = vmul.f32 %v4183, %v4269
        %v4405 = vmul.f32 %v4187, %v4269
        %v4406 = vmul.f32 %v4278, 1.442695
        %v4407 = vpow.pop %v4406
        %v4408 = vmul.f32 %v4279, 1.442695
        %v4409 = vpow.pop %v4408
        %v4410 = vmul.f32 %v4280, 1.442695
        %v4411 = vpow.pop %v4410
        %v4412 = vmul.f32 %v4281, 1.442695
        %v4413 = vpow.pop %v4412
        %v4414 = vmul.f32 %v4282, 1.442695
        %v4415 = vpow.pop %v4414
        %v4416 = vmul.f32 %v4283, 1.442695
        %v4417 = vpow.pop %v4416
        %v4418 = vmul.f32 %v4284, 1.442695
        %v4419 = vpow.pop %v4418
        %v4420 = vmul.f32 %v4285, 1.442695
        %v4421 = vpow.pop %v4420
        %v4422 = vmul.f32 %v4286, 1.442695
        %v4423 = vpow.pop %v4422
        %v4424 = vmul.f32 %v4287, 1.442695
        %v4425 = vpow.pop %v4424
        %v4426 = vmul.f32 %v4288, 1.442695
        %v4427 = vpow.pop %v4426
        %v4428 = vmul.f32 %v4289, 1.442695
        %v4429 = vpow.pop %v4428
        %v4430 = vmul.f32 %v4290, 1.442695
        %v4431 = vpow.pop %v4430
        %v4432 = vmul.f32 %v4291, 1.442695
        %v4433 = vpow.pop %v4432
        %v4434 = vmul.f32 %v4292, 1.442695
        %v4435 = vpow.pop %v4434
        %v4436 = vmul.f32 %v4293, 1.442695
        %v4437 = vpow.pop %v4436
        %v4438 = vmul.f32 %v4294, 1.442695
        %v4439 = vpow.pop %v4438
        %v4440 = vmul.f32 %v4295, 1.442695
        %v4441 = vpow.pop %v4440
        %v4442 = vmul.f32 %v4296, 1.442695
        %v4443 = vpow.pop %v4442
        %v4444 = vmul.f32 %v4297, 1.442695
        %v4445 = vpow.pop %v4444
        %v4446 = vmul.f32 %v4298, 1.442695
        %v4447 = vpow.pop %v4446
        %v4448 = vmul.f32 %v4299, 1.442695
        %v4449 = vpow.pop %v4448
        %v4450 = vmul.f32 %v4300, 1.442695
        %v4451 = vpow.pop %v4450
        %v4452 = vmul.f32 %v4301, 1.442695
        %v4453 = vpow.pop %v4452
        %v4454 = vmul.f32 %v4302, 1.442695
        %v4455 = vpow.pop %v4454
        %v4456 = vmul.f32 %v4303, 1.442695
        %v4457 = vpow.pop %v4456
        %v4458 = vmul.f32 %v4304, 1.442695
        %v4459 = vpow.pop %v4458
        %v4460 = vmul.f32 %v4305, 1.442695
        %v4461 = vpow.pop %v4460
        %v4462 = vmul.f32 %v4306, 1.442695
        %v4463 = vpow.pop %v4462
        %v4464 = vmul.f32 %v4307, 1.442695
        %v4465 = vpow.pop %v4464
        %v4466 = vmul.f32 %v4308, 1.442695
        %v4467 = vpow.pop %v4466
        %v4468 = vmul.f32 %v4309, 1.442695
        %v4469 = vpow.pop %v4468
        %v4470 = vmul.f32 %v4310, 1.442695
        %v4471 = vpow.pop %v4470
        %v4472 = vmul.f32 %v4311, 1.442695
        %v4473 = vpow.pop %v4472
        %v4474 = vmul.f32 %v4312, 1.442695
        %v4475 = vpow.pop %v4474
        %v4476 = vmul.f32 %v4313, 1.442695
        %v4477 = vpow.pop %v4476
        %v4478 = vmul.f32 %v4314, 1.442695
        %v4479 = vpow.pop %v4478
        %v4480 = vmul.f32 %v4315, 1.442695
        %v4481 = vpow.pop %v4480
        %v4482 = vmul.f32 %v4316, 1.442695
        %v4483 = vpow.pop %v4482
        %v4484 = vmul.f32 %v4317, 1.442695
        %v4485 = vpow.pop %v4484
        %v4486 = vmul.f32 %v4318, 1.442695
        %v4487 = vpow.pop %v4486
        %v4488 = vmul.f32 %v4319, 1.442695
        %v4489 = vpow.pop %v4488
        %v4490 = vmul.f32 %v4320, 1.442695
        %v4491 = vpow.pop %v4490
        %v4492 = vmul.f32 %v4321, 1.442695
        %v4493 = vpow.pop %v4492
        %v4494 = vmul.f32 %v4322, 1.442695
        %v4495 = vpow.pop %v4494
        %v4496 = vmul.f32 %v4323, 1.442695
        %v4497 = vpow.pop %v4496
        %v4498 = vmul.f32 %v4324, 1.442695
        %v4499 = vpow.pop %v4498
        %v4500 = vmul.f32 %v4325, 1.442695
        %v4501 = vpow.pop %v4500
        %v4502 = vmul.f32 %v4326, 1.442695
        %v4503 = vpow.pop %v4502
        %v4504 = vmul.f32 %v4327, 1.442695
        %v4505 = vpow.pop %v4504
        %v4506 = vmul.f32 %v4328, 1.442695
        %v4507 = vpow.pop %v4506
        %v4508 = vmul.f32 %v4329, 1.442695
        %v4509 = vpow.pop %v4508
        %v4510 = vmul.f32 %v4330, 1.442695
        %v4511 = vpow.pop %v4510
        %v4512 = vmul.f32 %v4331, 1.442695
        %v4513 = vpow.pop %v4512
        %v4514 = vmul.f32 %v4332, 1.442695
        %v4515 = vpow.pop %v4514
        %v4516 = vmul.f32 %v4333, 1.442695
        %v4517 = vpow.pop %v4516
        %v4518 = vmul.f32 %v4334, 1.442695
        %v4519 = vpow.pop %v4518
        %v4520 = vmul.f32 %v4335, 1.442695
        %v4521 = vpow.pop %v4520
        %v4522 = vmul.f32 %v4336, 1.442695
        %v4523 = vpow.pop %v4522
        %v4524 = vmul.f32 %v4337, 1.442695
        %v4525 = vpow.pop %v4524
        %v4526 = vmul.f32 %v4338, 1.442695
        %v4527 = vpow.pop %v4526
        %v4528 = vmul.f32 %v4339, 1.442695
        %v4529 = vpow.pop %v4528
        %v4530 = vmul.f32 %v4340, 1.442695
        %v4531 = vpow.pop %v4530
        %v4532 = vmul.f32 %v4341, 1.442695
        %v4533 = vpow.pop %v4532
        %v4534 = vmul.f32 %v4342, 1.442695
        %v4535 = vpow.pop %v4534
        %v4536 = vmul.f32 %v4343, 1.442695
        %v4537 = vpow.pop %v4536
        %v4538 = vmul.f32 %v4344, 1.442695
        %v4539 = vpow.pop %v4538
        %v4540 = vmul.f32 %v4345, 1.442695
        %v4541 = vpow.pop %v4540
        %v4542 = vmul.f32 %v4346, 1.442695
        %v4543 = vpow.pop %v4542
        %v4544 = vmul.f32 %v4347, 1.442695
        %v4545 = vpow.pop %v4544
        %v4546 = vmul.f32 %v4348, 1.442695
        %v4547 = vpow.pop %v4546
        %v4548 = vmul.f32 %v4349, 1.442695
        %v4549 = vpow.pop %v4548
        %v4550 = vmul.f32 %v4350, 1.442695
        %v4551 = vpow.pop %v4550
        %v4552 = vmul.f32 %v4351, 1.442695
        %v4553 = vpow.pop %v4552
        %v4554 = vmul.f32 %v4352, 1.442695
        %v4555 = vpow.pop %v4554
        %v4556 = vmul.f32 %v4353, 1.442695
        %v4557 = vpow.pop %v4556
        %v4558 = vmul.f32 %v4354, 1.442695
        %v4559 = vpow.pop %v4558
        %v4560 = vmul.f32 %v4355, 1.442695
        %v4561 = vpow.pop %v4560
        %v4562 = vmul.f32 %v4356, 1.442695
        %v4563 = vpow.pop %v4562
        %v4564 = vmul.f32 %v4357, 1.442695
        %v4565 = vpow.pop %v4564
        %v4566 = vmul.f32 %v4358, 1.442695
        %v4567 = vpow.pop %v4566
        %v4568 = vmul.f32 %v4359, 1.442695
        %v4569 = vpow.pop %v4568
        %v4570 = vmul.f32 %v4360, 1.442695
        %v4571 = vpow.pop %v4570
        %v4572 = vmul.f32 %v4361, 1.442695
        %v4573 = vpow.pop %v4572
        %v4574 = vmul.f32 %v4362, 1.442695
        %v4575 = vpow.pop %v4574
        %v4576 = vmul.f32 %v4363, 1.442695
        %v4577 = vpow.pop %v4576
        %v4578 = vmul.f32 %v4364, 1.442695
        %v4579 = vpow.pop %v4578
        %v4580 = vmul.f32 %v4365, 1.442695
        %v4581 = vpow.pop %v4580
        %v4582 = vmul.f32 %v4366, 1.442695
        %v4583 = vpow.pop %v4582
        %v4584 = vmul.f32 %v4367, 1.442695
        %v4585 = vpow.pop %v4584
        %v4586 = vmul.f32 %v4368, 1.442695
        %v4587 = vpow.pop %v4586
        %v4588 = vmul.f32 %v4369, 1.442695
        %v4589 = vpow.pop %v4588
        %v4590 = vmul.f32 %v4370, 1.442695
        %v4591 = vpow.pop %v4590
        %v4592 = vmul.f32 %v4371, 1.442695
        %v4593 = vpow.pop %v4592
        %v4594 = vmul.f32 %v4372, 1.442695
        %v4595 = vpow.pop %v4594
        %v4596 = vmul.f32 %v4373, 1.442695
        %v4597 = vpow.pop %v4596
        %v4598 = vmul.f32 %v4374, 1.442695
        %v4599 = vpow.pop %v4598
        %v4600 = vmul.f32 %v4375, 1.442695
        %v4601 = vpow.pop %v4600
        %v4602 = vmul.f32 %v4376, 1.442695
        %v4603 = vpow.pop %v4602
        %v4604 = vmul.f32 %v4377, 1.442695
        %v4605 = vpow.pop %v4604
        %v4606 = vmul.f32 %v4378, 1.442695
        %v4607 = vpow.pop %v4606
        %v4608 = vmul.f32 %v4379, 1.442695
        %v4609 = vpow.pop %v4608
        %v4610 = vmul.f32 %v4380, 1.442695
        %v4611 = vpow.pop %v4610
        %v4612 = vmul.f32 %v4381, 1.442695
        %v4613 = vpow.pop %v4612
        %v4614 = vmul.f32 %v4382, 1.442695
        %v4615 = vpow.pop %v4614
        %v4616 = vmul.f32 %v4383, 1.442695
        %v4617 = vpow.pop %v4616
        %v4618 = vmul.f32 %v4384, 1.442695
        %v4619 = vpow.pop %v4618
        %v4620 = vmul.f32 %v4385, 1.442695
        %v4621 = vpow.pop %v4620
        %v4622 = vmul.f32 %v4386, 1.442695
        %v4623 = vpow.pop %v4622
        %v4624 = vmul.f32 %v4387, 1.442695
        %v4625 = vpow.pop %v4624
        %v4626 = vmul.f32 %v4388, 1.442695
        %v4627 = vpow.pop %v4626
        %v4628 = vmul.f32 %v4389, 1.442695
        %v4629 = vpow.pop %v4628
        %v4630 = vmul.f32 %v4390, 1.442695
        %v4631 = vpow.pop %v4630
        %v4632 = vmul.f32 %v4391, 1.442695
        %v4633 = vpow.pop %v4632
        %v4634 = vmul.f32 %v4392, 1.442695
        %v4635 = vpow.pop %v4634
        %v4636 = vmul.f32 %v4393, 1.442695
        %v4637 = vpow.pop %v4636
        %v4638 = vmul.f32 %v4394, 1.442695
        %v4639 = vpow.pop %v4638
        %v4640 = vmul.f32 %v4395, 1.442695
        %v4641 = vpow.pop %v4640
        %v4642 = vmul.f32 %v4396, 1.442695
        %v4643 = vpow.pop %v4642
        %v4644 = vmul.f32 %v4397, 1.442695
        %v4645 = vpow.pop %v4644
        %v4646 = vmul.f32 %v4398, 1.442695
        %v4647 = vpow.pop %v4646
        %v4648 = vmul.f32 %v4399, 1.442695
        %v4649 = vpow.pop %v4648
        %v4650 = vmul.f32 %v4400, 1.442695
        %v4651 = vpow.pop %v4650
        %v4652 = vmul.f32 %v4401, 1.442695
        %v4653 = vpow.pop %v4652
        %v4654 = vmul.f32 %v4402, 1.442695
        %v4655 = vpow.pop %v4654
        %v4656 = vmul.f32 %v4403, 1.442695
        %v4657 = vpow.pop %v4656
        %v4658 = vmul.f32 %v4404, 1.442695
        %v4659 = vpow.pop %v4658
        %v4660 = vmul.f32 %v4405, 1.442695
        %v4661 = vpow.pop %v4660
        %4662 = vadd.xlane.f32.xlu0 %v4407
        %v4663 = vpop.xlane.xlu0 %4662
        %4664 = vadd.xlane.f32.xlu0 %v4409
        %v4665 = vpop.xlane.xlu0 %4664
        %4666 = vadd.xlane.f32.xlu0 %v4411
        %v4667 = vpop.xlane.xlu0 %4666
        %4668 = vadd.xlane.f32.xlu0 %v4413
        %v4669 = vpop.xlane.xlu0 %4668
        %4670 = vadd.xlane.f32.xlu0 %v4415
        %v4671 = vpop.xlane.xlu0 %4670
        %4672 = vadd.xlane.f32.xlu0 %v4417
        %v4673 = vpop.xlane.xlu0 %4672
        %4674 = vadd.xlane.f32.xlu0 %v4419
        %v4675 = vpop.xlane.xlu0 %4674
        %4676 = vadd.xlane.f32.xlu0 %v4421
        %v4677 = vpop.xlane.xlu0 %4676
        %4678 = vadd.xlane.f32.xlu0 %v4423
        %v4679 = vpop.xlane.xlu0 %4678
        %4680 = vadd.xlane.f32.xlu0 %v4425
        %v4681 = vpop.xlane.xlu0 %4680
        %4682 = vadd.xlane.f32.xlu0 %v4427
        %v4683 = vpop.xlane.xlu0 %4682
        %4684 = vadd.xlane.f32.xlu0 %v4429
        %v4685 = vpop.xlane.xlu0 %4684
        %4686 = vadd.xlane.f32.xlu0 %v4431
        %v4687 = vpop.xlane.xlu0 %4686
        %4688 = vadd.xlane.f32.xlu0 %v4433
        %v4689 = vpop.xlane.xlu0 %4688
        %4690 = vadd.xlane.f32.xlu0 %v4435
        %v4691 = vpop.xlane.xlu0 %4690
        %4692 = vadd.xlane.f32.xlu0 %v4437
        %v4693 = vpop.xlane.xlu0 %4692
        %4694 = vadd.xlane.f32.xlu0 %v4439
        %v4695 = vpop.xlane.xlu0 %4694
        %4696 = vadd.xlane.f32.xlu0 %v4441
        %v4697 = vpop.xlane.xlu0 %4696
        %4698 = vadd.xlane.f32.xlu0 %v4443
        %v4699 = vpop.xlane.xlu0 %4698
        %4700 = vadd.xlane.f32.xlu0 %v4445
        %v4701 = vpop.xlane.xlu0 %4700
        %4702 = vadd.xlane.f32.xlu0 %v4447
        %v4703 = vpop.xlane.xlu0 %4702
        %4704 = vadd.xlane.f32.xlu0 %v4449
        %v4705 = vpop.xlane.xlu0 %4704
        %4706 = vadd.xlane.f32.xlu0 %v4451
        %v4707 = vpop.xlane.xlu0 %4706
        %4708 = vadd.xlane.f32.xlu0 %v4453
        %v4709 = vpop.xlane.xlu0 %4708
        %4710 = vadd.xlane.f32.xlu0 %v4455
        %v4711 = vpop.xlane.xlu0 %4710
        %4712 = vadd.xlane.f32.xlu0 %v4457
        %v4713 = vpop.xlane.xlu0 %4712
        %4714 = vadd.xlane.f32.xlu0 %v4459
        %v4715 = vpop.xlane.xlu0 %4714
        %4716 = vadd.xlane.f32.xlu0 %v4461
        %v4717 = vpop.xlane.xlu0 %4716
        %4718 = vadd.xlane.f32.xlu0 %v4463
        %v4719 = vpop.xlane.xlu0 %4718
        %4720 = vadd.xlane.f32.xlu0 %v4465
        %v4721 = vpop.xlane.xlu0 %4720
        %4722 = vadd.xlane.f32.xlu0 %v4467
        %v4723 = vpop.xlane.xlu0 %4722
        %4724 = vadd.xlane.f32.xlu0 %v4469
        %v4725 = vpop.xlane.xlu0 %4724
        %4726 = vadd.xlane.f32.xlu0 %v4471
        %v4727 = vpop.xlane.xlu0 %4726
        %4728 = vadd.xlane.f32.xlu0 %v4473
        %v4729 = vpop.xlane.xlu0 %4728
        %4730 = vadd.xlane.f32.xlu0 %v4475
        %v4731 = vpop.xlane.xlu0 %4730
        %4732 = vadd.xlane.f32.xlu0 %v4477
        %v4733 = vpop.xlane.xlu0 %4732
        %4734 = vadd.xlane.f32.xlu0 %v4479
        %v4735 = vpop.xlane.xlu0 %4734
        %4736 = vadd.xlane.f32.xlu0 %v4481
        %v4737 = vpop.xlane.xlu0 %4736
        %4738 = vadd.xlane.f32.xlu0 %v4483
        %v4739 = vpop.xlane.xlu0 %4738
        %4740 = vadd.xlane.f32.xlu0 %v4485
        %v4741 = vpop.xlane.xlu0 %4740
        %4742 = vadd.xlane.f32.xlu0 %v4487
        %v4743 = vpop.xlane.xlu0 %4742
        %4744 = vadd.xlane.f32.xlu0 %v4489
        %v4745 = vpop.xlane.xlu0 %4744
        %4746 = vadd.xlane.f32.xlu0 %v4491
        %v4747 = vpop.xlane.xlu0 %4746
        %4748 = vadd.xlane.f32.xlu0 %v4493
        %v4749 = vpop.xlane.xlu0 %4748
        %4750 = vadd.xlane.f32.xlu0 %v4495
        %v4751 = vpop.xlane.xlu0 %4750
        %4752 = vadd.xlane.f32.xlu0 %v4497
        %v4753 = vpop.xlane.xlu0 %4752
        %4754 = vadd.xlane.f32.xlu0 %v4499
        %v4755 = vpop.xlane.xlu0 %4754
        %4756 = vadd.xlane.f32.xlu0 %v4501
        %v4757 = vpop.xlane.xlu0 %4756
        %4758 = vadd.xlane.f32.xlu0 %v4503
        %v4759 = vpop.xlane.xlu0 %4758
        %4760 = vadd.xlane.f32.xlu0 %v4505
        %v4761 = vpop.xlane.xlu0 %4760
        %4762 = vadd.xlane.f32.xlu0 %v4507
        %v4763 = vpop.xlane.xlu0 %4762
        %4764 = vadd.xlane.f32.xlu0 %v4509
        %v4765 = vpop.xlane.xlu0 %4764
        %4766 = vadd.xlane.f32.xlu0 %v4511
        %v4767 = vpop.xlane.xlu0 %4766
        %4768 = vadd.xlane.f32.xlu0 %v4513
        %v4769 = vpop.xlane.xlu0 %4768
        %4770 = vadd.xlane.f32.xlu0 %v4515
        %v4771 = vpop.xlane.xlu0 %4770
        %4772 = vadd.xlane.f32.xlu0 %v4517
        %v4773 = vpop.xlane.xlu0 %4772
        %4774 = vadd.xlane.f32.xlu0 %v4519
        %v4775 = vpop.xlane.xlu0 %4774
        %4776 = vadd.xlane.f32.xlu0 %v4521
        %v4777 = vpop.xlane.xlu0 %4776
        %4778 = vadd.xlane.f32.xlu0 %v4523
        %v4779 = vpop.xlane.xlu0 %4778
        %4780 = vadd.xlane.f32.xlu0 %v4525
        %v4781 = vpop.xlane.xlu0 %4780
        %4782 = vadd.xlane.f32.xlu0 %v4527
        %v4783 = vpop.xlane.xlu0 %4782
        %4784 = vadd.xlane.f32.xlu0 %v4529
        %v4785 = vpop.xlane.xlu0 %4784
        %4786 = vadd.xlane.f32.xlu0 %v4531
        %v4787 = vpop.xlane.xlu0 %4786
        %4788 = vadd.xlane.f32.xlu0 %v4533
        %v4789 = vpop.xlane.xlu0 %4788
        %4790 = vadd.xlane.f32.xlu0 %v4535
        %v4791 = vpop.xlane.xlu0 %4790
        %4792 = vadd.xlane.f32.xlu0 %v4537
        %v4793 = vpop.xlane.xlu0 %4792
        %4794 = vadd.xlane.f32.xlu0 %v4539
        %v4795 = vpop.xlane.xlu0 %4794
        %4796 = vadd.xlane.f32.xlu0 %v4541
        %v4797 = vpop.xlane.xlu0 %4796
        %4798 = vadd.xlane.f32.xlu0 %v4543
        %v4799 = vpop.xlane.xlu0 %4798
        %4800 = vadd.xlane.f32.xlu0 %v4545
        %v4801 = vpop.xlane.xlu0 %4800
        %4802 = vadd.xlane.f32.xlu0 %v4547
        %v4803 = vpop.xlane.xlu0 %4802
        %4804 = vadd.xlane.f32.xlu0 %v4549
        %v4805 = vpop.xlane.xlu0 %4804
        %4806 = vadd.xlane.f32.xlu0 %v4551
        %v4807 = vpop.xlane.xlu0 %4806
        %4808 = vadd.xlane.f32.xlu0 %v4553
        %v4809 = vpop.xlane.xlu0 %4808
        %4810 = vadd.xlane.f32.xlu0 %v4555
        %v4811 = vpop.xlane.xlu0 %4810
        %4812 = vadd.xlane.f32.xlu0 %v4557
        %v4813 = vpop.xlane.xlu0 %4812
        %4814 = vadd.xlane.f32.xlu0 %v4559
        %v4815 = vpop.xlane.xlu0 %4814
        %4816 = vadd.xlane.f32.xlu0 %v4561
        %v4817 = vpop.xlane.xlu0 %4816
        %4818 = vadd.xlane.f32.xlu0 %v4563
        %v4819 = vpop.xlane.xlu0 %4818
        %4820 = vadd.xlane.f32.xlu0 %v4565
        %v4821 = vpop.xlane.xlu0 %4820
        %4822 = vadd.xlane.f32.xlu0 %v4567
        %v4823 = vpop.xlane.xlu0 %4822
        %4824 = vadd.xlane.f32.xlu0 %v4569
        %v4825 = vpop.xlane.xlu0 %4824
        %4826 = vadd.xlane.f32.xlu0 %v4571
        %v4827 = vpop.xlane.xlu0 %4826
        %4828 = vadd.xlane.f32.xlu0 %v4573
        %v4829 = vpop.xlane.xlu0 %4828
        %4830 = vadd.xlane.f32.xlu0 %v4575
        %v4831 = vpop.xlane.xlu0 %4830
        %4832 = vadd.xlane.f32.xlu0 %v4577
        %v4833 = vpop.xlane.xlu0 %4832
        %4834 = vadd.xlane.f32.xlu0 %v4579
        %v4835 = vpop.xlane.xlu0 %4834
        %4836 = vadd.xlane.f32.xlu0 %v4581
        %v4837 = vpop.xlane.xlu0 %4836
        %4838 = vadd.xlane.f32.xlu0 %v4583
        %v4839 = vpop.xlane.xlu0 %4838
        %4840 = vadd.xlane.f32.xlu0 %v4585
        %v4841 = vpop.xlane.xlu0 %4840
        %4842 = vadd.xlane.f32.xlu0 %v4587
        %v4843 = vpop.xlane.xlu0 %4842
        %4844 = vadd.xlane.f32.xlu0 %v4589
        %v4845 = vpop.xlane.xlu0 %4844
        %4846 = vadd.xlane.f32.xlu0 %v4591
        %v4847 = vpop.xlane.xlu0 %4846
        %4848 = vadd.xlane.f32.xlu0 %v4593
        %v4849 = vpop.xlane.xlu0 %4848
        %4850 = vadd.xlane.f32.xlu0 %v4595
        %v4851 = vpop.xlane.xlu0 %4850
        %4852 = vadd.xlane.f32.xlu0 %v4597
        %v4853 = vpop.xlane.xlu0 %4852
        %4854 = vadd.xlane.f32.xlu0 %v4599
        %v4855 = vpop.xlane.xlu0 %4854
        %4856 = vadd.xlane.f32.xlu0 %v4601
        %v4857 = vpop.xlane.xlu0 %4856
        %4858 = vadd.xlane.f32.xlu0 %v4603
        %v4859 = vpop.xlane.xlu0 %4858
        %4860 = vadd.xlane.f32.xlu0 %v4605
        %v4861 = vpop.xlane.xlu0 %4860
        %4862 = vadd.xlane.f32.xlu0 %v4607
        %v4863 = vpop.xlane.xlu0 %4862
        %4864 = vadd.xlane.f32.xlu0 %v4609
        %v4865 = vpop.xlane.xlu0 %4864
        %4866 = vadd.xlane.f32.xlu0 %v4611
        %v4867 = vpop.xlane.xlu0 %4866
        %4868 = vadd.xlane.f32.xlu0 %v4613
        %v4869 = vpop.xlane.xlu0 %4868
        %4870 = vadd.xlane.f32.xlu0 %v4615
        %v4871 = vpop.xlane.xlu0 %4870
        %4872 = vadd.xlane.f32.xlu0 %v4617
        %v4873 = vpop.xlane.xlu0 %4872
        %4874 = vadd.xlane.f32.xlu0 %v4619
        %v4875 = vpop.xlane.xlu0 %4874
        %4876 = vadd.xlane.f32.xlu0 %v4621
        %v4877 = vpop.xlane.xlu0 %4876
        %4878 = vadd.xlane.f32.xlu0 %v4623
        %v4879 = vpop.xlane.xlu0 %4878
        %4880 = vadd.xlane.f32.xlu0 %v4625
        %v4881 = vpop.xlane.xlu0 %4880
        %4882 = vadd.xlane.f32.xlu0 %v4627
        %v4883 = vpop.xlane.xlu0 %4882
        %4884 = vadd.xlane.f32.xlu0 %v4629
        %v4885 = vpop.xlane.xlu0 %4884
        %4886 = vadd.xlane.f32.xlu0 %v4631
        %v4887 = vpop.xlane.xlu0 %4886
        %4888 = vadd.xlane.f32.xlu0 %v4633
        %v4889 = vpop.xlane.xlu0 %4888
        %4890 = vadd.xlane.f32.xlu0 %v4635
        %v4891 = vpop.xlane.xlu0 %4890
        %4892 = vadd.xlane.f32.xlu0 %v4637
        %v4893 = vpop.xlane.xlu0 %4892
        %4894 = vadd.xlane.f32.xlu0 %v4639
        %v4895 = vpop.xlane.xlu0 %4894
        %4896 = vadd.xlane.f32.xlu0 %v4641
        %v4897 = vpop.xlane.xlu0 %4896
        %4898 = vadd.xlane.f32.xlu0 %v4643
        %v4899 = vpop.xlane.xlu0 %4898
        %4900 = vadd.xlane.f32.xlu0 %v4645
        %v4901 = vpop.xlane.xlu0 %4900
        %4902 = vadd.xlane.f32.xlu0 %v4647
        %v4903 = vpop.xlane.xlu0 %4902
        %4904 = vadd.xlane.f32.xlu0 %v4649
        %v4905 = vpop.xlane.xlu0 %4904
        %4906 = vadd.xlane.f32.xlu0 %v4651
        %v4907 = vpop.xlane.xlu0 %4906
        %4908 = vadd.xlane.f32.xlu0 %v4653
        %v4909 = vpop.xlane.xlu0 %4908
        %4910 = vadd.xlane.f32.xlu0 %v4655
        %v4911 = vpop.xlane.xlu0 %4910
        %4912 = vadd.xlane.f32.xlu0 %v4657
        %v4913 = vpop.xlane.xlu0 %4912
        %4914 = vadd.xlane.f32.xlu0 %v4659
        %v4915 = vpop.xlane.xlu0 %4914
        %4916 = vadd.xlane.f32.xlu0 %v4661
        %v4917 = vpop.xlane.xlu0 %4916
        %v4918 = vrcp.pop %v4663
        %v4919 = vrcp.pop %v4665
        %v4920 = vrcp.pop %v4667
        %v4921 = vrcp.pop %v4669
        %v4922 = vrcp.pop %v4671
        %v4923 = vrcp.pop %v4673
        %v4924 = vrcp.pop %v4675
        %v4925 = vrcp.pop %v4677
        %v4926 = vrcp.pop %v4679
        %v4927 = vrcp.pop %v4681
        %v4928 = vrcp.pop %v4683
        %v4929 = vrcp.pop %v4685
        %v4930 = vrcp.pop %v4687
        %v4931 = vrcp.pop %v4689
        %v4932 = vrcp.pop %v4691
        %v4933 = vrcp.pop %v4693
        %v4934 = vrcp.pop %v4695
        %v4935 = vrcp.pop %v4697
        %v4936 = vrcp.pop %v4699
        %v4937 = vrcp.pop %v4701
        %v4938 = vrcp.pop %v4703
        %v4939 = vrcp.pop %v4705
        %v4940 = vrcp.pop %v4707
        %v4941 = vrcp.pop %v4709
        %v4942 = vrcp.pop %v4711
        %v4943 = vrcp.pop %v4713
        %v4944 = vrcp.pop %v4715
        %v4945 = vrcp.pop %v4717
        %v4946 = vrcp.pop %v4719
        %v4947 = vrcp.pop %v4721
        %v4948 = vrcp.pop %v4723
        %v4949 = vrcp.pop %v4725
        %v4950 = vrcp.pop %v4727
        %v4951 = vrcp.pop %v4729
        %v4952 = vrcp.pop %v4731
        %v4953 = vrcp.pop %v4733
        %v4954 = vrcp.pop %v4735
        %v4955 = vrcp.pop %v4737
        %v4956 = vrcp.pop %v4739
        %v4957 = vrcp.pop %v4741
        %v4958 = vrcp.pop %v4743
        %v4959 = vrcp.pop %v4745
        %v4960 = vrcp.pop %v4747
        %v4961 = vrcp.pop %v4749
        %v4962 = vrcp.pop %v4751
        %v4963 = vrcp.pop %v4753
        %v4964 = vrcp.pop %v4755
        %v4965 = vrcp.pop %v4757
        %v4966 = vrcp.pop %v4759
        %v4967 = vrcp.pop %v4761
        %v4968 = vrcp.pop %v4763
        %v4969 = vrcp.pop %v4765
        %v4970 = vrcp.pop %v4767
        %v4971 = vrcp.pop %v4769
        %v4972 = vrcp.pop %v4771
        %v4973 = vrcp.pop %v4773
        %v4974 = vrcp.pop %v4775
        %v4975 = vrcp.pop %v4777
        %v4976 = vrcp.pop %v4779
        %v4977 = vrcp.pop %v4781
        %v4978 = vrcp.pop %v4783
        %v4979 = vrcp.pop %v4785
        %v4980 = vrcp.pop %v4787
        %v4981 = vrcp.pop %v4789
        %v4982 = vrcp.pop %v4791
        %v4983 = vrcp.pop %v4793
        %v4984 = vrcp.pop %v4795
        %v4985 = vrcp.pop %v4797
        %v4986 = vrcp.pop %v4799
        %v4987 = vrcp.pop %v4801
        %v4988 = vrcp.pop %v4803
        %v4989 = vrcp.pop %v4805
        %v4990 = vrcp.pop %v4807
        %v4991 = vrcp.pop %v4809
        %v4992 = vrcp.pop %v4811
        %v4993 = vrcp.pop %v4813
        %v4994 = vrcp.pop %v4815
        %v4995 = vrcp.pop %v4817
        %v4996 = vrcp.pop %v4819
        %v4997 = vrcp.pop %v4821
        %v4998 = vrcp.pop %v4823
        %v4999 = vrcp.pop %v4825
        %v5000 = vrcp.pop %v4827
        %v5001 = vrcp.pop %v4829
        %v5002 = vrcp.pop %v4831
        %v5003 = vrcp.pop %v4833
        %v5004 = vrcp.pop %v4835
        %v5005 = vrcp.pop %v4837
        %v5006 = vrcp.pop %v4839
        %v5007 = vrcp.pop %v4841
        %v5008 = vrcp.pop %v4843
        %v5009 = vrcp.pop %v4845
        %v5010 = vrcp.pop %v4847
        %v5011 = vrcp.pop %v4849
        %v5012 = vrcp.pop %v4851
        %v5013 = vrcp.pop %v4853
        %v5014 = vrcp.pop %v4855
        %v5015 = vrcp.pop %v4857
        %v5016 = vrcp.pop %v4859
        %v5017 = vrcp.pop %v4861
        %v5018 = vrcp.pop %v4863
        %v5019 = vrcp.pop %v4865
        %v5020 = vrcp.pop %v4867
        %v5021 = vrcp.pop %v4869
        %v5022 = vrcp.pop %v4871
        %v5023 = vrcp.pop %v4873
        %v5024 = vrcp.pop %v4875
        %v5025 = vrcp.pop %v4877
        %v5026 = vrcp.pop %v4879
        %v5027 = vrcp.pop %v4881
        %v5028 = vrcp.pop %v4883
        %v5029 = vrcp.pop %v4885
        %v5030 = vrcp.pop %v4887
        %v5031 = vrcp.pop %v4889
        %v5032 = vrcp.pop %v4891
        %v5033 = vrcp.pop %v4893
        %v5034 = vrcp.pop %v4895
        %v5035 = vrcp.pop %v4897
        %v5036 = vrcp.pop %v4899
        %v5037 = vrcp.pop %v4901
        %v5038 = vrcp.pop %v4903
        %v5039 = vrcp.pop %v4905
        %v5040 = vrcp.pop %v4907
        %v5041 = vrcp.pop %v4909
        %v5042 = vrcp.pop %v4911
        %v5043 = vrcp.pop %v4913
        %v5044 = vrcp.pop %v4915
        %v5045 = vrcp.pop %v4917
        %v5174 = vlaneseq
        %v5175 = vshrl.u32 %v5174, 7
        %v5176 = vsub.s32 %v2109, %v5175
        %v5177 = vrot.slane %v4918, %v5176
        %v5178 = vlaneseq
        %v5179 = vshrl.u32 %v5178, 7
        %v5180 = vsub.s32 %v2114, %v5179
        %v5181 = vrot.slane %v4919, %v5180
        %v5182 = vsel %vm2119, %v5181, %v5177
        %v5183 = vlaneseq
        %v5184 = vshrl.u32 %v5183, 7
        %v5185 = vsub.s32 %v2121, %v5184
        %v5186 = vrot.slane %v4920, %v5185
        %v5187 = vsel %vm2126, %v5186, %v5182
        %v5188 = vlaneseq
        %v5189 = vshrl.u32 %v5188, 7
        %v5190 = vsub.s32 %v2128, %v5189
        %v5191 = vrot.slane %v4921, %v5190
        %v5192 = vsel %vm2133, %v5191, %v5187
        %v5193 = vlaneseq
        %v5194 = vshrl.u32 %v5193, 7
        %v5195 = vsub.s32 %v2135, %v5194
        %v5196 = vrot.slane %v4922, %v5195
        %v5197 = vsel %vm2140, %v5196, %v5192
        %v5198 = vlaneseq
        %v5199 = vshrl.u32 %v5198, 7
        %v5200 = vsub.s32 %v2142, %v5199
        %v5201 = vrot.slane %v4923, %v5200
        %v5202 = vsel %vm2147, %v5201, %v5197
        %v5203 = vlaneseq
        %v5204 = vshrl.u32 %v5203, 7
        %v5205 = vsub.s32 %v2149, %v5204
        %v5206 = vrot.slane %v4924, %v5205
        %v5207 = vsel %vm2154, %v5206, %v5202
        %v5208 = vlaneseq
        %v5209 = vshrl.u32 %v5208, 7
        %v5210 = vsub.s32 %v2156, %v5209
        %v5211 = vrot.slane %v4925, %v5210
        %v5212 = vsel %vm2161, %v5211, %v5207
        %v5213 = vlaneseq
        %v5214 = vshrl.u32 %v5213, 7
        %v5215 = vsub.s32 %v2163, %v5214
        %v5216 = vrot.slane %v4926, %v5215
        %v5217 = vsel %vm2168, %v5216, %v5212
        %v5218 = vlaneseq
        %v5219 = vshrl.u32 %v5218, 7
        %v5220 = vsub.s32 %v2170, %v5219
        %v5221 = vrot.slane %v4927, %v5220
        %v5222 = vsel %vm2175, %v5221, %v5217
        %v5223 = vlaneseq
        %v5224 = vshrl.u32 %v5223, 7
        %v5225 = vsub.s32 %v2177, %v5224
        %v5226 = vrot.slane %v4928, %v5225
        %v5227 = vsel %vm2182, %v5226, %v5222
        %v5228 = vlaneseq
        %v5229 = vshrl.u32 %v5228, 7
        %v5230 = vsub.s32 %v2184, %v5229
        %v5231 = vrot.slane %v4929, %v5230
        %v5232 = vsel %vm2189, %v5231, %v5227
        %v5233 = vlaneseq
        %v5234 = vshrl.u32 %v5233, 7
        %v5235 = vsub.s32 %v2191, %v5234
        %v5236 = vrot.slane %v4930, %v5235
        %v5237 = vsel %vm2196, %v5236, %v5232
        %v5238 = vlaneseq
        %v5239 = vshrl.u32 %v5238, 7
        %v5240 = vsub.s32 %v2198, %v5239
        %v5241 = vrot.slane %v4931, %v5240
        %v5242 = vsel %vm2203, %v5241, %v5237
        %v5243 = vlaneseq
        %v5244 = vshrl.u32 %v5243, 7
        %v5245 = vsub.s32 %v2205, %v5244
        %v5246 = vrot.slane %v4932, %v5245
        %v5247 = vsel %vm2210, %v5246, %v5242
        %v5248 = vlaneseq
        %v5249 = vshrl.u32 %v5248, 7
        %v5250 = vsub.s32 %v2212, %v5249
        %v5251 = vrot.slane %v4933, %v5250
        %v5252 = vsel %vm2217, %v5251, %v5247
        %v5253 = vlaneseq
        %v5254 = vshrl.u32 %v5253, 7
        %v5255 = vsub.s32 %v2109, %v5254
        %v5256 = vrot.slane %v4934, %v5255
        %v5257 = vlaneseq
        %v5258 = vshrl.u32 %v5257, 7
        %v5259 = vsub.s32 %v2114, %v5258
        %v5260 = vrot.slane %v4935, %v5259
        %v5261 = vsel %vm2119, %v5260, %v5256
        %v5262 = vlaneseq
        %v5263 = vshrl.u32 %v5262, 7
        %v5264 = vsub.s32 %v2121, %v5263
        %v5265 = vrot.slane %v4936, %v5264
        %v5266 = vsel %vm2126, %v5265, %v5261
        %v5267 = vlaneseq
        %v5268 = vshrl.u32 %v5267, 7
        %v5269 = vsub.s32 %v2128, %v5268
        %v5270 = vrot.slane %v4937, %v5269
        %v5271 = vsel %vm2133, %v5270, %v5266
        %v5272 = vlaneseq
        %v5273 = vshrl.u32 %v5272, 7
        %v5274 = vsub.s32 %v2135, %v5273
        %v5275 = vrot.slane %v4938, %v5274
        %v5276 = vsel %vm2140, %v5275, %v5271
        %v5277 = vlaneseq
        %v5278 = vshrl.u32 %v5277, 7
        %v5279 = vsub.s32 %v2142, %v5278
        %v5280 = vrot.slane %v4939, %v5279
        %v5281 = vsel %vm2147, %v5280, %v5276
        %v5282 = vlaneseq
        %v5283 = vshrl.u32 %v5282, 7
        %v5284 = vsub.s32 %v2149, %v5283
        %v5285 = vrot.slane %v4940, %v5284
        %v5286 = vsel %vm2154, %v5285, %v5281
        %v5287 = vlaneseq
        %v5288 = vshrl.u32 %v5287, 7
        %v5289 = vsub.s32 %v2156, %v5288
        %v5290 = vrot.slane %v4941, %v5289
        %v5291 = vsel %vm2161, %v5290, %v5286
        %v5292 = vlaneseq
        %v5293 = vshrl.u32 %v5292, 7
        %v5294 = vsub.s32 %v2163, %v5293
        %v5295 = vrot.slane %v4942, %v5294
        %v5296 = vsel %vm2168, %v5295, %v5291
        %v5297 = vlaneseq
        %v5298 = vshrl.u32 %v5297, 7
        %v5299 = vsub.s32 %v2170, %v5298
        %v5300 = vrot.slane %v4943, %v5299
        %v5301 = vsel %vm2175, %v5300, %v5296
        %v5302 = vlaneseq
        %v5303 = vshrl.u32 %v5302, 7
        %v5304 = vsub.s32 %v2177, %v5303
        %v5305 = vrot.slane %v4944, %v5304
        %v5306 = vsel %vm2182, %v5305, %v5301
        %v5307 = vlaneseq
        %v5308 = vshrl.u32 %v5307, 7
        %v5309 = vsub.s32 %v2184, %v5308
        %v5310 = vrot.slane %v4945, %v5309
        %v5311 = vsel %vm2189, %v5310, %v5306
        %v5312 = vlaneseq
        %v5313 = vshrl.u32 %v5312, 7
        %v5314 = vsub.s32 %v2191, %v5313
        %v5315 = vrot.slane %v4946, %v5314
        %v5316 = vsel %vm2196, %v5315, %v5311
        %v5317 = vlaneseq
        %v5318 = vshrl.u32 %v5317, 7
        %v5319 = vsub.s32 %v2198, %v5318
        %v5320 = vrot.slane %v4947, %v5319
        %v5321 = vsel %vm2203, %v5320, %v5316
        %v5322 = vlaneseq
        %v5323 = vshrl.u32 %v5322, 7
        %v5324 = vsub.s32 %v2205, %v5323
        %v5325 = vrot.slane %v4948, %v5324
        %v5326 = vsel %vm2210, %v5325, %v5321
        %v5327 = vlaneseq
        %v5328 = vshrl.u32 %v5327, 7
        %v5329 = vsub.s32 %v2212, %v5328
        %v5330 = vrot.slane %v4949, %v5329
        %v5331 = vsel %vm2217, %v5330, %v5326
        %v5332 = vlaneseq
        %v5333 = vshrl.u32 %v5332, 7
        %v5334 = vsub.s32 %v2109, %v5333
        %v5335 = vrot.slane %v4950, %v5334
        %v5336 = vlaneseq
        %v5337 = vshrl.u32 %v5336, 7
        %v5338 = vsub.s32 %v2114, %v5337
        %v5339 = vrot.slane %v4951, %v5338
        %v5340 = vsel %vm2119, %v5339, %v5335
        %v5341 = vlaneseq
        %v5342 = vshrl.u32 %v5341, 7
        %v5343 = vsub.s32 %v2121, %v5342
        %v5344 = vrot.slane %v4952, %v5343
        %v5345 = vsel %vm2126, %v5344, %v5340
        %v5346 = vlaneseq
        %v5347 = vshrl.u32 %v5346, 7
        %v5348 = vsub.s32 %v2128, %v5347
        %v5349 = vrot.slane %v4953, %v5348
        %v5350 = vsel %vm2133, %v5349, %v5345
        %v5351 = vlaneseq
        %v5352 = vshrl.u32 %v5351, 7
        %v5353 = vsub.s32 %v2135, %v5352
        %v5354 = vrot.slane %v4954, %v5353
        %v5355 = vsel %vm2140, %v5354, %v5350
        %v5356 = vlaneseq
        %v5357 = vshrl.u32 %v5356, 7
        %v5358 = vsub.s32 %v2142, %v5357
        %v5359 = vrot.slane %v4955, %v5358
        %v5360 = vsel %vm2147, %v5359, %v5355
        %v5361 = vlaneseq
        %v5362 = vshrl.u32 %v5361, 7
        %v5363 = vsub.s32 %v2149, %v5362
        %v5364 = vrot.slane %v4956, %v5363
        %v5365 = vsel %vm2154, %v5364, %v5360
        %v5366 = vlaneseq
        %v5367 = vshrl.u32 %v5366, 7
        %v5368 = vsub.s32 %v2156, %v5367
        %v5369 = vrot.slane %v4957, %v5368
        %v5370 = vsel %vm2161, %v5369, %v5365
        %v5371 = vlaneseq
        %v5372 = vshrl.u32 %v5371, 7
        %v5373 = vsub.s32 %v2163, %v5372
        %v5374 = vrot.slane %v4958, %v5373
        %v5375 = vsel %vm2168, %v5374, %v5370
        %v5376 = vlaneseq
        %v5377 = vshrl.u32 %v5376, 7
        %v5378 = vsub.s32 %v2170, %v5377
        %v5379 = vrot.slane %v4959, %v5378
        %v5380 = vsel %vm2175, %v5379, %v5375
        %v5381 = vlaneseq
        %v5382 = vshrl.u32 %v5381, 7
        %v5383 = vsub.s32 %v2177, %v5382
        %v5384 = vrot.slane %v4960, %v5383
        %v5385 = vsel %vm2182, %v5384, %v5380
        %v5386 = vlaneseq
        %v5387 = vshrl.u32 %v5386, 7
        %v5388 = vsub.s32 %v2184, %v5387
        %v5389 = vrot.slane %v4961, %v5388
        %v5390 = vsel %vm2189, %v5389, %v5385
        %v5391 = vlaneseq
        %v5392 = vshrl.u32 %v5391, 7
        %v5393 = vsub.s32 %v2191, %v5392
        %v5394 = vrot.slane %v4962, %v5393
        %v5395 = vsel %vm2196, %v5394, %v5390
        %v5396 = vlaneseq
        %v5397 = vshrl.u32 %v5396, 7
        %v5398 = vsub.s32 %v2198, %v5397
        %v5399 = vrot.slane %v4963, %v5398
        %v5400 = vsel %vm2203, %v5399, %v5395
        %v5401 = vlaneseq
        %v5402 = vshrl.u32 %v5401, 7
        %v5403 = vsub.s32 %v2205, %v5402
        %v5404 = vrot.slane %v4964, %v5403
        %v5405 = vsel %vm2210, %v5404, %v5400
        %v5406 = vlaneseq
        %v5407 = vshrl.u32 %v5406, 7
        %v5408 = vsub.s32 %v2212, %v5407
        %v5409 = vrot.slane %v4965, %v5408
        %v5410 = vsel %vm2217, %v5409, %v5405
        %v5411 = vlaneseq
        %v5412 = vshrl.u32 %v5411, 7
        %v5413 = vsub.s32 %v2109, %v5412
        %v5414 = vrot.slane %v4966, %v5413
        %v5415 = vlaneseq
        %v5416 = vshrl.u32 %v5415, 7
        %v5417 = vsub.s32 %v2114, %v5416
        %v5418 = vrot.slane %v4967, %v5417
        %v5419 = vsel %vm2119, %v5418, %v5414
        %v5420 = vlaneseq
        %v5421 = vshrl.u32 %v5420, 7
        %v5422 = vsub.s32 %v2121, %v5421
        %v5423 = vrot.slane %v4968, %v5422
        %v5424 = vsel %vm2126, %v5423, %v5419
        %v5425 = vlaneseq
        %v5426 = vshrl.u32 %v5425, 7
        %v5427 = vsub.s32 %v2128, %v5426
        %v5428 = vrot.slane %v4969, %v5427
        %v5429 = vsel %vm2133, %v5428, %v5424
        %v5430 = vlaneseq
        %v5431 = vshrl.u32 %v5430, 7
        %v5432 = vsub.s32 %v2135, %v5431
        %v5433 = vrot.slane %v4970, %v5432
        %v5434 = vsel %vm2140, %v5433, %v5429
        %v5435 = vlaneseq
        %v5436 = vshrl.u32 %v5435, 7
        %v5437 = vsub.s32 %v2142, %v5436
        %v5438 = vrot.slane %v4971, %v5437
        %v5439 = vsel %vm2147, %v5438, %v5434
        %v5440 = vlaneseq
        %v5441 = vshrl.u32 %v5440, 7
        %v5442 = vsub.s32 %v2149, %v5441
        %v5443 = vrot.slane %v4972, %v5442
        %v5444 = vsel %vm2154, %v5443, %v5439
        %v5445 = vlaneseq
        %v5446 = vshrl.u32 %v5445, 7
        %v5447 = vsub.s32 %v2156, %v5446
        %v5448 = vrot.slane %v4973, %v5447
        %v5449 = vsel %vm2161, %v5448, %v5444
        %v5450 = vlaneseq
        %v5451 = vshrl.u32 %v5450, 7
        %v5452 = vsub.s32 %v2163, %v5451
        %v5453 = vrot.slane %v4974, %v5452
        %v5454 = vsel %vm2168, %v5453, %v5449
        %v5455 = vlaneseq
        %v5456 = vshrl.u32 %v5455, 7
        %v5457 = vsub.s32 %v2170, %v5456
        %v5458 = vrot.slane %v4975, %v5457
        %v5459 = vsel %vm2175, %v5458, %v5454
        %v5460 = vlaneseq
        %v5461 = vshrl.u32 %v5460, 7
        %v5462 = vsub.s32 %v2177, %v5461
        %v5463 = vrot.slane %v4976, %v5462
        %v5464 = vsel %vm2182, %v5463, %v5459
        %v5465 = vlaneseq
        %v5466 = vshrl.u32 %v5465, 7
        %v5467 = vsub.s32 %v2184, %v5466
        %v5468 = vrot.slane %v4977, %v5467
        %v5469 = vsel %vm2189, %v5468, %v5464
        %v5470 = vlaneseq
        %v5471 = vshrl.u32 %v5470, 7
        %v5472 = vsub.s32 %v2191, %v5471
        %v5473 = vrot.slane %v4978, %v5472
        %v5474 = vsel %vm2196, %v5473, %v5469
        %v5475 = vlaneseq
        %v5476 = vshrl.u32 %v5475, 7
        %v5477 = vsub.s32 %v2198, %v5476
        %v5478 = vrot.slane %v4979, %v5477
        %v5479 = vsel %vm2203, %v5478, %v5474
        %v5480 = vlaneseq
        %v5481 = vshrl.u32 %v5480, 7
        %v5482 = vsub.s32 %v2205, %v5481
        %v5483 = vrot.slane %v4980, %v5482
        %v5484 = vsel %vm2210, %v5483, %v5479
        %v5485 = vlaneseq
        %v5486 = vshrl.u32 %v5485, 7
        %v5487 = vsub.s32 %v2212, %v5486
        %v5488 = vrot.slane %v4981, %v5487
        %v5489 = vsel %vm2217, %v5488, %v5484
        %v5490 = vlaneseq
        %v5491 = vshrl.u32 %v5490, 7
        %v5492 = vsub.s32 %v2109, %v5491
        %v5493 = vrot.slane %v4982, %v5492
        %v5494 = vlaneseq
        %v5495 = vshrl.u32 %v5494, 7
        %v5496 = vsub.s32 %v2114, %v5495
        %v5497 = vrot.slane %v4983, %v5496
        %v5498 = vsel %vm2119, %v5497, %v5493
        %v5499 = vlaneseq
        %v5500 = vshrl.u32 %v5499, 7
        %v5501 = vsub.s32 %v2121, %v5500
        %v5502 = vrot.slane %v4984, %v5501
        %v5503 = vsel %vm2126, %v5502, %v5498
        %v5504 = vlaneseq
        %v5505 = vshrl.u32 %v5504, 7
        %v5506 = vsub.s32 %v2128, %v5505
        %v5507 = vrot.slane %v4985, %v5506
        %v5508 = vsel %vm2133, %v5507, %v5503
        %v5509 = vlaneseq
        %v5510 = vshrl.u32 %v5509, 7
        %v5511 = vsub.s32 %v2135, %v5510
        %v5512 = vrot.slane %v4986, %v5511
        %v5513 = vsel %vm2140, %v5512, %v5508
        %v5514 = vlaneseq
        %v5515 = vshrl.u32 %v5514, 7
        %v5516 = vsub.s32 %v2142, %v5515
        %v5517 = vrot.slane %v4987, %v5516
        %v5518 = vsel %vm2147, %v5517, %v5513
        %v5519 = vlaneseq
        %v5520 = vshrl.u32 %v5519, 7
        %v5521 = vsub.s32 %v2149, %v5520
        %v5522 = vrot.slane %v4988, %v5521
        %v5523 = vsel %vm2154, %v5522, %v5518
        %v5524 = vlaneseq
        %v5525 = vshrl.u32 %v5524, 7
        %v5526 = vsub.s32 %v2156, %v5525
        %v5527 = vrot.slane %v4989, %v5526
        %v5528 = vsel %vm2161, %v5527, %v5523
        %v5529 = vlaneseq
        %v5530 = vshrl.u32 %v5529, 7
        %v5531 = vsub.s32 %v2163, %v5530
        %v5532 = vrot.slane %v4990, %v5531
        %v5533 = vsel %vm2168, %v5532, %v5528
        %v5534 = vlaneseq
        %v5535 = vshrl.u32 %v5534, 7
        %v5536 = vsub.s32 %v2170, %v5535
        %v5537 = vrot.slane %v4991, %v5536
        %v5538 = vsel %vm2175, %v5537, %v5533
        %v5539 = vlaneseq
        %v5540 = vshrl.u32 %v5539, 7
        %v5541 = vsub.s32 %v2177, %v5540
        %v5542 = vrot.slane %v4992, %v5541
        %v5543 = vsel %vm2182, %v5542, %v5538
        %v5544 = vlaneseq
        %v5545 = vshrl.u32 %v5544, 7
        %v5546 = vsub.s32 %v2184, %v5545
        %v5547 = vrot.slane %v4993, %v5546
        %v5548 = vsel %vm2189, %v5547, %v5543
        %v5549 = vlaneseq
        %v5550 = vshrl.u32 %v5549, 7
        %v5551 = vsub.s32 %v2191, %v5550
        %v5552 = vrot.slane %v4994, %v5551
        %v5553 = vsel %vm2196, %v5552, %v5548
        %v5554 = vlaneseq
        %v5555 = vshrl.u32 %v5554, 7
        %v5556 = vsub.s32 %v2198, %v5555
        %v5557 = vrot.slane %v4995, %v5556
        %v5558 = vsel %vm2203, %v5557, %v5553
        %v5559 = vlaneseq
        %v5560 = vshrl.u32 %v5559, 7
        %v5561 = vsub.s32 %v2205, %v5560
        %v5562 = vrot.slane %v4996, %v5561
        %v5563 = vsel %vm2210, %v5562, %v5558
        %v5564 = vlaneseq
        %v5565 = vshrl.u32 %v5564, 7
        %v5566 = vsub.s32 %v2212, %v5565
        %v5567 = vrot.slane %v4997, %v5566
        %v5568 = vsel %vm2217, %v5567, %v5563
        %v5569 = vlaneseq
        %v5570 = vshrl.u32 %v5569, 7
        %v5571 = vsub.s32 %v2109, %v5570
        %v5572 = vrot.slane %v4998, %v5571
        %v5573 = vlaneseq
        %v5574 = vshrl.u32 %v5573, 7
        %v5575 = vsub.s32 %v2114, %v5574
        %v5576 = vrot.slane %v4999, %v5575
        %v5577 = vsel %vm2119, %v5576, %v5572
        %v5578 = vlaneseq
        %v5579 = vshrl.u32 %v5578, 7
        %v5580 = vsub.s32 %v2121, %v5579
        %v5581 = vrot.slane %v5000, %v5580
        %v5582 = vsel %vm2126, %v5581, %v5577
        %v5583 = vlaneseq
        %v5584 = vshrl.u32 %v5583, 7
        %v5585 = vsub.s32 %v2128, %v5584
        %v5586 = vrot.slane %v5001, %v5585
        %v5587 = vsel %vm2133, %v5586, %v5582
        %v5588 = vlaneseq
        %v5589 = vshrl.u32 %v5588, 7
        %v5590 = vsub.s32 %v2135, %v5589
        %v5591 = vrot.slane %v5002, %v5590
        %v5592 = vsel %vm2140, %v5591, %v5587
        %v5593 = vlaneseq
        %v5594 = vshrl.u32 %v5593, 7
        %v5595 = vsub.s32 %v2142, %v5594
        %v5596 = vrot.slane %v5003, %v5595
        %v5597 = vsel %vm2147, %v5596, %v5592
        %v5598 = vlaneseq
        %v5599 = vshrl.u32 %v5598, 7
        %v5600 = vsub.s32 %v2149, %v5599
        %v5601 = vrot.slane %v5004, %v5600
        %v5602 = vsel %vm2154, %v5601, %v5597
        %v5603 = vlaneseq
        %v5604 = vshrl.u32 %v5603, 7
        %v5605 = vsub.s32 %v2156, %v5604
        %v5606 = vrot.slane %v5005, %v5605
        %v5607 = vsel %vm2161, %v5606, %v5602
        %v5608 = vlaneseq
        %v5609 = vshrl.u32 %v5608, 7
        %v5610 = vsub.s32 %v2163, %v5609
        %v5611 = vrot.slane %v5006, %v5610
        %v5612 = vsel %vm2168, %v5611, %v5607
        %v5613 = vlaneseq
        %v5614 = vshrl.u32 %v5613, 7
        %v5615 = vsub.s32 %v2170, %v5614
        %v5616 = vrot.slane %v5007, %v5615
        %v5617 = vsel %vm2175, %v5616, %v5612
        %v5618 = vlaneseq
        %v5619 = vshrl.u32 %v5618, 7
        %v5620 = vsub.s32 %v2177, %v5619
        %v5621 = vrot.slane %v5008, %v5620
        %v5622 = vsel %vm2182, %v5621, %v5617
        %v5623 = vlaneseq
        %v5624 = vshrl.u32 %v5623, 7
        %v5625 = vsub.s32 %v2184, %v5624
        %v5626 = vrot.slane %v5009, %v5625
        %v5627 = vsel %vm2189, %v5626, %v5622
        %v5628 = vlaneseq
        %v5629 = vshrl.u32 %v5628, 7
        %v5630 = vsub.s32 %v2191, %v5629
        %v5631 = vrot.slane %v5010, %v5630
        %v5632 = vsel %vm2196, %v5631, %v5627
        %v5633 = vlaneseq
        %v5634 = vshrl.u32 %v5633, 7
        %v5635 = vsub.s32 %v2198, %v5634
        %v5636 = vrot.slane %v5011, %v5635
        %v5637 = vsel %vm2203, %v5636, %v5632
        %v5638 = vlaneseq
        %v5639 = vshrl.u32 %v5638, 7
        %v5640 = vsub.s32 %v2205, %v5639
        %v5641 = vrot.slane %v5012, %v5640
        %v5642 = vsel %vm2210, %v5641, %v5637
        %v5643 = vlaneseq
        %v5644 = vshrl.u32 %v5643, 7
        %v5645 = vsub.s32 %v2212, %v5644
        %v5646 = vrot.slane %v5013, %v5645
        %v5647 = vsel %vm2217, %v5646, %v5642
        %v5648 = vlaneseq
        %v5649 = vshrl.u32 %v5648, 7
        %v5650 = vsub.s32 %v2109, %v5649
        %v5651 = vrot.slane %v5014, %v5650
        %v5652 = vlaneseq
        %v5653 = vshrl.u32 %v5652, 7
        %v5654 = vsub.s32 %v2114, %v5653
        %v5655 = vrot.slane %v5015, %v5654
        %v5656 = vsel %vm2119, %v5655, %v5651
        %v5657 = vlaneseq
        %v5658 = vshrl.u32 %v5657, 7
        %v5659 = vsub.s32 %v2121, %v5658
        %v5660 = vrot.slane %v5016, %v5659
        %v5661 = vsel %vm2126, %v5660, %v5656
        %v5662 = vlaneseq
        %v5663 = vshrl.u32 %v5662, 7
        %v5664 = vsub.s32 %v2128, %v5663
        %v5665 = vrot.slane %v5017, %v5664
        %v5666 = vsel %vm2133, %v5665, %v5661
        %v5667 = vlaneseq
        %v5668 = vshrl.u32 %v5667, 7
        %v5669 = vsub.s32 %v2135, %v5668
        %v5670 = vrot.slane %v5018, %v5669
        %v5671 = vsel %vm2140, %v5670, %v5666
        %v5672 = vlaneseq
        %v5673 = vshrl.u32 %v5672, 7
        %v5674 = vsub.s32 %v2142, %v5673
        %v5675 = vrot.slane %v5019, %v5674
        %v5676 = vsel %vm2147, %v5675, %v5671
        %v5677 = vlaneseq
        %v5678 = vshrl.u32 %v5677, 7
        %v5679 = vsub.s32 %v2149, %v5678
        %v5680 = vrot.slane %v5020, %v5679
        %v5681 = vsel %vm2154, %v5680, %v5676
        %v5682 = vlaneseq
        %v5683 = vshrl.u32 %v5682, 7
        %v5684 = vsub.s32 %v2156, %v5683
        %v5685 = vrot.slane %v5021, %v5684
        %v5686 = vsel %vm2161, %v5685, %v5681
        %v5687 = vlaneseq
        %v5688 = vshrl.u32 %v5687, 7
        %v5689 = vsub.s32 %v2163, %v5688
        %v5690 = vrot.slane %v5022, %v5689
        %v5691 = vsel %vm2168, %v5690, %v5686
        %v5692 = vlaneseq
        %v5693 = vshrl.u32 %v5692, 7
        %v5694 = vsub.s32 %v2170, %v5693
        %v5695 = vrot.slane %v5023, %v5694
        %v5696 = vsel %vm2175, %v5695, %v5691
        %v5697 = vlaneseq
        %v5698 = vshrl.u32 %v5697, 7
        %v5699 = vsub.s32 %v2177, %v5698
        %v5700 = vrot.slane %v5024, %v5699
        %v5701 = vsel %vm2182, %v5700, %v5696
        %v5702 = vlaneseq
        %v5703 = vshrl.u32 %v5702, 7
        %v5704 = vsub.s32 %v2184, %v5703
        %v5705 = vrot.slane %v5025, %v5704
        %v5706 = vsel %vm2189, %v5705, %v5701
        %v5707 = vlaneseq
        %v5708 = vshrl.u32 %v5707, 7
        %v5709 = vsub.s32 %v2191, %v5708
        %v5710 = vrot.slane %v5026, %v5709
        %v5711 = vsel %vm2196, %v5710, %v5706
        %v5712 = vlaneseq
        %v5713 = vshrl.u32 %v5712, 7
        %v5714 = vsub.s32 %v2198, %v5713
        %v5715 = vrot.slane %v5027, %v5714
        %v5716 = vsel %vm2203, %v5715, %v5711
        %v5717 = vlaneseq
        %v5718 = vshrl.u32 %v5717, 7
        %v5719 = vsub.s32 %v2205, %v5718
        %v5720 = vrot.slane %v5028, %v5719
        %v5721 = vsel %vm2210, %v5720, %v5716
        %v5722 = vlaneseq
        %v5723 = vshrl.u32 %v5722, 7
        %v5724 = vsub.s32 %v2212, %v5723
        %v5725 = vrot.slane %v5029, %v5724
        %v5726 = vsel %vm2217, %v5725, %v5721
        %v5727 = vlaneseq
        %v5728 = vshrl.u32 %v5727, 7
        %v5729 = vsub.s32 %v2109, %v5728
        %v5730 = vrot.slane %v5030, %v5729
        %v5731 = vlaneseq
        %v5732 = vshrl.u32 %v5731, 7
        %v5733 = vsub.s32 %v2114, %v5732
        %v5734 = vrot.slane %v5031, %v5733
        %v5735 = vsel %vm2119, %v5734, %v5730
        %v5736 = vlaneseq
        %v5737 = vshrl.u32 %v5736, 7
        %v5738 = vsub.s32 %v2121, %v5737
        %v5739 = vrot.slane %v5032, %v5738
        %v5740 = vsel %vm2126, %v5739, %v5735
        %v5741 = vlaneseq
        %v5742 = vshrl.u32 %v5741, 7
        %v5743 = vsub.s32 %v2128, %v5742
        %v5744 = vrot.slane %v5033, %v5743
        %v5745 = vsel %vm2133, %v5744, %v5740
        %v5746 = vlaneseq
        %v5747 = vshrl.u32 %v5746, 7
        %v5748 = vsub.s32 %v2135, %v5747
        %v5749 = vrot.slane %v5034, %v5748
        %v5750 = vsel %vm2140, %v5749, %v5745
        %v5751 = vlaneseq
        %v5752 = vshrl.u32 %v5751, 7
        %v5753 = vsub.s32 %v2142, %v5752
        %v5754 = vrot.slane %v5035, %v5753
        %v5755 = vsel %vm2147, %v5754, %v5750
        %v5756 = vlaneseq
        %v5757 = vshrl.u32 %v5756, 7
        %v5758 = vsub.s32 %v2149, %v5757
        %v5759 = vrot.slane %v5036, %v5758
        %v5760 = vsel %vm2154, %v5759, %v5755
        %v5761 = vlaneseq
        %v5762 = vshrl.u32 %v5761, 7
        %v5763 = vsub.s32 %v2156, %v5762
        %v5764 = vrot.slane %v5037, %v5763
        %v5765 = vsel %vm2161, %v5764, %v5760
        %v5766 = vlaneseq
        %v5767 = vshrl.u32 %v5766, 7
        %v5768 = vsub.s32 %v2163, %v5767
        %v5769 = vrot.slane %v5038, %v5768
        %v5770 = vsel %vm2168, %v5769, %v5765
        %v5771 = vlaneseq
        %v5772 = vshrl.u32 %v5771, 7
        %v5773 = vsub.s32 %v2170, %v5772
        %v5774 = vrot.slane %v5039, %v5773
        %v5775 = vsel %vm2175, %v5774, %v5770
        %v5776 = vlaneseq
        %v5777 = vshrl.u32 %v5776, 7
        %v5778 = vsub.s32 %v2177, %v5777
        %v5779 = vrot.slane %v5040, %v5778
        %v5780 = vsel %vm2182, %v5779, %v5775
        %v5781 = vlaneseq
        %v5782 = vshrl.u32 %v5781, 7
        %v5783 = vsub.s32 %v2184, %v5782
        %v5784 = vrot.slane %v5041, %v5783
        %v5785 = vsel %vm2189, %v5784, %v5780
        %v5786 = vlaneseq
        %v5787 = vshrl.u32 %v5786, 7
        %v5788 = vsub.s32 %v2191, %v5787
        %v5789 = vrot.slane %v5042, %v5788
        %v5790 = vsel %vm2196, %v5789, %v5785
        %v5791 = vlaneseq
        %v5792 = vshrl.u32 %v5791, 7
        %v5793 = vsub.s32 %v2198, %v5792
        %v5794 = vrot.slane %v5043, %v5793
        %v5795 = vsel %vm2203, %v5794, %v5790
        %v5796 = vlaneseq
        %v5797 = vshrl.u32 %v5796, 7
        %v5798 = vsub.s32 %v2205, %v5797
        %v5799 = vrot.slane %v5044, %v5798
        %v5800 = vsel %vm2210, %v5799, %v5795
        %v5801 = vlaneseq
        %v5802 = vshrl.u32 %v5801, 7
        %v5803 = vsub.s32 %v2212, %v5802
        %v5804 = vrot.slane %v5045, %v5803
        %v5805 = vsel %vm2217, %v5804, %v5800
        %v5806 = vsel %vm2772, %v5331, %v5252
        %v5807 = vsel %vm2774, %v5410, %v5806
        %v5808 = vsel %vm2776, %v5489, %v5807
        %v5809 = vsel %vm2778, %v5568, %v5808
        %v5810 = vsel %vm2780, %v5647, %v5809
        %v5811 = vsel %vm2782, %v5726, %v5810
        %v5812 = vsel %vm2784, %v5805, %v5811
        %v5814 = vmul.f32 %v577, %v5812
        %v5815 = vlaneseq
        %v5816 = vshrl.u32 %v5815, 7
        %v5817 = vsub.s32 0, %v5816
        %v5818 = vrot.slane %v5814, %v5817
        %5820 = vbcast.lane.b32.xlu0 %v5818, 256
        %v5821 = vpop.permute.xlu0 %5820
        %s5823 = sor.u32 256, 8
        %5824 = vbcast.lane.b32.xlu0 %v5818, %s5823
        %v5825 = vpop.permute.xlu0 %5824
        %s5827 = sor.u32 256, 16
        %5828 = vbcast.lane.b32.xlu0 %v5818, %s5827
        %v5829 = vpop.permute.xlu0 %5828
        %s5831 = sor.u32 256, 24
        %5832 = vbcast.lane.b32.xlu0 %v5818, %s5831
        %v5833 = vpop.permute.xlu0 %5832
        %s5835 = sor.u32 256, 32
        %5836 = vbcast.lane.b32.xlu0 %v5818, %s5835
        %v5837 = vpop.permute.xlu0 %5836
        %s5839 = sor.u32 256, 40
        %5840 = vbcast.lane.b32.xlu0 %v5818, %s5839
        %v5841 = vpop.permute.xlu0 %5840
        %s5843 = sor.u32 256, 48
        %5844 = vbcast.lane.b32.xlu0 %v5818, %s5843
        %v5845 = vpop.permute.xlu0 %5844
        %s5847 = sor.u32 256, 56
        %5848 = vbcast.lane.b32.xlu0 %v5818, %s5847
        %v5849 = vpop.permute.xlu0 %5848
        %s5851 = sor.u32 256, 64
        %5852 = vbcast.lane.b32.xlu0 %v5818, %s5851
        %v5853 = vpop.permute.xlu0 %5852
        %s5855 = sor.u32 256, 72
        %5856 = vbcast.lane.b32.xlu0 %v5818, %s5855
        %v5857 = vpop.permute.xlu0 %5856
        %s5859 = sor.u32 256, 80
        %5860 = vbcast.lane.b32.xlu0 %v5818, %s5859
        %v5861 = vpop.permute.xlu0 %5860
        %s5863 = sor.u32 256, 88
        %5864 = vbcast.lane.b32.xlu0 %v5818, %s5863
        %v5865 = vpop.permute.xlu0 %5864
        %s5867 = sor.u32 256, 96
        %5868 = vbcast.lane.b32.xlu0 %v5818, %s5867
        %v5869 = vpop.permute.xlu0 %5868
        %s5871 = sor.u32 256, 104
        %5872 = vbcast.lane.b32.xlu0 %v5818, %s5871
        %v5873 = vpop.permute.xlu0 %5872
        %s5875 = sor.u32 256, 112
        %5876 = vbcast.lane.b32.xlu0 %v5818, %s5875
        %v5877 = vpop.permute.xlu0 %5876
        %s5879 = sor.u32 256, 120
        %5880 = vbcast.lane.b32.xlu0 %v5818, %s5879
        %v5881 = vpop.permute.xlu0 %5880
        %v5882 = vlaneseq
        %v5883 = vshrl.u32 %v5882, 7
        %v5884 = vsub.s32 1, %v5883
        %v5885 = vrot.slane %v5814, %v5884
        %5887 = vbcast.lane.b32.xlu0 %v5885, 256
        %v5888 = vpop.permute.xlu0 %5887
        %s5890 = sor.u32 256, 8
        %5891 = vbcast.lane.b32.xlu0 %v5885, %s5890
        %v5892 = vpop.permute.xlu0 %5891
        %s5894 = sor.u32 256, 16
        %5895 = vbcast.lane.b32.xlu0 %v5885, %s5894
        %v5896 = vpop.permute.xlu0 %5895
        %s5898 = sor.u32 256, 24
        %5899 = vbcast.lane.b32.xlu0 %v5885, %s5898
        %v5900 = vpop.permute.xlu0 %5899
        %s5902 = sor.u32 256, 32
        %5903 = vbcast.lane.b32.xlu0 %v5885, %s5902
        %v5904 = vpop.permute.xlu0 %5903
        %s5906 = sor.u32 256, 40
        %5907 = vbcast.lane.b32.xlu0 %v5885, %s5906
        %v5908 = vpop.permute.xlu0 %5907
        %s5910 = sor.u32 256, 48
        %5911 = vbcast.lane.b32.xlu0 %v5885, %s5910
        %v5912 = vpop.permute.xlu0 %5911
        %s5914 = sor.u32 256, 56
        %5915 = vbcast.lane.b32.xlu0 %v5885, %s5914
        %v5916 = vpop.permute.xlu0 %5915
        %s5918 = sor.u32 256, 64
        %5919 = vbcast.lane.b32.xlu0 %v5885, %s5918
        %v5920 = vpop.permute.xlu0 %5919
        %s5922 = sor.u32 256, 72
        %5923 = vbcast.lane.b32.xlu0 %v5885, %s5922
        %v5924 = vpop.permute.xlu0 %5923
        %s5926 = sor.u32 256, 80
        %5927 = vbcast.lane.b32.xlu0 %v5885, %s5926
        %v5928 = vpop.permute.xlu0 %5927
        %s5930 = sor.u32 256, 88
        %5931 = vbcast.lane.b32.xlu0 %v5885, %s5930
        %v5932 = vpop.permute.xlu0 %5931
        %s5934 = sor.u32 256, 96
        %5935 = vbcast.lane.b32.xlu0 %v5885, %s5934
        %v5936 = vpop.permute.xlu0 %5935
        %s5938 = sor.u32 256, 104
        %5939 = vbcast.lane.b32.xlu0 %v5885, %s5938
        %v5940 = vpop.permute.xlu0 %5939
        %s5942 = sor.u32 256, 112
        %5943 = vbcast.lane.b32.xlu0 %v5885, %s5942
        %v5944 = vpop.permute.xlu0 %5943
        %s5946 = sor.u32 256, 120
        %5947 = vbcast.lane.b32.xlu0 %v5885, %s5946
        %v5948 = vpop.permute.xlu0 %5947
        %v5949 = vlaneseq
        %v5950 = vshrl.u32 %v5949, 7
        %v5951 = vsub.s32 2, %v5950
        %v5952 = vrot.slane %v5814, %v5951
        %5954 = vbcast.lane.b32.xlu0 %v5952, 256
        %v5955 = vpop.permute.xlu0 %5954
        %s5957 = sor.u32 256, 8
        %5958 = vbcast.lane.b32.xlu0 %v5952, %s5957
        %v5959 = vpop.permute.xlu0 %5958
        %s5961 = sor.u32 256, 16
        %5962 = vbcast.lane.b32.xlu0 %v5952, %s5961
        %v5963 = vpop.permute.xlu0 %5962
        %s5965 = sor.u32 256, 24
        %5966 = vbcast.lane.b32.xlu0 %v5952, %s5965
        %v5967 = vpop.permute.xlu0 %5966
        %s5969 = sor.u32 256, 32
        %5970 = vbcast.lane.b32.xlu0 %v5952, %s5969
        %v5971 = vpop.permute.xlu0 %5970
        %s5973 = sor.u32 256, 40
        %5974 = vbcast.lane.b32.xlu0 %v5952, %s5973
        %v5975 = vpop.permute.xlu0 %5974
        %s5977 = sor.u32 256, 48
        %5978 = vbcast.lane.b32.xlu0 %v5952, %s5977
        %v5979 = vpop.permute.xlu0 %5978
        %s5981 = sor.u32 256, 56
        %5982 = vbcast.lane.b32.xlu0 %v5952, %s5981
        %v5983 = vpop.permute.xlu0 %5982
        %s5985 = sor.u32 256, 64
        %5986 = vbcast.lane.b32.xlu0 %v5952, %s5985
        %v5987 = vpop.permute.xlu0 %5986
        %s5989 = sor.u32 256, 72
        %5990 = vbcast.lane.b32.xlu0 %v5952, %s5989
        %v5991 = vpop.permute.xlu0 %5990
        %s5993 = sor.u32 256, 80
        %5994 = vbcast.lane.b32.xlu0 %v5952, %s5993
        %v5995 = vpop.permute.xlu0 %5994
        %s5997 = sor.u32 256, 88
        %5998 = vbcast.lane.b32.xlu0 %v5952, %s5997
        %v5999 = vpop.permute.xlu0 %5998
        %s6001 = sor.u32 256, 96
        %6002 = vbcast.lane.b32.xlu0 %v5952, %s6001
        %v6003 = vpop.permute.xlu0 %6002
        %s6005 = sor.u32 256, 104
        %6006 = vbcast.lane.b32.xlu0 %v5952, %s6005
        %v6007 = vpop.permute.xlu0 %6006
        %s6009 = sor.u32 256, 112
        %6010 = vbcast.lane.b32.xlu0 %v5952, %s6009
        %v6011 = vpop.permute.xlu0 %6010
        %s6013 = sor.u32 256, 120
        %6014 = vbcast.lane.b32.xlu0 %v5952, %s6013
        %v6015 = vpop.permute.xlu0 %6014
        %v6016 = vlaneseq
        %v6017 = vshrl.u32 %v6016, 7
        %v6018 = vsub.s32 3, %v6017
        %v6019 = vrot.slane %v5814, %v6018
        %6021 = vbcast.lane.b32.xlu0 %v6019, 256
        %v6022 = vpop.permute.xlu0 %6021
        %s6024 = sor.u32 256, 8
        %6025 = vbcast.lane.b32.xlu0 %v6019, %s6024
        %v6026 = vpop.permute.xlu0 %6025
        %s6028 = sor.u32 256, 16
        %6029 = vbcast.lane.b32.xlu0 %v6019, %s6028
        %v6030 = vpop.permute.xlu0 %6029
        %s6032 = sor.u32 256, 24
        %6033 = vbcast.lane.b32.xlu0 %v6019, %s6032
        %v6034 = vpop.permute.xlu0 %6033
        %s6036 = sor.u32 256, 32
        %6037 = vbcast.lane.b32.xlu0 %v6019, %s6036
        %v6038 = vpop.permute.xlu0 %6037
        %s6040 = sor.u32 256, 40
        %6041 = vbcast.lane.b32.xlu0 %v6019, %s6040
        %v6042 = vpop.permute.xlu0 %6041
        %s6044 = sor.u32 256, 48
        %6045 = vbcast.lane.b32.xlu0 %v6019, %s6044
        %v6046 = vpop.permute.xlu0 %6045
        %s6048 = sor.u32 256, 56
        %6049 = vbcast.lane.b32.xlu0 %v6019, %s6048
        %v6050 = vpop.permute.xlu0 %6049
        %s6052 = sor.u32 256, 64
        %6053 = vbcast.lane.b32.xlu0 %v6019, %s6052
        %v6054 = vpop.permute.xlu0 %6053
        %s6056 = sor.u32 256, 72
        %6057 = vbcast.lane.b32.xlu0 %v6019, %s6056
        %v6058 = vpop.permute.xlu0 %6057
        %s6060 = sor.u32 256, 80
        %6061 = vbcast.lane.b32.xlu0 %v6019, %s6060
        %v6062 = vpop.permute.xlu0 %6061
        %s6064 = sor.u32 256, 88
        %6065 = vbcast.lane.b32.xlu0 %v6019, %s6064
        %v6066 = vpop.permute.xlu0 %6065
        %s6068 = sor.u32 256, 96
        %6069 = vbcast.lane.b32.xlu0 %v6019, %s6068
        %v6070 = vpop.permute.xlu0 %6069
        %s6072 = sor.u32 256, 104
        %6073 = vbcast.lane.b32.xlu0 %v6019, %s6072
        %v6074 = vpop.permute.xlu0 %6073
        %s6076 = sor.u32 256, 112
        %6077 = vbcast.lane.b32.xlu0 %v6019, %s6076
        %v6078 = vpop.permute.xlu0 %6077
        %s6080 = sor.u32 256, 120
        %6081 = vbcast.lane.b32.xlu0 %v6019, %s6080
        %v6082 = vpop.permute.xlu0 %6081
        %v6083 = vlaneseq
        %v6084 = vshrl.u32 %v6083, 7
        %v6085 = vsub.s32 4, %v6084
        %v6086 = vrot.slane %v5814, %v6085
        %6088 = vbcast.lane.b32.xlu0 %v6086, 256
        %v6089 = vpop.permute.xlu0 %6088
        %s6091 = sor.u32 256, 8
        %6092 = vbcast.lane.b32.xlu0 %v6086, %s6091
        %v6093 = vpop.permute.xlu0 %6092
        %s6095 = sor.u32 256, 16
        %6096 = vbcast.lane.b32.xlu0 %v6086, %s6095
        %v6097 = vpop.permute.xlu0 %6096
        %s6099 = sor.u32 256, 24
        %6100 = vbcast.lane.b32.xlu0 %v6086, %s6099
        %v6101 = vpop.permute.xlu0 %6100
        %s6103 = sor.u32 256, 32
        %6104 = vbcast.lane.b32.xlu0 %v6086, %s6103
        %v6105 = vpop.permute.xlu0 %6104
        %s6107 = sor.u32 256, 40
        %6108 = vbcast.lane.b32.xlu0 %v6086, %s6107
        %v6109 = vpop.permute.xlu0 %6108
        %s6111 = sor.u32 256, 48
        %6112 = vbcast.lane.b32.xlu0 %v6086, %s6111
        %v6113 = vpop.permute.xlu0 %6112
        %s6115 = sor.u32 256, 56
        %6116 = vbcast.lane.b32.xlu0 %v6086, %s6115
        %v6117 = vpop.permute.xlu0 %6116
        %s6119 = sor.u32 256, 64
        %6120 = vbcast.lane.b32.xlu0 %v6086, %s6119
        %v6121 = vpop.permute.xlu0 %6120
        %s6123 = sor.u32 256, 72
        %6124 = vbcast.lane.b32.xlu0 %v6086, %s6123
        %v6125 = vpop.permute.xlu0 %6124
        %s6127 = sor.u32 256, 80
        %6128 = vbcast.lane.b32.xlu0 %v6086, %s6127
        %v6129 = vpop.permute.xlu0 %6128
        %s6131 = sor.u32 256, 88
        %6132 = vbcast.lane.b32.xlu0 %v6086, %s6131
        %v6133 = vpop.permute.xlu0 %6132
        %s6135 = sor.u32 256, 96
        %6136 = vbcast.lane.b32.xlu0 %v6086, %s6135
        %v6137 = vpop.permute.xlu0 %6136
        %s6139 = sor.u32 256, 104
        %6140 = vbcast.lane.b32.xlu0 %v6086, %s6139
        %v6141 = vpop.permute.xlu0 %6140
        %s6143 = sor.u32 256, 112
        %6144 = vbcast.lane.b32.xlu0 %v6086, %s6143
        %v6145 = vpop.permute.xlu0 %6144
        %s6147 = sor.u32 256, 120
        %6148 = vbcast.lane.b32.xlu0 %v6086, %s6147
        %v6149 = vpop.permute.xlu0 %6148
        %v6150 = vlaneseq
        %v6151 = vshrl.u32 %v6150, 7
        %v6152 = vsub.s32 5, %v6151
        %v6153 = vrot.slane %v5814, %v6152
        %6155 = vbcast.lane.b32.xlu0 %v6153, 256
        %v6156 = vpop.permute.xlu0 %6155
        %s6158 = sor.u32 256, 8
        %6159 = vbcast.lane.b32.xlu0 %v6153, %s6158
        %v6160 = vpop.permute.xlu0 %6159
        %s6162 = sor.u32 256, 16
        %6163 = vbcast.lane.b32.xlu0 %v6153, %s6162
        %v6164 = vpop.permute.xlu0 %6163
        %s6166 = sor.u32 256, 24
        %6167 = vbcast.lane.b32.xlu0 %v6153, %s6166
        %v6168 = vpop.permute.xlu0 %6167
        %s6170 = sor.u32 256, 32
        %6171 = vbcast.lane.b32.xlu0 %v6153, %s6170
        %v6172 = vpop.permute.xlu0 %6171
        %s6174 = sor.u32 256, 40
        %6175 = vbcast.lane.b32.xlu0 %v6153, %s6174
        %v6176 = vpop.permute.xlu0 %6175
        %s6178 = sor.u32 256, 48
        %6179 = vbcast.lane.b32.xlu0 %v6153, %s6178
        %v6180 = vpop.permute.xlu0 %6179
        %s6182 = sor.u32 256, 56
        %6183 = vbcast.lane.b32.xlu0 %v6153, %s6182
        %v6184 = vpop.permute.xlu0 %6183
        %s6186 = sor.u32 256, 64
        %6187 = vbcast.lane.b32.xlu0 %v6153, %s6186
        %v6188 = vpop.permute.xlu0 %6187
        %s6190 = sor.u32 256, 72
        %6191 = vbcast.lane.b32.xlu0 %v6153, %s6190
        %v6192 = vpop.permute.xlu0 %6191
        %s6194 = sor.u32 256, 80
        %6195 = vbcast.lane.b32.xlu0 %v6153, %s6194
        %v6196 = vpop.permute.xlu0 %6195
        %s6198 = sor.u32 256, 88
        %6199 = vbcast.lane.b32.xlu0 %v6153, %s6198
        %v6200 = vpop.permute.xlu0 %6199
        %s6202 = sor.u32 256, 96
        %6203 = vbcast.lane.b32.xlu0 %v6153, %s6202
        %v6204 = vpop.permute.xlu0 %6203
        %s6206 = sor.u32 256, 104
        %6207 = vbcast.lane.b32.xlu0 %v6153, %s6206
        %v6208 = vpop.permute.xlu0 %6207
        %s6210 = sor.u32 256, 112
        %6211 = vbcast.lane.b32.xlu0 %v6153, %s6210
        %v6212 = vpop.permute.xlu0 %6211
        %s6214 = sor.u32 256, 120
        %6215 = vbcast.lane.b32.xlu0 %v6153, %s6214
        %v6216 = vpop.permute.xlu0 %6215
        %v6217 = vlaneseq
        %v6218 = vshrl.u32 %v6217, 7
        %v6219 = vsub.s32 6, %v6218
        %v6220 = vrot.slane %v5814, %v6219
        %6222 = vbcast.lane.b32.xlu0 %v6220, 256
        %v6223 = vpop.permute.xlu0 %6222
        %s6225 = sor.u32 256, 8
        %6226 = vbcast.lane.b32.xlu0 %v6220, %s6225
        %v6227 = vpop.permute.xlu0 %6226
        %s6229 = sor.u32 256, 16
        %6230 = vbcast.lane.b32.xlu0 %v6220, %s6229
        %v6231 = vpop.permute.xlu0 %6230
        %s6233 = sor.u32 256, 24
        %6234 = vbcast.lane.b32.xlu0 %v6220, %s6233
        %v6235 = vpop.permute.xlu0 %6234
        %s6237 = sor.u32 256, 32
        %6238 = vbcast.lane.b32.xlu0 %v6220, %s6237
        %v6239 = vpop.permute.xlu0 %6238
        %s6241 = sor.u32 256, 40
        %6242 = vbcast.lane.b32.xlu0 %v6220, %s6241
        %v6243 = vpop.permute.xlu0 %6242
        %s6245 = sor.u32 256, 48
        %6246 = vbcast.lane.b32.xlu0 %v6220, %s6245
        %v6247 = vpop.permute.xlu0 %6246
        %s6249 = sor.u32 256, 56
        %6250 = vbcast.lane.b32.xlu0 %v6220, %s6249
        %v6251 = vpop.permute.xlu0 %6250
        %s6253 = sor.u32 256, 64
        %6254 = vbcast.lane.b32.xlu0 %v6220, %s6253
        %v6255 = vpop.permute.xlu0 %6254
        %s6257 = sor.u32 256, 72
        %6258 = vbcast.lane.b32.xlu0 %v6220, %s6257
        %v6259 = vpop.permute.xlu0 %6258
        %s6261 = sor.u32 256, 80
        %6262 = vbcast.lane.b32.xlu0 %v6220, %s6261
        %v6263 = vpop.permute.xlu0 %6262
        %s6265 = sor.u32 256, 88
        %6266 = vbcast.lane.b32.xlu0 %v6220, %s6265
        %v6267 = vpop.permute.xlu0 %6266
        %s6269 = sor.u32 256, 96
        %6270 = vbcast.lane.b32.xlu0 %v6220, %s6269
        %v6271 = vpop.permute.xlu0 %6270
        %s6273 = sor.u32 256, 104
        %6274 = vbcast.lane.b32.xlu0 %v6220, %s6273
        %v6275 = vpop.permute.xlu0 %6274
        %s6277 = sor.u32 256, 112
        %6278 = vbcast.lane.b32.xlu0 %v6220, %s6277
        %v6279 = vpop.permute.xlu0 %6278
        %s6281 = sor.u32 256, 120
        %6282 = vbcast.lane.b32.xlu0 %v6220, %s6281
        %v6283 = vpop.permute.xlu0 %6282
        %v6284 = vlaneseq
        %v6285 = vshrl.u32 %v6284, 7
        %v6286 = vsub.s32 7, %v6285
        %v6287 = vrot.slane %v5814, %v6286
        %6289 = vbcast.lane.b32.xlu0 %v6287, 256
        %v6290 = vpop.permute.xlu0 %6289
        %s6292 = sor.u32 256, 8
        %6293 = vbcast.lane.b32.xlu0 %v6287, %s6292
        %v6294 = vpop.permute.xlu0 %6293
        %s6296 = sor.u32 256, 16
        %6297 = vbcast.lane.b32.xlu0 %v6287, %s6296
        %v6298 = vpop.permute.xlu0 %6297
        %s6300 = sor.u32 256, 24
        %6301 = vbcast.lane.b32.xlu0 %v6287, %s6300
        %v6302 = vpop.permute.xlu0 %6301
        %s6304 = sor.u32 256, 32
        %6305 = vbcast.lane.b32.xlu0 %v6287, %s6304
        %v6306 = vpop.permute.xlu0 %6305
        %s6308 = sor.u32 256, 40
        %6309 = vbcast.lane.b32.xlu0 %v6287, %s6308
        %v6310 = vpop.permute.xlu0 %6309
        %s6312 = sor.u32 256, 48
        %6313 = vbcast.lane.b32.xlu0 %v6287, %s6312
        %v6314 = vpop.permute.xlu0 %6313
        %s6316 = sor.u32 256, 56
        %6317 = vbcast.lane.b32.xlu0 %v6287, %s6316
        %v6318 = vpop.permute.xlu0 %6317
        %s6320 = sor.u32 256, 64
        %6321 = vbcast.lane.b32.xlu0 %v6287, %s6320
        %v6322 = vpop.permute.xlu0 %6321
        %s6324 = sor.u32 256, 72
        %6325 = vbcast.lane.b32.xlu0 %v6287, %s6324
        %v6326 = vpop.permute.xlu0 %6325
        %s6328 = sor.u32 256, 80
        %6329 = vbcast.lane.b32.xlu0 %v6287, %s6328
        %v6330 = vpop.permute.xlu0 %6329
        %s6332 = sor.u32 256, 88
        %6333 = vbcast.lane.b32.xlu0 %v6287, %s6332
        %v6334 = vpop.permute.xlu0 %6333
        %s6336 = sor.u32 256, 96
        %6337 = vbcast.lane.b32.xlu0 %v6287, %s6336
        %v6338 = vpop.permute.xlu0 %6337
        %s6340 = sor.u32 256, 104
        %6341 = vbcast.lane.b32.xlu0 %v6287, %s6340
        %v6342 = vpop.permute.xlu0 %6341
        %s6344 = sor.u32 256, 112
        %6345 = vbcast.lane.b32.xlu0 %v6287, %s6344
        %v6346 = vpop.permute.xlu0 %6345
        %s6348 = sor.u32 256, 120
        %6349 = vbcast.lane.b32.xlu0 %v6287, %s6348
        %v6350 = vpop.permute.xlu0 %6349
        %v6351 = vmul.f32 %v5821, %v4407
        %v6352 = vmul.f32 %v5825, %v4409
        %v6353 = vmul.f32 %v5829, %v4411
        %v6354 = vmul.f32 %v5833, %v4413
        %v6355 = vmul.f32 %v5837, %v4415
        %v6356 = vmul.f32 %v5841, %v4417
        %v6357 = vmul.f32 %v5845, %v4419
        %v6358 = vmul.f32 %v5849, %v4421
        %v6359 = vmul.f32 %v5853, %v4423
        %v6360 = vmul.f32 %v5857, %v4425
        %v6361 = vmul.f32 %v5861, %v4427
        %v6362 = vmul.f32 %v5865, %v4429
        %v6363 = vmul.f32 %v5869, %v4431
        %v6364 = vmul.f32 %v5873, %v4433
        %v6365 = vmul.f32 %v5877, %v4435
        %v6366 = vmul.f32 %v5881, %v4437
        %v6367 = vmul.f32 %v5888, %v4439
        %v6368 = vmul.f32 %v5892, %v4441
        %v6369 = vmul.f32 %v5896, %v4443
        %v6370 = vmul.f32 %v5900, %v4445
        %v6371 = vmul.f32 %v5904, %v4447
        %v6372 = vmul.f32 %v5908, %v4449
        %v6373 = vmul.f32 %v5912, %v4451
        %v6374 = vmul.f32 %v5916, %v4453
        %v6375 = vmul.f32 %v5920, %v4455
        %v6376 = vmul.f32 %v5924, %v4457
        %v6377 = vmul.f32 %v5928, %v4459
        %v6378 = vmul.f32 %v5932, %v4461
        %v6379 = vmul.f32 %v5936, %v4463
        %v6380 = vmul.f32 %v5940, %v4465
        %v6381 = vmul.f32 %v5944, %v4467
        %v6382 = vmul.f32 %v5948, %v4469
        %v6383 = vmul.f32 %v5955, %v4471
        %v6384 = vmul.f32 %v5959, %v4473
        %v6385 = vmul.f32 %v5963, %v4475
        %v6386 = vmul.f32 %v5967, %v4477
        %v6387 = vmul.f32 %v5971, %v4479
        %v6388 = vmul.f32 %v5975, %v4481
        %v6389 = vmul.f32 %v5979, %v4483
        %v6390 = vmul.f32 %v5983, %v4485
        %v6391 = vmul.f32 %v5987, %v4487
        %v6392 = vmul.f32 %v5991, %v4489
        %v6393 = vmul.f32 %v5995, %v4491
        %v6394 = vmul.f32 %v5999, %v4493
        %v6395 = vmul.f32 %v6003, %v4495
        %v6396 = vmul.f32 %v6007, %v4497
        %v6397 = vmul.f32 %v6011, %v4499
        %v6398 = vmul.f32 %v6015, %v4501
        %v6399 = vmul.f32 %v6022, %v4503
        %v6400 = vmul.f32 %v6026, %v4505
        %v6401 = vmul.f32 %v6030, %v4507
        %v6402 = vmul.f32 %v6034, %v4509
        %v6403 = vmul.f32 %v6038, %v4511
        %v6404 = vmul.f32 %v6042, %v4513
        %v6405 = vmul.f32 %v6046, %v4515
        %v6406 = vmul.f32 %v6050, %v4517
        %v6407 = vmul.f32 %v6054, %v4519
        %v6408 = vmul.f32 %v6058, %v4521
        %v6409 = vmul.f32 %v6062, %v4523
        %v6410 = vmul.f32 %v6066, %v4525
        %v6411 = vmul.f32 %v6070, %v4527
        %v6412 = vmul.f32 %v6074, %v4529
        %v6413 = vmul.f32 %v6078, %v4531
        %v6414 = vmul.f32 %v6082, %v4533
        %v6415 = vmul.f32 %v6089, %v4535
        %v6416 = vmul.f32 %v6093, %v4537
        %v6417 = vmul.f32 %v6097, %v4539
        %v6418 = vmul.f32 %v6101, %v4541
        %v6419 = vmul.f32 %v6105, %v4543
        %v6420 = vmul.f32 %v6109, %v4545
        %v6421 = vmul.f32 %v6113, %v4547
        %v6422 = vmul.f32 %v6117, %v4549
        %v6423 = vmul.f32 %v6121, %v4551
        %v6424 = vmul.f32 %v6125, %v4553
        %v6425 = vmul.f32 %v6129, %v4555
        %v6426 = vmul.f32 %v6133, %v4557
        %v6427 = vmul.f32 %v6137, %v4559
        %v6428 = vmul.f32 %v6141, %v4561
        %v6429 = vmul.f32 %v6145, %v4563
        %v6430 = vmul.f32 %v6149, %v4565
        %v6431 = vmul.f32 %v6156, %v4567
        %v6432 = vmul.f32 %v6160, %v4569
        %v6433 = vmul.f32 %v6164, %v4571
        %v6434 = vmul.f32 %v6168, %v4573
        %v6435 = vmul.f32 %v6172, %v4575
        %v6436 = vmul.f32 %v6176, %v4577
        %v6437 = vmul.f32 %v6180, %v4579
        %v6438 = vmul.f32 %v6184, %v4581
        %v6439 = vmul.f32 %v6188, %v4583
        %v6440 = vmul.f32 %v6192, %v4585
        %v6441 = vmul.f32 %v6196, %v4587
        %v6442 = vmul.f32 %v6200, %v4589
        %v6443 = vmul.f32 %v6204, %v4591
        %v6444 = vmul.f32 %v6208, %v4593
        %v6445 = vmul.f32 %v6212, %v4595
        %v6446 = vmul.f32 %v6216, %v4597
        %v6447 = vmul.f32 %v6223, %v4599
        %v6448 = vmul.f32 %v6227, %v4601
        %v6449 = vmul.f32 %v6231, %v4603
        %v6450 = vmul.f32 %v6235, %v4605
        %v6451 = vmul.f32 %v6239, %v4607
        %v6452 = vmul.f32 %v6243, %v4609
        %v6453 = vmul.f32 %v6247, %v4611
        %v6454 = vmul.f32 %v6251, %v4613
        %v6455 = vmul.f32 %v6255, %v4615
        %v6456 = vmul.f32 %v6259, %v4617
        %v6457 = vmul.f32 %v6263, %v4619
        %v6458 = vmul.f32 %v6267, %v4621
        %v6459 = vmul.f32 %v6271, %v4623
        %v6460 = vmul.f32 %v6275, %v4625
        %v6461 = vmul.f32 %v6279, %v4627
        %v6462 = vmul.f32 %v6283, %v4629
        %v6463 = vmul.f32 %v6290, %v4631
        %v6464 = vmul.f32 %v6294, %v4633
        %v6465 = vmul.f32 %v6298, %v4635
        %v6466 = vmul.f32 %v6302, %v4637
        %v6467 = vmul.f32 %v6306, %v4639
        %v6468 = vmul.f32 %v6310, %v4641
        %v6469 = vmul.f32 %v6314, %v4643
        %v6470 = vmul.f32 %v6318, %v4645
        %v6471 = vmul.f32 %v6322, %v4647
        %v6472 = vmul.f32 %v6326, %v4649
        %v6473 = vmul.f32 %v6330, %v4651
        %v6474 = vmul.f32 %v6334, %v4653
        %v6475 = vmul.f32 %v6338, %v4655
        %v6476 = vmul.f32 %v6342, %v4657
        %v6477 = vmul.f32 %v6346, %v4659
        %v6478 = vmul.f32 %v6350, %v4661
        %v6479 = vadd.f32 %v6351, %v6352
        %v6480 = vadd.f32 %v6479, %v6353
        %v6481 = vadd.f32 %v6480, %v6354
        %v6482 = vadd.f32 %v6481, %v6355
        %v6483 = vadd.f32 %v6482, %v6356
        %v6484 = vadd.f32 %v6483, %v6357
        %v6485 = vadd.f32 %v6484, %v6358
        %v6486 = vadd.f32 %v6485, %v6359
        %v6487 = vadd.f32 %v6486, %v6360
        %v6488 = vadd.f32 %v6487, %v6361
        %v6489 = vadd.f32 %v6488, %v6362
        %v6490 = vadd.f32 %v6489, %v6363
        %v6491 = vadd.f32 %v6490, %v6364
        %v6492 = vadd.f32 %v6491, %v6365
        %v6493 = vadd.f32 %v6492, %v6366
        %v6494 = vrot.slane %v6493, 4
        %v6495 = vadd.f32 %v6493, %v6494
        %v6496 = vrot.slane %v6495, 2
        %v6497 = vadd.f32 %v6495, %v6496
        %v6498 = vrot.slane %v6497, 1
        %v6499 = vadd.f32 %v6497, %v6498
        %v6500 = vadd.f32 %v6367, %v6368
        %v6501 = vadd.f32 %v6500, %v6369
        %v6502 = vadd.f32 %v6501, %v6370
        %v6503 = vadd.f32 %v6502, %v6371
        %v6504 = vadd.f32 %v6503, %v6372
        %v6505 = vadd.f32 %v6504, %v6373
        %v6506 = vadd.f32 %v6505, %v6374
        %v6507 = vadd.f32 %v6506, %v6375
        %v6508 = vadd.f32 %v6507, %v6376
        %v6509 = vadd.f32 %v6508, %v6377
        %v6510 = vadd.f32 %v6509, %v6378
        %v6511 = vadd.f32 %v6510, %v6379
        %v6512 = vadd.f32 %v6511, %v6380
        %v6513 = vadd.f32 %v6512, %v6381
        %v6514 = vadd.f32 %v6513, %v6382
        %v6515 = vrot.slane %v6514, 4
        %v6516 = vadd.f32 %v6514, %v6515
        %v6517 = vrot.slane %v6516, 2
        %v6518 = vadd.f32 %v6516, %v6517
        %v6519 = vrot.slane %v6518, 1
        %v6520 = vadd.f32 %v6518, %v6519
        %v6521 = vadd.f32 %v6383, %v6384
        %v6522 = vadd.f32 %v6521, %v6385
        %v6523 = vadd.f32 %v6522, %v6386
        %v6524 = vadd.f32 %v6523, %v6387
        %v6525 = vadd.f32 %v6524, %v6388
        %v6526 = vadd.f32 %v6525, %v6389
        %v6527 = vadd.f32 %v6526, %v6390
        %v6528 = vadd.f32 %v6527, %v6391
        %v6529 = vadd.f32 %v6528, %v6392
        %v6530 = vadd.f32 %v6529, %v6393
        %v6531 = vadd.f32 %v6530, %v6394
        %v6532 = vadd.f32 %v6531, %v6395
        %v6533 = vadd.f32 %v6532, %v6396
        %v6534 = vadd.f32 %v6533, %v6397
        %v6535 = vadd.f32 %v6534, %v6398
        %v6536 = vrot.slane %v6535, 4
        %v6537 = vadd.f32 %v6535, %v6536
        %v6538 = vrot.slane %v6537, 2
        %v6539 = vadd.f32 %v6537, %v6538
        %v6540 = vrot.slane %v6539, 1
        %v6541 = vadd.f32 %v6539, %v6540
        %v6542 = vadd.f32 %v6399, %v6400
        %v6543 = vadd.f32 %v6542, %v6401
        %v6544 = vadd.f32 %v6543, %v6402
        %v6545 = vadd.f32 %v6544, %v6403
        %v6546 = vadd.f32 %v6545, %v6404
        %v6547 = vadd.f32 %v6546, %v6405
        %v6548 = vadd.f32 %v6547, %v6406
        %v6549 = vadd.f32 %v6548, %v6407
        %v6550 = vadd.f32 %v6549, %v6408
        %v6551 = vadd.f32 %v6550, %v6409
        %v6552 = vadd.f32 %v6551, %v6410
        %v6553 = vadd.f32 %v6552, %v6411
        %v6554 = vadd.f32 %v6553, %v6412
        %v6555 = vadd.f32 %v6554, %v6413
        %v6556 = vadd.f32 %v6555, %v6414
        %v6557 = vrot.slane %v6556, 4
        %v6558 = vadd.f32 %v6556, %v6557
        %v6559 = vrot.slane %v6558, 2
        %v6560 = vadd.f32 %v6558, %v6559
        %v6561 = vrot.slane %v6560, 1
        %v6562 = vadd.f32 %v6560, %v6561
        %v6563 = vadd.f32 %v6415, %v6416
        %v6564 = vadd.f32 %v6563, %v6417
        %v6565 = vadd.f32 %v6564, %v6418
        %v6566 = vadd.f32 %v6565, %v6419
        %v6567 = vadd.f32 %v6566, %v6420
        %v6568 = vadd.f32 %v6567, %v6421
        %v6569 = vadd.f32 %v6568, %v6422
        %v6570 = vadd.f32 %v6569, %v6423
        %v6571 = vadd.f32 %v6570, %v6424
        %v6572 = vadd.f32 %v6571, %v6425
        %v6573 = vadd.f32 %v6572, %v6426
        %v6574 = vadd.f32 %v6573, %v6427
        %v6575 = vadd.f32 %v6574, %v6428
        %v6576 = vadd.f32 %v6575, %v6429
        %v6577 = vadd.f32 %v6576, %v6430
        %v6578 = vrot.slane %v6577, 4
        %v6579 = vadd.f32 %v6577, %v6578
        %v6580 = vrot.slane %v6579, 2
        %v6581 = vadd.f32 %v6579, %v6580
        %v6582 = vrot.slane %v6581, 1
        %v6583 = vadd.f32 %v6581, %v6582
        %v6584 = vadd.f32 %v6431, %v6432
        %v6585 = vadd.f32 %v6584, %v6433
        %v6586 = vadd.f32 %v6585, %v6434
        %v6587 = vadd.f32 %v6586, %v6435
        %v6588 = vadd.f32 %v6587, %v6436
        %v6589 = vadd.f32 %v6588, %v6437
        %v6590 = vadd.f32 %v6589, %v6438
        %v6591 = vadd.f32 %v6590, %v6439
        %v6592 = vadd.f32 %v6591, %v6440
        %v6593 = vadd.f32 %v6592, %v6441
        %v6594 = vadd.f32 %v6593, %v6442
        %v6595 = vadd.f32 %v6594, %v6443
        %v6596 = vadd.f32 %v6595, %v6444
        %v6597 = vadd.f32 %v6596, %v6445
        %v6598 = vadd.f32 %v6597, %v6446
        %v6599 = vrot.slane %v6598, 4
        %v6600 = vadd.f32 %v6598, %v6599
        %v6601 = vrot.slane %v6600, 2
        %v6602 = vadd.f32 %v6600, %v6601
        %v6603 = vrot.slane %v6602, 1
        %v6604 = vadd.f32 %v6602, %v6603
        %v6605 = vadd.f32 %v6447, %v6448
        %v6606 = vadd.f32 %v6605, %v6449
        %v6607 = vadd.f32 %v6606, %v6450
        %v6608 = vadd.f32 %v6607, %v6451
        %v6609 = vadd.f32 %v6608, %v6452
        %v6610 = vadd.f32 %v6609, %v6453
        %v6611 = vadd.f32 %v6610, %v6454
        %v6612 = vadd.f32 %v6611, %v6455
        %v6613 = vadd.f32 %v6612, %v6456
        %v6614 = vadd.f32 %v6613, %v6457
        %v6615 = vadd.f32 %v6614, %v6458
        %v6616 = vadd.f32 %v6615, %v6459
        %v6617 = vadd.f32 %v6616, %v6460
        %v6618 = vadd.f32 %v6617, %v6461
        %v6619 = vadd.f32 %v6618, %v6462
        %v6620 = vrot.slane %v6619, 4
        %v6621 = vadd.f32 %v6619, %v6620
        %v6622 = vrot.slane %v6621, 2
        %v6623 = vadd.f32 %v6621, %v6622
        %v6624 = vrot.slane %v6623, 1
        %v6625 = vadd.f32 %v6623, %v6624
        %v6626 = vadd.f32 %v6463, %v6464
        %v6627 = vadd.f32 %v6626, %v6465
        %v6628 = vadd.f32 %v6627, %v6466
        %v6629 = vadd.f32 %v6628, %v6467
        %v6630 = vadd.f32 %v6629, %v6468
        %v6631 = vadd.f32 %v6630, %v6469
        %v6632 = vadd.f32 %v6631, %v6470
        %v6633 = vadd.f32 %v6632, %v6471
        %v6634 = vadd.f32 %v6633, %v6472
        %v6635 = vadd.f32 %v6634, %v6473
        %v6636 = vadd.f32 %v6635, %v6474
        %v6637 = vadd.f32 %v6636, %v6475
        %v6638 = vadd.f32 %v6637, %v6476
        %v6639 = vadd.f32 %v6638, %v6477
        %v6640 = vadd.f32 %v6639, %v6478
        %v6641 = vrot.slane %v6640, 4
        %v6642 = vadd.f32 %v6640, %v6641
        %v6643 = vrot.slane %v6642, 2
        %v6644 = vadd.f32 %v6642, %v6643
        %v6645 = vrot.slane %v6644, 1
        %v6646 = vadd.f32 %v6644, %v6645
        %v6647 = vmul.f32 %v6499, %v333
        %v6648 = vmul.f32 %v6520, %v333
        %v6649 = vmul.f32 %v6541, %v333
        %v6650 = vmul.f32 %v6562, %v333
        %v6651 = vmul.f32 %v6583, %v333
        %v6652 = vmul.f32 %v6604, %v333
        %v6653 = vmul.f32 %v6625, %v333
        %v6654 = vmul.f32 %v6646, %v333
        %v6663 = vrot.slane %v6648, 7
        %v6664 = vsel %vm2772, %v6663, %v6647
        %v6665 = vrot.slane %v6649, 6
        %v6666 = vsel %vm2774, %v6665, %v6664
        %v6667 = vrot.slane %v6650, 5
        %v6668 = vsel %vm2776, %v6667, %v6666
        %v6669 = vrot.slane %v6651, 4
        %v6670 = vsel %vm2778, %v6669, %v6668
        %v6671 = vrot.slane %v6652, 3
        %v6672 = vsel %vm2780, %v6671, %v6670
        %v6673 = vrot.slane %v6653, 2
        %v6674 = vsel %vm2782, %v6673, %v6672
        %v6675 = vrot.slane %v6654, 1
        %v6676 = vsel %vm2784, %v6675, %v6674
        %6678 = vst [vmem:[%s323 + $0x8] sm:$0xff] %v6676
        %s6679 = sand.u32 %s149, 1
        %s6680 = scalar_lea.sflag [#allocation4], %s6679
        %s6681 = sand.u32 %s149, 1
        %s6682 = smul.addr %s6681, 16
        %s6683 = scalar_lea.vmem [#allocation11], %s6682
        // Predicated region
        $region61: #{tpu_custom_call.1} parent=39 // pred_check
          %p6684 = pneg %p159
        $region62: #{tpu_custom_call.1} parent=39 // pred_check_branch
          %6686 = sbr.rel (%p6684) target = $region64
        $region63: #{tpu_custom_call.1} parent=39 // pred_region
          %s6687 = smul.u32 2, %s26
          %s6689 = ssub.s32 256, 256
          %6690 = vsyncadd %s6680, %s6689
          %s6691 = smul.addr %s6687, 128
          %s6692 = scalar_lea.hbm %s5, %s6691
          %s6693 = sshll.u32 %s6683, 4
          %s6694 = int_to_ptr.vmem [resolvable:$true] %s6693
          %6699 = dma.vmem_to_hbm [thread:$0]  %s6694, 256, %s6692, %s6680, 128, 128, 8
        $region64: #{tpu_custom_call.1} parent=39 // pred_fallthru
          _
      $region40: #{tpu_custom_call.1} parent=5 // pred_fallthru
        _
      %p6700 = scmp.le.s32.totalorder 2, %s21
      // Predicated region
      $region65: #{tpu_custom_call.1} parent=5 // pred_check
        %p6701 = pneg %p6700
      $region66: #{tpu_custom_call.1} parent=5 // pred_check_branch
        %6703 = sbr.rel (%p6701) target = $region68
      $region67: #{tpu_custom_call.1} parent=5 // pred_region
        %s6704 = ssub.s32 %s21, 2
        // Predicated region
        $region69: #{tpu_custom_call.1} parent=67 // pred_check
          %p6705 = pneg %p165
        $region70: #{tpu_custom_call.1} parent=67 // pred_check_branch
          %6707 = sbr.rel (%p6705) target = $region72
        $region71: #{tpu_custom_call.1} parent=67 // pred_region
          %s6708 = sand.u32 %s150, 1
          %s6709 = scalar_lea.sflag [#allocation4], %s6708
          %s6710 = sand.u32 %s150, 1
          %s6711 = smul.addr %s6710, 16
          %s6712 = scalar_lea.vmem [#allocation11], %s6711
          %6713 = dma.done %s6709, 256
        $region72: #{tpu_custom_call.1} parent=67 // pred_fallthru
          _
      $region68: #{tpu_custom_call.1} parent=5 // pred_fallthru
        _
    $region6: #{tpu_custom_call.1} parent=1 // loop_footer
      %s25 = sadd.s32 1, %s21
    $region7: #{tpu_custom_call.1} parent=1 // loop_footer_branch
      %20 = sbr.rel target = $region3
    $region8: #{tpu_custom_call.1} parent=1 // loop_exit
      _
    %6714 = vsyncpa [#allocation3], 1
    %s6715 = scalar_lea.sflag [#allocation3], 1
    %6716 = vsyncpa %s6715, 1
    %6717 = vsyncpa [#allocation6], 1
    %s6718 = scalar_lea.sflag [#allocation6], 1
    %6719 = vsyncpa %s6718, 1
    %6720 = vsyncpa [#allocation9], 1
    %6721 = vsyncpa [#allocation4], 1
    %s6722 = scalar_lea.sflag [#allocation4], 1
    %6723 = vsyncpa %s6722, 1

</llo_original>
